<compile_context>
chip_gen: v5e
topology: v5e:2x2
jax: 0.10.0
libtpu: 0.0.40
codegen_flags: <defaults>
</compile_context>

<pallas_src>
import math
import functools

import jax
import jax.numpy as jnp
from jax.experimental import pallas as pl
from jax.experimental.pallas import tpu as pltpu


_TWO_PI = 2.0 * math.pi


# -----------------------------------------------------------------------------
# Kernel 1: question projection + GraphLearner + adjacency, fully fused.
# -----------------------------------------------------------------------------
def _make_learner_kernel(B, K):
    def kernel(q_ref, img_ref, lpw_ref, lpb_ref, e1wi_ref, e1wq_ref, e1b_ref,
               e2w_ref, e2b_ref, qenc_ref, adj_ref):
        # l_proj (weight_norm linear == plain linear at inference); bf16 MXU, f32 acc.
        qenc = jnp.dot(q_ref[...].astype(jnp.bfloat16), lpw_ref[...],
                       preferred_element_type=jnp.float32) + lpb_ref[...]
        qenc_ref[...] = qenc                                        # (B, hid)

        # GraphLearner L1.  torch's concat([image, q_rep]) @ W1 is split:
        #   image @ W1[:F]  (per node)  +  qenc @ W1[F:]  (per batch row)
        h_img = jnp.dot(img_ref[...].astype(jnp.bfloat16), e1wi_ref[...],
                        preferred_element_type=jnp.float32)          # (B*K, C)
        h_q = jnp.dot(qenc.astype(jnp.bfloat16), e1wq_ref[...],
                      preferred_element_type=jnp.float32) + e1b_ref[...]   # (B, C)
        C = h_img.shape[-1]
        h = jnp.maximum(h_img.reshape(B, K, C) + h_q[:, None, :], 0.0)
        # GraphLearner L2
        h = jnp.maximum(jnp.dot(h.reshape(B * K, C).astype(jnp.bfloat16),
                                e2w_ref[...], preferred_element_type=jnp.float32)
                        + e2b_ref[...], 0.0)
        h3 = h.reshape(B, K, C).astype(jnp.bfloat16)
        # adjacency[b] = h[b] @ h[b]^T  (batched over B, bf16 operands, f32 acc)
        adj_ref[...] = jnp.einsum('bkc,bjc->bkj', h3, h3,
                                  preferred_element_type=jnp.float32)
    return kernel


def learner_adjacency(question, image2d, p, B, K):
    hid = p["lproj_w"].shape[1]
    return pl.pallas_call(
        _make_learner_kernel(B, K),
        out_shape=(jax.ShapeDtypeStruct((B, hid), jnp.float32),
                   jax.ShapeDtypeStruct((B, K, K), jnp.float32)),
    )(question, image2d, p["lproj_w"], p["lproj_b"],
      p["e1_w_img"], p["e1_w_q"], p["e1_b"], p["e2_w"], p["e2_b"])


# -----------------------------------------------------------------------------
# Shared Gaussian-kernel coefficient helper (runs inside both conv kernels).
# Gaussian weights are normalised over the n_kernels axis (matches the
# reference's torch.sum(weights, dim=1) on the (rows, n_kernels) layout).
# Single fused exp; precisions pre-folded into c_rho / c_theta = -0.5/(eps+p^2).
# -----------------------------------------------------------------------------
def _gaussian_coeffs(rho, theta, gp, nk):
    gs = []
    gsum = None
    for k in range(nk):
        mr = gp[0:1, k:k + 1]                              # (1,1), broadcasts
        mt = gp[1:2, k:k + 1]
        cr = gp[2:3, k:k + 1]
        ct = gp[3:4, k:k + 1]
        first = jnp.abs(theta - mt)
        dth = jnp.minimum(first, jnp.abs(_TWO_PI - first))
        g = jnp.exp(cr * (rho - mr) ** 2 + ct * dth * dth)  # one exp, no divides
        gs.append(g)
        gsum = g if gsum is None else gsum + g
    inv = pl.reciprocal(gsum + 1e-20, approx=True)          # EUP, not VPU divide
    return [g * inv for g in gs]


# -----------------------------------------------------------------------------
# Kernel 2: graph conv 1 (+ fused relu), gridded over batch ("parallel").
#
# out[i, k*fp+o] = sum_j coef_k[i, j] * (feats[j, :] @ conv_w[k, :, o])
#   coef_k[i, j] = gaussian_k(pseudo[i, j]) / sum_k' gaussian_k'(pseudo[i, j])
#                  * softmax_topk_weight[i, j]     (0 for non-selected j)
# i.e. project each node ONCE with a dense bf16 MXU matmul, then a (K,K)@(K,fp)
# combine per Gaussian kernel.  No pool matrix, no gathered neighbour tensors.
# -----------------------------------------------------------------------------
def _make_conv1_kernel(nk, fp):
    def kernel(feat_ref, rho_ref, theta_ref, sw_ref, w2d_ref, gp_ref, o_ref):
        proj = jnp.dot(feat_ref[...].astype(jnp.bfloat16), w2d_ref[...],
                       preferred_element_type=jnp.float32)          # (K, nk*fp)
        wnorm = _gaussian_coeffs(rho_ref[...], theta_ref[...], gp_ref[...], nk)
        sw = sw_ref[...]                                            # (K, K)
        outs = []
        for k in range(nk):
            c = wnorm[k] * sw                                       # (K, K)
            outs.append(jnp.dot(c, proj[:, k * fp:(k + 1) * fp],
                                preferred_element_type=jnp.float32))
        # F.relu(hidden_graph_1) fused; single lane-dense store.
        o_ref[...] = jnp.maximum(jnp.concatenate(outs, axis=-1), 0.0)
    return kernel


def graph_conv1(image, rho, theta, sw, gc, n_kernels, B, K):
    Fin = image.shape[-1]
    nkfp = gc["w2d"].shape[1]
    fp = nkfp // n_kernels
    return pl.pallas_call(
        _make_conv1_kernel(n_kernels, fp),
        out_shape=jax.ShapeDtypeStruct((B, K, nkfp), jnp.float32),
        grid=(B,),
        in_specs=[
            pl.BlockSpec((None, K, Fin), lambda b: (b, 0, 0)),
            pl.BlockSpec((None, K, K), lambda b: (b, 0, 0)),
            pl.BlockSpec((None, K, K), lambda b: (b, 0, 0)),
            pl.BlockSpec((None, K, K), lambda b: (b, 0, 0)),
            pl.BlockSpec((Fin, nkfp), lambda b: (0, 0)),
            pl.BlockSpec((4, n_kernels), lambda b: (0, 0)),
        ],
        out_specs=pl.BlockSpec((None, K, nkfp), lambda b: (b, 0, 0)),
        compiler_params=pltpu.CompilerParams(
            dimension_semantics=("parallel",)),
    )(image, rho, theta, sw, gc["w2d"], gc["gauss"])


# -----------------------------------------------------------------------------
# Kernel 3: graph conv 2 + head (relu / max over K / qenc gate / out_1 / out_2).
# Same conv reassociation as kernel 2 but batched over B (single invocation,
# the head is tiny).  conv2's neighbourhood is unweighted -> binary mask.
# -----------------------------------------------------------------------------
def _make_conv2_head_kernel(nk, fp, B, K):
    def kernel(feat_ref, rho_ref, theta_ref, sw_ref, w2d_ref, gp_ref, qenc_ref,
               o1w_ref, o1b_ref, o2w_ref, o2b_ref, logits_ref):
        hid = nk * fp
        proj = jnp.dot(feat_ref[...].astype(jnp.bfloat16), w2d_ref[...],
                       preferred_element_type=jnp.float32)          # (B*K, hid)
        proj = proj.reshape(B, K, hid)
        wnorm = _gaussian_coeffs(rho_ref[...], theta_ref[...], gp_ref[...], nk)
        sw = sw_ref[...]                                            # (B, K, K)
        parts = []
        for k in range(nk):
            c = wnorm[k] * sw
            parts.append(jnp.einsum('bij,bjf->bif', c,
                                    proj[:, :, k * fp:(k + 1) * fp],
                                    preferred_element_type=jnp.float32))
        hg2 = jnp.maximum(jnp.concatenate(parts, axis=-1), 0.0)     # (B, K, hid)
        pooled = jnp.max(hg2, axis=1)                               # (B, hid)
        h = jnp.maximum(qenc_ref[...], 0.0) * pooled                # gate
        h1 = jnp.maximum(jnp.dot(h, o1w_ref[...],
                                 preferred_element_type=jnp.float32)
                         + o1b_ref[...], 0.0)
        logits_ref[...] = (jnp.dot(h1, o2w_ref[...],
                                   preferred_element_type=jnp.float32)
                           + o2b_ref[...])
    return kernel


def graph_conv2_head(feat2d, rho, theta, mask, gc, qenc, p, n_kernels, B, K):
    nkfp = gc["w2d"].shape[1]
    fp = nkfp // n_kernels
    out_dim = p["o1_w"].shape[1]
    return pl.pallas_call(
        _make_conv2_head_kernel(n_kernels, fp, B, K),
        out_shape=jax.ShapeDtypeStruct((B, out_dim), jnp.float32),
    )(feat2d, rho, theta, mask, gc["w2d"], gc["gauss"], qenc,
      p["o1_w"], p["o1_b"], p["o2_w"], p["o2_b"])


# -----------------------------------------------------------------------------
# Plain-JAX glue (data-dependent selection / tiny elementwise)
# -----------------------------------------------------------------------------
def compute_pseudo(bb_centre):
    # TODO(synk): tiny elementwise atan2/sqrt kept in plain JAX glue.
    # Matches torch exactly: pc[b,i,j] = centre[i] - centre[j]; eps added to both
    # components before BOTH rho and theta, and atan2(x_comp, y_comp) order kept.
    diff = bb_centre[:, :, None, :] - bb_centre[:, None, :, :]       # (B,K,K,2)
    dx = diff[..., 0] + 1e-14
    dy = diff[..., 1] + 1e-14
    rho = jnp.sqrt(dx * dx + dy * dy)
    theta = jnp.arctan2(dx, dy)
    return rho, theta                                                # (B,K,K) each


def topk_coefficients(adj, nsize):
    # TODO(synk): data-dependent top-k selection has no clean Pallas equivalent;
    # it stays in XLA glue but is converted into dense (B,K,K) coefficient masks
    # so the conv kernels need no gather and no pool matmul at all.
    K = adj.shape[-1]
    top_v, top_i = jax.lax.top_k(adj, nsize)                  # (B,K,NS)
    onehot = jax.nn.one_hot(top_i, K, dtype=jnp.float32)      # (B,K,NS,K)
    mask = jnp.sum(onehot, axis=2)                            # 1 on selected neighbours
    top_w = jax.nn.softmax(top_v, axis=-1)                    # softmax over selected values
    sw = jnp.einsum('bkn,bknj->bkj', top_w, onehot)           # softmax weight (0 elsewhere)
    return mask, sw


# -----------------------------------------------------------------------------
# Forward pass
# -----------------------------------------------------------------------------
def forward(params, question, image, K, neighbourhood_size, n_kernels):
    B = question.shape[0]
    feat_dim = image.shape[-1]
    bb = image[:, :, -4:]
    bb_size = bb[:, :, 2:] - bb[:, :, :2]
    bb_centre = bb[:, :, :2] + 0.5 * bb_size
    # nn.Dropout layers: identity in eval mode.
    rho, theta = compute_pseudo(bb_centre)                           # (B,K,K) each

    # fused: l_proj + GraphLearner (e1 -> e2) + adjacency
    qenc, adj = learner_adjacency(question, image.reshape(B * K, feat_dim),
                                  params, B, K)                      # (B,hid),(B,K,K)

    # top-k neighbourhood -> dense coefficient masks (softmax-weighted / binary)
    mask, sw = topk_coefficients(adj, neighbourhood_size)

    # graph conv 1 (adjacency-weighted neighbourhood); relu fused; grid over B
    hg1 = graph_conv1(image, rho, theta, sw, params["gc1"],
                      n_kernels, B, K)                               # (B,K,2*hid)

    # graph conv 2 (unweighted) + relu/max/gate/out_1/out_2 head
    logits = graph_conv2_head(hg1.reshape(B * K, -1), rho, theta, mask,
                              params["gc2"], qenc, params, n_kernels, B, K)
    return logits, adj


# -----------------------------------------------------------------------------
# Deterministic parameter init (weight_norm is a reparam; forward == plain Linear)
# -----------------------------------------------------------------------------
def init_params(key, emb, feat, hid, out, nk):
    keys = jax.random.split(key, 8)

    def lin(k, i, o, wdtype=jnp.float32):
        k1, k2 = jax.random.split(k)
        s = 1.0 / math.sqrt(i)
        w = jax.random.uniform(k1, (i, o), jnp.float32, -s, s).astype(wdtype)
        b = jax.random.uniform(k2, (1, o), jnp.float32, -s, s)
        return w, b

    def gconv(k, fin, fout):
        k1, k2, k3, k4, k5 = jax.random.split(k, 5)
        fp = fout // nk
        s = 1.0 / math.sqrt(fin)
        conv_w = jax.random.uniform(k1, (nk, fin, fp), jnp.float32, -s, s)
        # grouped per-kernel linear flattened to one (fin, nk*fp) bf16 MXU operand:
        # column k*fp + o holds conv_w[k, :, o]
        w2d = jnp.transpose(conv_w, (1, 0, 2)).reshape(fin, nk * fp)
        w2d = w2d.astype(jnp.bfloat16)
        mean_rho = jax.random.uniform(k2, (nk,), jnp.float32, 0.0, 1.0)
        mean_theta = jax.random.uniform(k3, (nk,), jnp.float32, -math.pi, math.pi)
        # torch inits precisions uniform(0,1); floor kept away from 0 for a
        # numerically benign synthetic demo.
        prec_rho = jax.random.uniform(k4, (nk,), jnp.float32, 0.2, 1.0)
        prec_theta = jax.random.uniform(k5, (nk,), jnp.float32, 0.2, 1.0)
        # fold -0.5/(1e-14 + prec^2) here so the kernel does a single exp and no divides
        c_rho = -0.5 / (1e-14 + prec_rho ** 2)
        c_theta = -0.5 / (1e-14 + prec_theta ** 2)
        gauss = jnp.stack([mean_rho, mean_theta, c_rho, c_theta], axis=0)   # (4, nk)
        return {"w2d": w2d, "gauss": gauss}

    p = {}
    p["lproj_w"], p["lproj_b"] = lin(keys[0], emb, hid, jnp.bfloat16)
    e1_w, p["e1_b"] = lin(keys[1], feat + hid, 512)        # GraphLearner L1
    p["e1_w_img"] = e1_w[:feat].astype(jnp.bfloat16)
    p["e1_w_q"] = e1_w[feat:].astype(jnp.bfloat16)
    p["e2_w"], p["e2_b"] = lin(keys[2], 512, 512, jnp.bfloat16)   # GraphLearner L2
    p["gc1"] = gconv(keys[3], feat, hid * 2)
    p["gc2"] = gconv(keys[4], hid * 2, hid)
    p["o1_w"], p["o1_b"] = lin(keys[5], hid, out)
    p["o2_w"], p["o2_b"] = lin(keys[6], out, out)
    return p


# -----------------------------------------------------------------------------
if __name__ == "__main__":
    B, K = 2, 8
    EMB, FEAT, HID, OUT = 24, 64, 32, 16
    N_KERNELS, NEIGH = 8, 4

    root = jax.random.PRNGKey(0)
    pkey, qkey, fkey, bkey = jax.random.split(root, 4)
    params = init_params(pkey, EMB, FEAT, HID, OUT, N_KERNELS)

    question = jax.random.normal(qkey, (B, EMB), jnp.float32)
    vis = jax.random.normal(fkey, (B, K, FEAT - 4), jnp.float32)
    xy = jax.random.uniform(bkey, (B, K, 4), jnp.float32, 0.0, 0.5)
    bbox = jnp.concatenate([xy[..., :2], xy[..., :2] + 0.1 + xy[..., 2:]], axis=-1)
    image = jnp.concatenate([vis, bbox], axis=-1)              # (B, K, FEAT)

    fwd = jax.jit(functools.partial(forward, K=K, neighbourhood_size=NEIGH,
                                    n_kernels=N_KERNELS))
    logits, adj = fwd(params, question, image)
    jax.block_until_ready((logits, adj))

    assert logits.shape == (B, OUT), logits.shape
    assert adj.shape == (B, K, K), adj.shape
    assert bool(jnp.all(jnp.isfinite(logits))) and bool(jnp.all(jnp.isfinite(adj)))
    print("KERNEL_OK")
</pallas_src>

<mosaic_0001>
module attributes {stable_mosaic.version = 11 : i64} {
  func.func @kernel(%arg0: memref<2x24xf32, #tpu.memory_space<vmem>>, %arg1: memref<16x64xf32, #tpu.memory_space<vmem>>, %arg2: memref<24x32xbf16, #tpu.memory_space<vmem>>, %arg3: memref<1x32xf32, #tpu.memory_space<vmem>>, %arg4: memref<64x512xbf16, #tpu.memory_space<vmem>>, %arg5: memref<32x512xbf16, #tpu.memory_space<vmem>>, %arg6: memref<1x512xf32, #tpu.memory_space<vmem>>, %arg7: memref<512x512xbf16, #tpu.memory_space<vmem>>, %arg8: memref<1x512xf32, #tpu.memory_space<vmem>>, %arg9: memref<2x32xf32, #tpu.memory_space<vmem>>, %arg10: memref<2x8x8xf32, #tpu.memory_space<vmem>>) attributes {dimension_semantics = [], scalar_prefetch = 0 : i64, scratch_operands = 0 : i64, tpu.core_type = #tpu.core_type<tc>} {
    %c0 = arith.constant 0 : index
    %c0_0 = arith.constant 0 : index
    %0 = vector.load %arg0[%c0, %c0_0] : memref<2x24xf32, #tpu.memory_space<vmem>>, vector<2x24xf32>
    %1 = arith.truncf %0 : vector<2x24xf32> to vector<2x24xbf16>
    %c0_1 = arith.constant 0 : index
    %c0_2 = arith.constant 0 : index
    %2 = vector.load %arg2[%c0_1, %c0_2] : memref<24x32xbf16, #tpu.memory_space<vmem>>, vector<24x32xbf16>
    %cst = arith.constant dense<0.000000e+00> : vector<2x32xf32>
    %3 = tpu.matmul %1, %2, %cst {dimension_numbers = #tpu.dot_dimension_numbers<[1], [0], [0], [1], [0, 0, 1, 1], [], []>} : vector<2x24xbf16>, vector<24x32xbf16>, vector<2x32xf32> -> vector<2x32xf32>
    %c0_3 = arith.constant 0 : index
    %c0_4 = arith.constant 0 : index
    %4 = vector.load %arg3[%c0_3, %c0_4] : memref<1x32xf32, #tpu.memory_space<vmem>>, vector<1x32xf32>
    %5 = vector.broadcast %4 : vector<1x32xf32> to vector<2x32xf32>
    %6 = arith.addf %3, %5 : vector<2x32xf32>
    %c0_5 = arith.constant 0 : index
    %c0_6 = arith.constant 0 : index
    %7 = vector.load %arg9[%c0_5, %c0_6] : memref<2x32xf32, #tpu.memory_space<vmem>>, vector<2x32xf32>
    tpu.vector_store %arg9[%c0_5, %c0_6], %6 {strides = array<i32>} : memref<2x32xf32, #tpu.memory_space<vmem>>, vector<2x32xf32>,
    %c0_7 = arith.constant 0 : index
    %c0_8 = arith.constant 0 : index
    %8 = vector.load %arg1[%c0_7, %c0_8] : memref<16x64xf32, #tpu.memory_space<vmem>>, vector<16x64xf32>
    %9 = arith.truncf %8 : vector<16x64xf32> to vector<16x64xbf16>
    %c0_9 = arith.constant 0 : index
    %c0_10 = arith.constant 0 : index
    %10 = vector.load %arg4[%c0_9, %c0_10] : memref<64x512xbf16, #tpu.memory_space<vmem>>, vector<64x512xbf16>
    %cst_11 = arith.constant dense<0.000000e+00> : vector<16x512xf32>
    %11 = tpu.matmul %9, %10, %cst_11 {dimension_numbers = #tpu.dot_dimension_numbers<[1], [0], [0], [1], [0, 0, 1, 1], [], []>} : vector<16x64xbf16>, vector<64x512xbf16>, vector<16x512xf32> -> vector<16x512xf32>
    %12 = arith.truncf %6 : vector<2x32xf32> to vector<2x32xbf16>
    %c0_12 = arith.constant 0 : index
    %c0_13 = arith.constant 0 : index
    %13 = vector.load %arg5[%c0_12, %c0_13] : memref<32x512xbf16, #tpu.memory_space<vmem>>, vector<32x512xbf16>
    %cst_14 = arith.constant dense<0.000000e+00> : vector<2x512xf32>
    %14 = tpu.matmul %12, %13, %cst_14 {dimension_numbers = #tpu.dot_dimension_numbers<[1], [0], [0], [1], [0, 0, 1, 1], [], []>} : vector<2x32xbf16>, vector<32x512xbf16>, vector<2x512xf32> -> vector<2x512xf32>
    %c0_15 = arith.constant 0 : index
    %c0_16 = arith.constant 0 : index
    %15 = vector.load %arg6[%c0_15, %c0_16] : memref<1x512xf32, #tpu.memory_space<vmem>>, vector<1x512xf32>
    %16 = vector.broadcast %15 : vector<1x512xf32> to vector<2x512xf32>
    %17 = arith.addf %14, %16 : vector<2x512xf32>
    %18 = vector.shape_cast %11 : vector<16x512xf32> to vector<2x8x512xf32>
    %19 = vector.shape_cast %17 : vector<2x512xf32> to vector<2x1x512xf32>
    %20 = vector.broadcast %19 : vector<2x1x512xf32> to vector<2x8x512xf32>
    %21 = arith.addf %18, %20 : vector<2x8x512xf32>
    %cst_17 = arith.constant 0.000000e+00 : f32
    %22 = vector.broadcast %cst_17 : f32 to vector<2x8x512xf32>
    %23 = arith.maximumf %21, %22 : vector<2x8x512xf32>
    %24 = vector.shape_cast %23 : vector<2x8x512xf32> to vector<16x512xf32>
    %25 = arith.truncf %24 : vector<16x512xf32> to vector<16x512xbf16>
    %c0_18 = arith.constant 0 : index
    %c0_19 = arith.constant 0 : index
    %26 = vector.load %arg7[%c0_18, %c0_19] : memref<512x512xbf16, #tpu.memory_space<vmem>>, vector<512x512xbf16>
    %cst_20 = arith.constant dense<0.000000e+00> : vector<16x512xf32>
    %27 = tpu.matmul %25, %26, %cst_20 {dimension_numbers = #tpu.dot_dimension_numbers<[1], [0], [0], [1], [0, 0, 1, 1], [], []>} : vector<16x512xbf16>, vector<512x512xbf16>, vector<16x512xf32> -> vector<16x512xf32>
    %c0_21 = arith.constant 0 : index
    %c0_22 = arith.constant 0 : index
    %28 = vector.load %arg8[%c0_21, %c0_22] : memref<1x512xf32, #tpu.memory_space<vmem>>, vector<1x512xf32>
    %29 = vector.broadcast %28 : vector<1x512xf32> to vector<16x512xf32>
    %30 = arith.addf %27, %29 : vector<16x512xf32>
    %cst_23 = arith.constant 0.000000e+00 : f32
    %31 = vector.broadcast %cst_23 : f32 to vector<16x512xf32>
    %32 = arith.maximumf %30, %31 : vector<16x512xf32>
    %33 = vector.shape_cast %32 : vector<16x512xf32> to vector<2x8x512xf32>
    %34 = arith.truncf %33 : vector<2x8x512xf32> to vector<2x8x512xbf16>
    "tpu.trace_start"() <{level = 10 : i32, message = "bkc,bjc->bkj"}> : () -> ()
    %cst_24 = arith.constant dense<0.000000e+00> : vector<2x8x8xf32>
    %35 = tpu.matmul %34, %34, %cst_24 {dimension_numbers = #tpu.dot_dimension_numbers<[2], [2], [1], [1], [0, 0, 0, 1, 1, 1], [0], [0]>} : vector<2x8x512xbf16>, vector<2x8x512xbf16>, vector<2x8x8xf32> -> vector<2x8x8xf32>
    "tpu.trace_stop"() : () -> ()
    %c0_25 = arith.constant 0 : index
    %c0_26 = arith.constant 0 : index
    %c0_27 = arith.constant 0 : index
    %36 = vector.load %arg10[%c0_25, %c0_26, %c0_27] : memref<2x8x8xf32, #tpu.memory_space<vmem>>, vector<2x8x8xf32>
    tpu.vector_store %arg10[%c0_25, %c0_26, %c0_27], %35 {strides = array<i32>} : memref<2x8x8xf32, #tpu.memory_space<vmem>>, vector<2x8x8xf32>,
    return
  }
}

module attributes {stable_mosaic.version = 11 : i64} {
  func.func @kernel(%arg0: i32, %arg1: memref<1x8x64xf32, #tpu.memory_space<vmem>>, %arg2: memref<1x8x8xf32, #tpu.memory_space<vmem>>, %arg3: memref<1x8x8xf32, #tpu.memory_space<vmem>>, %arg4: memref<1x8x8xf32, #tpu.memory_space<vmem>>, %arg5: memref<64x64xbf16, #tpu.memory_space<vmem>>, %arg6: memref<4x8xf32, #tpu.memory_space<vmem>>, %arg7: memref<1x8x64xf32, #tpu.memory_space<vmem>>) attributes {dimension_semantics = [#tpu.dimension_semantics<parallel>], iteration_bounds = array<i64: 2>, scalar_prefetch = 0 : i64, scratch_operands = 0 : i64, tpu.core_type = #tpu.core_type<tc>, window_params = [{transform_indices = @transform_0, window_bounds = array<i64: 1, 8, 64>}, {transform_indices = @transform_1, window_bounds = array<i64: 1, 8, 8>}, {transform_indices = @transform_2, window_bounds = array<i64: 1, 8, 8>}, {transform_indices = @transform_3, window_bounds = array<i64: 1, 8, 8>}, {pipeline_mode = #tpu.pipeline_mode<synchronous>, transform_indices = @transform_4, window_bounds = array<i64: 64, 64>}, {pipeline_mode = #tpu.pipeline_mode<synchronous>, transform_indices = @transform_5, window_bounds = array<i64: 4, 8>}, {transform_indices = @transform_6, window_bounds = array<i64: 1, 8, 64>}]} {
    %c0 = arith.constant 0 : index
    %c0_0 = arith.constant 0 : index
    %c0_1 = arith.constant 0 : index
    %0 = vector.load %arg1[%c0, %c0_0, %c0_1] : memref<1x8x64xf32, #tpu.memory_space<vmem>>, vector<1x8x64xf32>
    %1 = vector.shape_cast %0 : vector<1x8x64xf32> to vector<8x64xf32>
    %2 = arith.truncf %1 : vector<8x64xf32> to vector<8x64xbf16>
    %c0_2 = arith.constant 0 : index
    %c0_3 = arith.constant 0 : index
    %3 = vector.load %arg5[%c0_2, %c0_3] : memref<64x64xbf16, #tpu.memory_space<vmem>>, vector<64x64xbf16>
    %cst = arith.constant dense<0.000000e+00> : vector<8x64xf32>
    %4 = tpu.matmul %2, %3, %cst {dimension_numbers = #tpu.dot_dimension_numbers<[1], [0], [0], [1], [0, 0, 1, 1], [], []>} : vector<8x64xbf16>, vector<64x64xbf16>, vector<8x64xf32> -> vector<8x64xf32>
    %c0_4 = arith.constant 0 : index
    %c0_5 = arith.constant 0 : index
    %c0_6 = arith.constant 0 : index
    %5 = vector.load %arg2[%c0_4, %c0_5, %c0_6] : memref<1x8x8xf32, #tpu.memory_space<vmem>>, vector<1x8x8xf32>
    %6 = vector.shape_cast %5 : vector<1x8x8xf32> to vector<8x8xf32>
    %c0_7 = arith.constant 0 : index
    %c0_8 = arith.constant 0 : index
    %c0_9 = arith.constant 0 : index
    %7 = vector.load %arg3[%c0_7, %c0_8, %c0_9] : memref<1x8x8xf32, #tpu.memory_space<vmem>>, vector<1x8x8xf32>
    %8 = vector.shape_cast %7 : vector<1x8x8xf32> to vector<8x8xf32>
    %c0_10 = arith.constant 0 : index
    %c0_11 = arith.constant 0 : index
    %9 = vector.load %arg6[%c0_10, %c0_11] : memref<4x8xf32, #tpu.memory_space<vmem>>, vector<4x8xf32>
    %10 = vector.extract_strided_slice %9 {offsets = [0, 0], sizes = [1, 1], strides = [1, 1]} : vector<4x8xf32> to vector<1x1xf32>
    %11 = vector.extract_strided_slice %9 {offsets = [1, 0], sizes = [1, 1], strides = [1, 1]} : vector<4x8xf32> to vector<1x1xf32>
    %12 = vector.extract_strided_slice %9 {offsets = [2, 0], sizes = [1, 1], strides = [1, 1]} : vector<4x8xf32> to vector<1x1xf32>
    %13 = vector.extract_strided_slice %9 {offsets = [3, 0], sizes = [1, 1], strides = [1, 1]} : vector<4x8xf32> to vector<1x1xf32>
    %14 = vector.broadcast %11 : vector<1x1xf32> to vector<8x8xf32>
    %15 = arith.subf %8, %14 : vector<8x8xf32>
    %16 = math.absf %15 : vector<8x8xf32>
    %cst_12 = arith.constant 6.28318548 : f32
    %17 = vector.broadcast %cst_12 : f32 to vector<8x8xf32>
    %18 = arith.subf %17, %16 : vector<8x8xf32>
    %19 = math.absf %18 : vector<8x8xf32>
    %20 = arith.minimumf %16, %19 : vector<8x8xf32>
    %21 = vector.broadcast %10 : vector<1x1xf32> to vector<8x8xf32>
    %22 = arith.subf %6, %21 : vector<8x8xf32>
    %23 = arith.mulf %22, %22 : vector<8x8xf32>
    %24 = vector.broadcast %12 : vector<1x1xf32> to vector<8x8xf32>
    %25 = arith.mulf %24, %23 : vector<8x8xf32>
    %26 = vector.broadcast %13 : vector<1x1xf32> to vector<8x8xf32>
    %27 = arith.mulf %26, %20 : vector<8x8xf32>
    %28 = arith.mulf %27, %20 : vector<8x8xf32>
    %29 = arith.addf %25, %28 : vector<8x8xf32>
    %30 = math.exp %29 : vector<8x8xf32>
    %31 = vector.extract_strided_slice %9 {offsets = [0, 1], sizes = [1, 1], strides = [1, 1]} : vector<4x8xf32> to vector<1x1xf32>
    %32 = vector.extract_strided_slice %9 {offsets = [1, 1], sizes = [1, 1], strides = [1, 1]} : vector<4x8xf32> to vector<1x1xf32>
    %33 = vector.extract_strided_slice %9 {offsets = [2, 1], sizes = [1, 1], strides = [1, 1]} : vector<4x8xf32> to vector<1x1xf32>
    %34 = vector.extract_strided_slice %9 {offsets = [3, 1], sizes = [1, 1], strides = [1, 1]} : vector<4x8xf32> to vector<1x1xf32>
    %35 = vector.broadcast %32 : vector<1x1xf32> to vector<8x8xf32>
    %36 = arith.subf %8, %35 : vector<8x8xf32>
    %37 = math.absf %36 : vector<8x8xf32>
    %cst_13 = arith.constant 6.28318548 : f32
    %38 = vector.broadcast %cst_13 : f32 to vector<8x8xf32>
    %39 = arith.subf %38, %37 : vector<8x8xf32>
    %40 = math.absf %39 : vector<8x8xf32>
    %41 = arith.minimumf %37, %40 : vector<8x8xf32>
    %42 = vector.broadcast %31 : vector<1x1xf32> to vector<8x8xf32>
    %43 = arith.subf %6, %42 : vector<8x8xf32>
    %44 = arith.mulf %43, %43 : vector<8x8xf32>
    %45 = vector.broadcast %33 : vector<1x1xf32> to vector<8x8xf32>
    %46 = arith.mulf %45, %44 : vector<8x8xf32>
    %47 = vector.broadcast %34 : vector<1x1xf32> to vector<8x8xf32>
    %48 = arith.mulf %47, %41 : vector<8x8xf32>
    %49 = arith.mulf %48, %41 : vector<8x8xf32>
    %50 = arith.addf %46, %49 : vector<8x8xf32>
    %51 = math.exp %50 : vector<8x8xf32>
    %52 = arith.addf %30, %51 : vector<8x8xf32>
    %53 = vector.extract_strided_slice %9 {offsets = [0, 2], sizes = [1, 1], strides = [1, 1]} : vector<4x8xf32> to vector<1x1xf32>
    %54 = vector.extract_strided_slice %9 {offsets = [1, 2], sizes = [1, 1], strides = [1, 1]} : vector<4x8xf32> to vector<1x1xf32>
    %55 = vector.extract_strided_slice %9 {offsets = [2, 2], sizes = [1, 1], strides = [1, 1]} : vector<4x8xf32> to vector<1x1xf32>
    %56 = vector.extract_strided_slice %9 {offsets = [3, 2], sizes = [1, 1], strides = [1, 1]} : vector<4x8xf32> to vector<1x1xf32>
    %57 = vector.broadcast %54 : vector<1x1xf32> to vector<8x8xf32>
    %58 = arith.subf %8, %57 : vector<8x8xf32>
    %59 = math.absf %58 : vector<8x8xf32>
    %cst_14 = arith.constant 6.28318548 : f32
    %60 = vector.broadcast %cst_14 : f32 to vector<8x8xf32>
    %61 = arith.subf %60, %59 : vector<8x8xf32>
    %62 = math.absf %61 : vector<8x8xf32>
    %63 = arith.minimumf %59, %62 : vector<8x8xf32>
    %64 = vector.broadcast %53 : vector<1x1xf32> to vector<8x8xf32>
    %65 = arith.subf %6, %64 : vector<8x8xf32>
    %66 = arith.mulf %65, %65 : vector<8x8xf32>
    %67 = vector.broadcast %55 : vector<1x1xf32> to vector<8x8xf32>
    %68 = arith.mulf %67, %66 : vector<8x8xf32>
    %69 = vector.broadcast %56 : vector<1x1xf32> to vector<8x8xf32>
    %70 = arith.mulf %69, %63 : vector<8x8xf32>
    %71 = arith.mulf %70, %63 : vector<8x8xf32>
    %72 = arith.addf %68, %71 : vector<8x8xf32>
    %73 = math.exp %72 : vector<8x8xf32>
    %74 = arith.addf %52, %73 : vector<8x8xf32>
    %75 = vector.extract_strided_slice %9 {offsets = [0, 3], sizes = [1, 1], strides = [1, 1]} : vector<4x8xf32> to vector<1x1xf32>
    %76 = vector.extract_strided_slice %9 {offsets = [1, 3], sizes = [1, 1], strides = [1, 1]} : vector<4x8xf32> to vector<1x1xf32>
    %77 = vector.extract_strided_slice %9 {offsets = [2, 3], sizes = [1, 1], strides = [1, 1]} : vector<4x8xf32> to vector<1x1xf32>
    %78 = vector.extract_strided_slice %9 {offsets = [3, 3], sizes = [1, 1], strides = [1, 1]} : vector<4x8xf32> to vector<1x1xf32>
    %79 = vector.broadcast %76 : vector<1x1xf32> to vector<8x8xf32>
    %80 = arith.subf %8, %79 : vector<8x8xf32>
    %81 = math.absf %80 : vector<8x8xf32>
    %cst_15 = arith.constant 6.28318548 : f32
    %82 = vector.broadcast %cst_15 : f32 to vector<8x8xf32>
    %83 = arith.subf %82, %81 : vector<8x8xf32>
    %84 = math.absf %83 : vector<8x8xf32>
    %85 = arith.minimumf %81, %84 : vector<8x8xf32>
    %86 = vector.broadcast %75 : vector<1x1xf32> to vector<8x8xf32>
    %87 = arith.subf %6, %86 : vector<8x8xf32>
    %88 = arith.mulf %87, %87 : vector<8x8xf32>
    %89 = vector.broadcast %77 : vector<1x1xf32> to vector<8x8xf32>
    %90 = arith.mulf %89, %88 : vector<8x8xf32>
    %91 = vector.broadcast %78 : vector<1x1xf32> to vector<8x8xf32>
    %92 = arith.mulf %91, %85 : vector<8x8xf32>
    %93 = arith.mulf %92, %85 : vector<8x8xf32>
    %94 = arith.addf %90, %93 : vector<8x8xf32>
    %95 = math.exp %94 : vector<8x8xf32>
    %96 = arith.addf %74, %95 : vector<8x8xf32>
    %97 = vector.extract_strided_slice %9 {offsets = [0, 4], sizes = [1, 1], strides = [1, 1]} : vector<4x8xf32> to vector<1x1xf32>
    %98 = vector.extract_strided_slice %9 {offsets = [1, 4], sizes = [1, 1], strides = [1, 1]} : vector<4x8xf32> to vector<1x1xf32>
    %99 = vector.extract_strided_slice %9 {offsets = [2, 4], sizes = [1, 1], strides = [1, 1]} : vector<4x8xf32> to vector<1x1xf32>
    %100 = vector.extract_strided_slice %9 {offsets = [3, 4], sizes = [1, 1], strides = [1, 1]} : vector<4x8xf32> to vector<1x1xf32>
    %101 = vector.broadcast %98 : vector<1x1xf32> to vector<8x8xf32>
    %102 = arith.subf %8, %101 : vector<8x8xf32>
    %103 = math.absf %102 : vector<8x8xf32>
    %cst_16 = arith.constant 6.28318548 : f32
    %104 = vector.broadcast %cst_16 : f32 to vector<8x8xf32>
    %105 = arith.subf %104, %103 : vector<8x8xf32>
    %106 = math.absf %105 : vector<8x8xf32>
    %107 = arith.minimumf %103, %106 : vector<8x8xf32>
    %108 = vector.broadcast %97 : vector<1x1xf32> to vector<8x8xf32>
    %109 = arith.subf %6, %108 : vector<8x8xf32>
    %110 = arith.mulf %109, %109 : vector<8x8xf32>
    %111 = vector.broadcast %99 : vector<1x1xf32> to vector<8x8xf32>
    %112 = arith.mulf %111, %110 : vector<8x8xf32>
    %113 = vector.broadcast %100 : vector<1x1xf32> to vector<8x8xf32>
    %114 = arith.mulf %113, %107 : vector<8x8xf32>
    %115 = arith.mulf %114, %107 : vector<8x8xf32>
    %116 = arith.addf %112, %115 : vector<8x8xf32>
    %117 = math.exp %116 : vector<8x8xf32>
    %118 = arith.addf %96, %117 : vector<8x8xf32>
    %119 = vector.extract_strided_slice %9 {offsets = [0, 5], sizes = [1, 1], strides = [1, 1]} : vector<4x8xf32> to vector<1x1xf32>
    %120 = vector.extract_strided_slice %9 {offsets = [1, 5], sizes = [1, 1], strides = [1, 1]} : vector<4x8xf32> to vector<1x1xf32>
    %121 = vector.extract_strided_slice %9 {offsets = [2, 5], sizes = [1, 1], strides = [1, 1]} : vector<4x8xf32> to vector<1x1xf32>
    %122 = vector.extract_strided_slice %9 {offsets = [3, 5], sizes = [1, 1], strides = [1, 1]} : vector<4x8xf32> to vector<1x1xf32>
    %123 = vector.broadcast %120 : vector<1x1xf32> to vector<8x8xf32>
    %124 = arith.subf %8, %123 : vector<8x8xf32>
    %125 = math.absf %124 : vector<8x8xf32>
    %cst_17 = arith.constant 6.28318548 : f32
    %126 = vector.broadcast %cst_17 : f32 to vector<8x8xf32>
    %127 = arith.subf %126, %125 : vector<8x8xf32>
    %128 = math.absf %127 : vector<8x8xf32>
    %129 = arith.minimumf %125, %128 : vector<8x8xf32>
    %130 = vector.broadcast %119 : vector<1x1xf32> to vector<8x8xf32>
    %131 = arith.subf %6, %130 : vector<8x8xf32>
    %132 = arith.mulf %131, %131 : vector<8x8xf32>
    %133 = vector.broadcast %121 : vector<1x1xf32> to vector<8x8xf32>
    %134 = arith.mulf %133, %132 : vector<8x8xf32>
    %135 = vector.broadcast %122 : vector<1x1xf32> to vector<8x8xf32>
    %136 = arith.mulf %135, %129 : vector<8x8xf32>
    %137 = arith.mulf %136, %129 : vector<8x8xf32>
    %138 = arith.addf %134, %137 : vector<8x8xf32>
    %139 = math.exp %138 : vector<8x8xf32>
    %140 = arith.addf %118, %139 : vector<8x8xf32>
    %141 = vector.extract_strided_slice %9 {offsets = [0, 6], sizes = [1, 1], strides = [1, 1]} : vector<4x8xf32> to vector<1x1xf32>
    %142 = vector.extract_strided_slice %9 {offsets = [1, 6], sizes = [1, 1], strides = [1, 1]} : vector<4x8xf32> to vector<1x1xf32>
    %143 = vector.extract_strided_slice %9 {offsets = [2, 6], sizes = [1, 1], strides = [1, 1]} : vector<4x8xf32> to vector<1x1xf32>
    %144 = vector.extract_strided_slice %9 {offsets = [3, 6], sizes = [1, 1], strides = [1, 1]} : vector<4x8xf32> to vector<1x1xf32>
    %145 = vector.broadcast %142 : vector<1x1xf32> to vector<8x8xf32>
    %146 = arith.subf %8, %145 : vector<8x8xf32>
    %147 = math.absf %146 : vector<8x8xf32>
    %cst_18 = arith.constant 6.28318548 : f32
    %148 = vector.broadcast %cst_18 : f32 to vector<8x8xf32>
    %149 = arith.subf %148, %147 : vector<8x8xf32>
    %150 = math.absf %149 : vector<8x8xf32>
    %151 = arith.minimumf %147, %150 : vector<8x8xf32>
    %152 = vector.broadcast %141 : vector<1x1xf32> to vector<8x8xf32>
    %153 = arith.subf %6, %152 : vector<8x8xf32>
    %154 = arith.mulf %153, %153 : vector<8x8xf32>
    %155 = vector.broadcast %143 : vector<1x1xf32> to vector<8x8xf32>
    %156 = arith.mulf %155, %154 : vector<8x8xf32>
    %157 = vector.broadcast %144 : vector<1x1xf32> to vector<8x8xf32>
    %158 = arith.mulf %157, %151 : vector<8x8xf32>
    %159 = arith.mulf %158, %151 : vector<8x8xf32>
    %160 = arith.addf %156, %159 : vector<8x8xf32>
    %161 = math.exp %160 : vector<8x8xf32>
    %162 = arith.addf %140, %161 : vector<8x8xf32>
    %163 = vector.extract_strided_slice %9 {offsets = [0, 7], sizes = [1, 1], strides = [1, 1]} : vector<4x8xf32> to vector<1x1xf32>
    %164 = vector.extract_strided_slice %9 {offsets = [1, 7], sizes = [1, 1], strides = [1, 1]} : vector<4x8xf32> to vector<1x1xf32>
    %165 = vector.extract_strided_slice %9 {offsets = [2, 7], sizes = [1, 1], strides = [1, 1]} : vector<4x8xf32> to vector<1x1xf32>
    %166 = vector.extract_strided_slice %9 {offsets = [3, 7], sizes = [1, 1], strides = [1, 1]} : vector<4x8xf32> to vector<1x1xf32>
    %167 = vector.broadcast %164 : vector<1x1xf32> to vector<8x8xf32>
    %168 = arith.subf %8, %167 : vector<8x8xf32>
    %169 = math.absf %168 : vector<8x8xf32>
    %cst_19 = arith.constant 6.28318548 : f32
    %170 = vector.broadcast %cst_19 : f32 to vector<8x8xf32>
    %171 = arith.subf %170, %169 : vector<8x8xf32>
    %172 = math.absf %171 : vector<8x8xf32>
    %173 = arith.minimumf %169, %172 : vector<8x8xf32>
    %174 = vector.broadcast %163 : vector<1x1xf32> to vector<8x8xf32>
    %175 = arith.subf %6, %174 : vector<8x8xf32>
    %176 = arith.mulf %175, %175 : vector<8x8xf32>
    %177 = vector.broadcast %165 : vector<1x1xf32> to vector<8x8xf32>
    %178 = arith.mulf %177, %176 : vector<8x8xf32>
    %179 = vector.broadcast %166 : vector<1x1xf32> to vector<8x8xf32>
    %180 = arith.mulf %179, %173 : vector<8x8xf32>
    %181 = arith.mulf %180, %173 : vector<8x8xf32>
    %182 = arith.addf %178, %181 : vector<8x8xf32>
    %183 = math.exp %182 : vector<8x8xf32>
    %184 = arith.addf %162, %183 : vector<8x8xf32>
    %cst_20 = arith.constant 9.99999968E-21 : f32
    %185 = vector.broadcast %cst_20 : f32 to vector<8x8xf32>
    %186 = arith.addf %184, %185 : vector<8x8xf32>
    %187 = tpu.reciprocal %186 {approx = true} : vector<8x8xf32> -> vector<8x8xf32>
    %188 = arith.mulf %30, %187 : vector<8x8xf32>
    %189 = arith.mulf %51, %187 : vector<8x8xf32>
    %190 = arith.mulf %73, %187 : vector<8x8xf32>
    %191 = arith.mulf %95, %187 : vector<8x8xf32>
    %192 = arith.mulf %117, %187 : vector<8x8xf32>
    %193 = arith.mulf %139, %187 : vector<8x8xf32>
    %194 = arith.mulf %161, %187 : vector<8x8xf32>
    %195 = arith.mulf %183, %187 : vector<8x8xf32>
    %c0_21 = arith.constant 0 : index
    %c0_22 = arith.constant 0 : index
    %c0_23 = arith.constant 0 : index
    %196 = vector.load %arg4[%c0_21, %c0_22, %c0_23] : memref<1x8x8xf32, #tpu.memory_space<vmem>>, vector<1x8x8xf32>
    %197 = vector.shape_cast %196 : vector<1x8x8xf32> to vector<8x8xf32>
    %198 = arith.mulf %188, %197 : vector<8x8xf32>
    %199 = vector.extract_strided_slice %4 {offsets = [0, 0], sizes = [8, 8], strides = [1, 1]} : vector<8x64xf32> to vector<8x8xf32>
    %cst_24 = arith.constant dense<0.000000e+00> : vector<8x8xf32>
    %200 = tpu.matmul %198, %199, %cst_24 {dimension_numbers = #tpu.dot_dimension_numbers<[1], [0], [0], [1], [0, 0, 1, 1], [], []>} : vector<8x8xf32>, vector<8x8xf32>, vector<8x8xf32> -> vector<8x8xf32>
    %201 = arith.mulf %189, %197 : vector<8x8xf32>
    %202 = vector.extract_strided_slice %4 {offsets = [0, 8], sizes = [8, 8], strides = [1, 1]} : vector<8x64xf32> to vector<8x8xf32>
    %cst_25 = arith.constant dense<0.000000e+00> : vector<8x8xf32>
    %203 = tpu.matmul %201, %202, %cst_25 {dimension_numbers = #tpu.dot_dimension_numbers<[1], [0], [0], [1], [0, 0, 1, 1], [], []>} : vector<8x8xf32>, vector<8x8xf32>, vector<8x8xf32> -> vector<8x8xf32>
    %204 = arith.mulf %190, %197 : vector<8x8xf32>
    %205 = vector.extract_strided_slice %4 {offsets = [0, 16], sizes = [8, 8], strides = [1, 1]} : vector<8x64xf32> to vector<8x8xf32>
    %cst_26 = arith.constant dense<0.000000e+00> : vector<8x8xf32>
    %206 = tpu.matmul %204, %205, %cst_26 {dimension_numbers = #tpu.dot_dimension_numbers<[1], [0], [0], [1], [0, 0, 1, 1], [], []>} : vector<8x8xf32>, vector<8x8xf32>, vector<8x8xf32> -> vector<8x8xf32>
    %207 = arith.mulf %191, %197 : vector<8x8xf32>
    %208 = vector.extract_strided_slice %4 {offsets = [0, 24], sizes = [8, 8], strides = [1, 1]} : vector<8x64xf32> to vector<8x8xf32>
    %cst_27 = arith.constant dense<0.000000e+00> : vector<8x8xf32>
    %209 = tpu.matmul %207, %208, %cst_27 {dimension_numbers = #tpu.dot_dimension_numbers<[1], [0], [0], [1], [0, 0, 1, 1], [], []>} : vector<8x8xf32>, vector<8x8xf32>, vector<8x8xf32> -> vector<8x8xf32>
    %210 = arith.mulf %192, %197 : vector<8x8xf32>
    %211 = vector.extract_strided_slice %4 {offsets = [0, 32], sizes = [8, 8], strides = [1, 1]} : vector<8x64xf32> to vector<8x8xf32>
    %cst_28 = arith.constant dense<0.000000e+00> : vector<8x8xf32>
    %212 = tpu.matmul %210, %211, %cst_28 {dimension_numbers = #tpu.dot_dimension_numbers<[1], [0], [0], [1], [0, 0, 1, 1], [], []>} : vector<8x8xf32>, vector<8x8xf32>, vector<8x8xf32> -> vector<8x8xf32>
    %213 = arith.mulf %193, %197 : vector<8x8xf32>
    %214 = vector.extract_strided_slice %4 {offsets = [0, 40], sizes = [8, 8], strides = [1, 1]} : vector<8x64xf32> to vector<8x8xf32>
    %cst_29 = arith.constant dense<0.000000e+00> : vector<8x8xf32>
    %215 = tpu.matmul %213, %214, %cst_29 {dimension_numbers = #tpu.dot_dimension_numbers<[1], [0], [0], [1], [0, 0, 1, 1], [], []>} : vector<8x8xf32>, vector<8x8xf32>, vector<8x8xf32> -> vector<8x8xf32>
    %216 = arith.mulf %194, %197 : vector<8x8xf32>
    %217 = vector.extract_strided_slice %4 {offsets = [0, 48], sizes = [8, 8], strides = [1, 1]} : vector<8x64xf32> to vector<8x8xf32>
    %cst_30 = arith.constant dense<0.000000e+00> : vector<8x8xf32>
    %218 = tpu.matmul %216, %217, %cst_30 {dimension_numbers = #tpu.dot_dimension_numbers<[1], [0], [0], [1], [0, 0, 1, 1], [], []>} : vector<8x8xf32>, vector<8x8xf32>, vector<8x8xf32> -> vector<8x8xf32>
    %219 = arith.mulf %195, %197 : vector<8x8xf32>
    %220 = vector.extract_strided_slice %4 {offsets = [0, 56], sizes = [8, 8], strides = [1, 1]} : vector<8x64xf32> to vector<8x8xf32>
    %cst_31 = arith.constant dense<0.000000e+00> : vector<8x8xf32>
    %221 = tpu.matmul %219, %220, %cst_31 {dimension_numbers = #tpu.dot_dimension_numbers<[1], [0], [0], [1], [0, 0, 1, 1], [], []>} : vector<8x8xf32>, vector<8x8xf32>, vector<8x8xf32> -> vector<8x8xf32>
    %222 = tpu.concatenate %200, %203, %206, %209, %212, %215, %218, %221 in 1 : vector<8x8xf32>, vector<8x8xf32>, vector<8x8xf32>, vector<8x8xf32>, vector<8x8xf32>, vector<8x8xf32>, vector<8x8xf32>, vector<8x8xf32> -> vector<8x64xf32>
    %cst_32 = arith.constant 0.000000e+00 : f32
    %223 = vector.broadcast %cst_32 : f32 to vector<8x64xf32>
    %224 = arith.maximumf %222, %223 : vector<8x64xf32>
    %c0_33 = arith.constant 0 : index
    %c0_34 = arith.constant 0 : index
    %c0_35 = arith.constant 0 : index
    %225 = vector.load %arg7[%c0_33, %c0_34, %c0_35] : memref<1x8x64xf32, #tpu.memory_space<vmem>>, vector<1x8x64xf32>
    %226 = vector.shape_cast %225 : vector<1x8x64xf32> to vector<8x64xf32>
    %227 = vector.shape_cast %224 : vector<8x64xf32> to vector<1x8x64xf32>
    tpu.vector_store %arg7[%c0_33, %c0_34, %c0_35], %227 {strides = array<i32>} : memref<1x8x64xf32, #tpu.memory_space<vmem>>, vector<1x8x64xf32>,
    return
  }
  func.func @transform_0(%arg0: i32) -> (i32, i32, i32) {
    %c0_i32 = arith.constant 0 : i32
    %c0_i32_0 = arith.constant 0 : i32
    %c0_i32_1 = arith.constant 0 : i32
    return %arg0, %c0_i32, %c0_i32_0 : i32, i32, i32
  }
  func.func @transform_1(%arg0: i32) -> (i32, i32, i32) {
    %c0_i32 = arith.constant 0 : i32
    %c0_i32_0 = arith.constant 0 : i32
    %c0_i32_1 = arith.constant 0 : i32
    return %arg0, %c0_i32, %c0_i32_0 : i32, i32, i32
  }
  func.func @transform_2(%arg0: i32) -> (i32, i32, i32) {
    %c0_i32 = arith.constant 0 : i32
    %c0_i32_0 = arith.constant 0 : i32
    %c0_i32_1 = arith.constant 0 : i32
    return %arg0, %c0_i32, %c0_i32_0 : i32, i32, i32
  }
  func.func @transform_3(%arg0: i32) -> (i32, i32, i32) {
    %c0_i32 = arith.constant 0 : i32
    %c0_i32_0 = arith.constant 0 : i32
    %c0_i32_1 = arith.constant 0 : i32
    return %arg0, %c0_i32, %c0_i32_0 : i32, i32, i32
  }
  func.func @transform_4(%arg0: i32) -> (i32, i32) {
    %c0_i32 = arith.constant 0 : i32
    %c0_i32_0 = arith.constant 0 : i32
    %c0_i32_1 = arith.constant 0 : i32
    return %c0_i32, %c0_i32_0 : i32, i32
  }
  func.func @transform_5(%arg0: i32) -> (i32, i32) {
    %c0_i32 = arith.constant 0 : i32
    %c0_i32_0 = arith.constant 0 : i32
    %c0_i32_1 = arith.constant 0 : i32
    return %c0_i32, %c0_i32_0 : i32, i32
  }
  func.func @transform_6(%arg0: i32) -> (i32, i32, i32) {
    %c0_i32 = arith.constant 0 : i32
    %c0_i32_0 = arith.constant 0 : i32
    %c0_i32_1 = arith.constant 0 : i32
    return %arg0, %c0_i32, %c0_i32_0 : i32, i32, i32
  }
}

module attributes {stable_mosaic.version = 11 : i64} {
  func.func @kernel(%arg0: memref<16x64xf32, #tpu.memory_space<vmem>>, %arg1: memref<2x8x8xf32, #tpu.memory_space<vmem>>, %arg2: memref<2x8x8xf32, #tpu.memory_space<vmem>>, %arg3: memref<2x8x8xf32, #tpu.memory_space<vmem>>, %arg4: memref<64x32xbf16, #tpu.memory_space<vmem>>, %arg5: memref<4x8xf32, #tpu.memory_space<vmem>>, %arg6: memref<2x32xf32, #tpu.memory_space<vmem>>, %arg7: memref<32x16xf32, #tpu.memory_space<vmem>>, %arg8: memref<1x16xf32, #tpu.memory_space<vmem>>, %arg9: memref<16x16xf32, #tpu.memory_space<vmem>>, %arg10: memref<1x16xf32, #tpu.memory_space<vmem>>, %arg11: memref<2x16xf32, #tpu.memory_space<vmem>>) attributes {dimension_semantics = [], scalar_prefetch = 0 : i64, scratch_operands = 0 : i64, tpu.core_type = #tpu.core_type<tc>} {
    %c0 = arith.constant 0 : index
    %c0_0 = arith.constant 0 : index
    %0 = vector.load %arg0[%c0, %c0_0] : memref<16x64xf32, #tpu.memory_space<vmem>>, vector<16x64xf32>
    %1 = arith.truncf %0 : vector<16x64xf32> to vector<16x64xbf16>
    %c0_1 = arith.constant 0 : index
    %c0_2 = arith.constant 0 : index
    %2 = vector.load %arg4[%c0_1, %c0_2] : memref<64x32xbf16, #tpu.memory_space<vmem>>, vector<64x32xbf16>
    %cst = arith.constant dense<0.000000e+00> : vector<16x32xf32>
    %3 = tpu.matmul %1, %2, %cst {dimension_numbers = #tpu.dot_dimension_numbers<[1], [0], [0], [1], [0, 0, 1, 1], [], []>} : vector<16x64xbf16>, vector<64x32xbf16>, vector<16x32xf32> -> vector<16x32xf32>
    %4 = vector.shape_cast %3 : vector<16x32xf32> to vector<2x8x32xf32>
    %c0_3 = arith.constant 0 : index
    %c0_4 = arith.constant 0 : index
    %c0_5 = arith.constant 0 : index
    %5 = vector.load %arg1[%c0_3, %c0_4, %c0_5] : memref<2x8x8xf32, #tpu.memory_space<vmem>>, vector<2x8x8xf32>
    %c0_6 = arith.constant 0 : index
    %c0_7 = arith.constant 0 : index
    %c0_8 = arith.constant 0 : index
    %6 = vector.load %arg2[%c0_6, %c0_7, %c0_8] : memref<2x8x8xf32, #tpu.memory_space<vmem>>, vector<2x8x8xf32>
    %c0_9 = arith.constant 0 : index
    %c0_10 = arith.constant 0 : index
    %7 = vector.load %arg5[%c0_9, %c0_10] : memref<4x8xf32, #tpu.memory_space<vmem>>, vector<4x8xf32>
    %8 = vector.extract_strided_slice %7 {offsets = [0, 0], sizes = [1, 1], strides = [1, 1]} : vector<4x8xf32> to vector<1x1xf32>
    %9 = vector.extract_strided_slice %7 {offsets = [1, 0], sizes = [1, 1], strides = [1, 1]} : vector<4x8xf32> to vector<1x1xf32>
    %10 = vector.extract_strided_slice %7 {offsets = [2, 0], sizes = [1, 1], strides = [1, 1]} : vector<4x8xf32> to vector<1x1xf32>
    %11 = vector.extract_strided_slice %7 {offsets = [3, 0], sizes = [1, 1], strides = [1, 1]} : vector<4x8xf32> to vector<1x1xf32>
    %12 = vector.shape_cast %9 : vector<1x1xf32> to vector<1x1x1xf32>
    %13 = vector.broadcast %12 : vector<1x1x1xf32> to vector<2x8x8xf32>
    %14 = arith.subf %6, %13 : vector<2x8x8xf32>
    %15 = math.absf %14 : vector<2x8x8xf32>
    %cst_11 = arith.constant 6.28318548 : f32
    %16 = vector.broadcast %cst_11 : f32 to vector<2x8x8xf32>
    %17 = arith.subf %16, %15 : vector<2x8x8xf32>
    %18 = math.absf %17 : vector<2x8x8xf32>
    %19 = arith.minimumf %15, %18 : vector<2x8x8xf32>
    %20 = vector.shape_cast %8 : vector<1x1xf32> to vector<1x1x1xf32>
    %21 = vector.broadcast %20 : vector<1x1x1xf32> to vector<2x8x8xf32>
    %22 = arith.subf %5, %21 : vector<2x8x8xf32>
    %23 = arith.mulf %22, %22 : vector<2x8x8xf32>
    %24 = vector.shape_cast %10 : vector<1x1xf32> to vector<1x1x1xf32>
    %25 = vector.broadcast %24 : vector<1x1x1xf32> to vector<2x8x8xf32>
    %26 = arith.mulf %25, %23 : vector<2x8x8xf32>
    %27 = vector.shape_cast %11 : vector<1x1xf32> to vector<1x1x1xf32>
    %28 = vector.broadcast %27 : vector<1x1x1xf32> to vector<2x8x8xf32>
    %29 = arith.mulf %28, %19 : vector<2x8x8xf32>
    %30 = arith.mulf %29, %19 : vector<2x8x8xf32>
    %31 = arith.addf %26, %30 : vector<2x8x8xf32>
    %32 = math.exp %31 : vector<2x8x8xf32>
    %33 = vector.extract_strided_slice %7 {offsets = [0, 1], sizes = [1, 1], strides = [1, 1]} : vector<4x8xf32> to vector<1x1xf32>
    %34 = vector.extract_strided_slice %7 {offsets = [1, 1], sizes = [1, 1], strides = [1, 1]} : vector<4x8xf32> to vector<1x1xf32>
    %35 = vector.extract_strided_slice %7 {offsets = [2, 1], sizes = [1, 1], strides = [1, 1]} : vector<4x8xf32> to vector<1x1xf32>
    %36 = vector.extract_strided_slice %7 {offsets = [3, 1], sizes = [1, 1], strides = [1, 1]} : vector<4x8xf32> to vector<1x1xf32>
    %37 = vector.shape_cast %34 : vector<1x1xf32> to vector<1x1x1xf32>
    %38 = vector.broadcast %37 : vector<1x1x1xf32> to vector<2x8x8xf32>
    %39 = arith.subf %6, %38 : vector<2x8x8xf32>
    %40 = math.absf %39 : vector<2x8x8xf32>
    %cst_12 = arith.constant 6.28318548 : f32
    %41 = vector.broadcast %cst_12 : f32 to vector<2x8x8xf32>
    %42 = arith.subf %41, %40 : vector<2x8x8xf32>
    %43 = math.absf %42 : vector<2x8x8xf32>
    %44 = arith.minimumf %40, %43 : vector<2x8x8xf32>
    %45 = vector.shape_cast %33 : vector<1x1xf32> to vector<1x1x1xf32>
    %46 = vector.broadcast %45 : vector<1x1x1xf32> to vector<2x8x8xf32>
    %47 = arith.subf %5, %46 : vector<2x8x8xf32>
    %48 = arith.mulf %47, %47 : vector<2x8x8xf32>
    %49 = vector.shape_cast %35 : vector<1x1xf32> to vector<1x1x1xf32>
    %50 = vector.broadcast %49 : vector<1x1x1xf32> to vector<2x8x8xf32>
    %51 = arith.mulf %50, %48 : vector<2x8x8xf32>
    %52 = vector.shape_cast %36 : vector<1x1xf32> to vector<1x1x1xf32>
    %53 = vector.broadcast %52 : vector<1x1x1xf32> to vector<2x8x8xf32>
    %54 = arith.mulf %53, %44 : vector<2x8x8xf32>
    %55 = arith.mulf %54, %44 : vector<2x8x8xf32>
    %56 = arith.addf %51, %55 : vector<2x8x8xf32>
    %57 = math.exp %56 : vector<2x8x8xf32>
    %58 = arith.addf %32, %57 : vector<2x8x8xf32>
    %59 = vector.extract_strided_slice %7 {offsets = [0, 2], sizes = [1, 1], strides = [1, 1]} : vector<4x8xf32> to vector<1x1xf32>
    %60 = vector.extract_strided_slice %7 {offsets = [1, 2], sizes = [1, 1], strides = [1, 1]} : vector<4x8xf32> to vector<1x1xf32>
    %61 = vector.extract_strided_slice %7 {offsets = [2, 2], sizes = [1, 1], strides = [1, 1]} : vector<4x8xf32> to vector<1x1xf32>
    %62 = vector.extract_strided_slice %7 {offsets = [3, 2], sizes = [1, 1], strides = [1, 1]} : vector<4x8xf32> to vector<1x1xf32>
    %63 = vector.shape_cast %60 : vector<1x1xf32> to vector<1x1x1xf32>
    %64 = vector.broadcast %63 : vector<1x1x1xf32> to vector<2x8x8xf32>
    %65 = arith.subf %6, %64 : vector<2x8x8xf32>
    %66 = math.absf %65 : vector<2x8x8xf32>
    %cst_13 = arith.constant 6.28318548 : f32
    %67 = vector.broadcast %cst_13 : f32 to vector<2x8x8xf32>
    %68 = arith.subf %67, %66 : vector<2x8x8xf32>
    %69 = math.absf %68 : vector<2x8x8xf32>
    %70 = arith.minimumf %66, %69 : vector<2x8x8xf32>
    %71 = vector.shape_cast %59 : vector<1x1xf32> to vector<1x1x1xf32>
    %72 = vector.broadcast %71 : vector<1x1x1xf32> to vector<2x8x8xf32>
    %73 = arith.subf %5, %72 : vector<2x8x8xf32>
    %74 = arith.mulf %73, %73 : vector<2x8x8xf32>
    %75 = vector.shape_cast %61 : vector<1x1xf32> to vector<1x1x1xf32>
    %76 = vector.broadcast %75 : vector<1x1x1xf32> to vector<2x8x8xf32>
    %77 = arith.mulf %76, %74 : vector<2x8x8xf32>
    %78 = vector.shape_cast %62 : vector<1x1xf32> to vector<1x1x1xf32>
    %79 = vector.broadcast %78 : vector<1x1x1xf32> to vector<2x8x8xf32>
    %80 = arith.mulf %79, %70 : vector<2x8x8xf32>
    %81 = arith.mulf %80, %70 : vector<2x8x8xf32>
    %82 = arith.addf %77, %81 : vector<2x8x8xf32>
    %83 = math.exp %82 : vector<2x8x8xf32>
    %84 = arith.addf %58, %83 : vector<2x8x8xf32>
    %85 = vector.extract_strided_slice %7 {offsets = [0, 3], sizes = [1, 1], strides = [1, 1]} : vector<4x8xf32> to vector<1x1xf32>
    %86 = vector.extract_strided_slice %7 {offsets = [1, 3], sizes = [1, 1], strides = [1, 1]} : vector<4x8xf32> to vector<1x1xf32>
    %87 = vector.extract_strided_slice %7 {offsets = [2, 3], sizes = [1, 1], strides = [1, 1]} : vector<4x8xf32> to vector<1x1xf32>
    %88 = vector.extract_strided_slice %7 {offsets = [3, 3], sizes = [1, 1], strides = [1, 1]} : vector<4x8xf32> to vector<1x1xf32>
    %89 = vector.shape_cast %86 : vector<1x1xf32> to vector<1x1x1xf32>
    %90 = vector.broadcast %89 : vector<1x1x1xf32> to vector<2x8x8xf32>
    %91 = arith.subf %6, %90 : vector<2x8x8xf32>
    %92 = math.absf %91 : vector<2x8x8xf32>
    %cst_14 = arith.constant 6.28318548 : f32
    %93 = vector.broadcast %cst_14 : f32 to vector<2x8x8xf32>
    %94 = arith.subf %93, %92 : vector<2x8x8xf32>
    %95 = math.absf %94 : vector<2x8x8xf32>
    %96 = arith.minimumf %92, %95 : vector<2x8x8xf32>
    %97 = vector.shape_cast %85 : vector<1x1xf32> to vector<1x1x1xf32>
    %98 = vector.broadcast %97 : vector<1x1x1xf32> to vector<2x8x8xf32>
    %99 = arith.subf %5, %98 : vector<2x8x8xf32>
    %100 = arith.mulf %99, %99 : vector<2x8x8xf32>
    %101 = vector.shape_cast %87 : vector<1x1xf32> to vector<1x1x1xf32>
    %102 = vector.broadcast %101 : vector<1x1x1xf32> to vector<2x8x8xf32>
    %103 = arith.mulf %102, %100 : vector<2x8x8xf32>
    %104 = vector.shape_cast %88 : vector<1x1xf32> to vector<1x1x1xf32>
    %105 = vector.broadcast %104 : vector<1x1x1xf32> to vector<2x8x8xf32>
    %106 = arith.mulf %105, %96 : vector<2x8x8xf32>
    %107 = arith.mulf %106, %96 : vector<2x8x8xf32>
    %108 = arith.addf %103, %107 : vector<2x8x8xf32>
    %109 = math.exp %108 : vector<2x8x8xf32>
    %110 = arith.addf %84, %109 : vector<2x8x8xf32>
    %111 = vector.extract_strided_slice %7 {offsets = [0, 4], sizes = [1, 1], strides = [1, 1]} : vector<4x8xf32> to vector<1x1xf32>
    %112 = vector.extract_strided_slice %7 {offsets = [1, 4], sizes = [1, 1], strides = [1, 1]} : vector<4x8xf32> to vector<1x1xf32>
    %113 = vector.extract_strided_slice %7 {offsets = [2, 4], sizes = [1, 1], strides = [1, 1]} : vector<4x8xf32> to vector<1x1xf32>
    %114 = vector.extract_strided_slice %7 {offsets = [3, 4], sizes = [1, 1], strides = [1, 1]} : vector<4x8xf32> to vector<1x1xf32>
    %115 = vector.shape_cast %112 : vector<1x1xf32> to vector<1x1x1xf32>
    %116 = vector.broadcast %115 : vector<1x1x1xf32> to vector<2x8x8xf32>
    %117 = arith.subf %6, %116 : vector<2x8x8xf32>
    %118 = math.absf %117 : vector<2x8x8xf32>
    %cst_15 = arith.constant 6.28318548 : f32
    %119 = vector.broadcast %cst_15 : f32 to vector<2x8x8xf32>
    %120 = arith.subf %119, %118 : vector<2x8x8xf32>
    %121 = math.absf %120 : vector<2x8x8xf32>
    %122 = arith.minimumf %118, %121 : vector<2x8x8xf32>
    %123 = vector.shape_cast %111 : vector<1x1xf32> to vector<1x1x1xf32>
    %124 = vector.broadcast %123 : vector<1x1x1xf32> to vector<2x8x8xf32>
    %125 = arith.subf %5, %124 : vector<2x8x8xf32>
    %126 = arith.mulf %125, %125 : vector<2x8x8xf32>
    %127 = vector.shape_cast %113 : vector<1x1xf32> to vector<1x1x1xf32>
    %128 = vector.broadcast %127 : vector<1x1x1xf32> to vector<2x8x8xf32>
    %129 = arith.mulf %128, %126 : vector<2x8x8xf32>
    %130 = vector.shape_cast %114 : vector<1x1xf32> to vector<1x1x1xf32>
    %131 = vector.broadcast %130 : vector<1x1x1xf32> to vector<2x8x8xf32>
    %132 = arith.mulf %131, %122 : vector<2x8x8xf32>
    %133 = arith.mulf %132, %122 : vector<2x8x8xf32>
    %134 = arith.addf %129, %133 : vector<2x8x8xf32>
    %135 = math.exp %134 : vector<2x8x8xf32>
    %136 = arith.addf %110, %135 : vector<2x8x8xf32>
    %137 = vector.extract_strided_slice %7 {offsets = [0, 5], sizes = [1, 1], strides = [1, 1]} : vector<4x8xf32> to vector<1x1xf32>
    %138 = vector.extract_strided_slice %7 {offsets = [1, 5], sizes = [1, 1], strides = [1, 1]} : vector<4x8xf32> to vector<1x1xf32>
    %139 = vector.extract_strided_slice %7 {offsets = [2, 5], sizes = [1, 1], strides = [1, 1]} : vector<4x8xf32> to vector<1x1xf32>
    %140 = vector.extract_strided_slice %7 {offsets = [3, 5], sizes = [1, 1], strides = [1, 1]} : vector<4x8xf32> to vector<1x1xf32>
    %141 = vector.shape_cast %138 : vector<1x1xf32> to vector<1x1x1xf32>
    %142 = vector.broadcast %141 : vector<1x1x1xf32> to vector<2x8x8xf32>
    %143 = arith.subf %6, %142 : vector<2x8x8xf32>
    %144 = math.absf %143 : vector<2x8x8xf32>
    %cst_16 = arith.constant 6.28318548 : f32
    %145 = vector.broadcast %cst_16 : f32 to vector<2x8x8xf32>
    %146 = arith.subf %145, %144 : vector<2x8x8xf32>
    %147 = math.absf %146 : vector<2x8x8xf32>
    %148 = arith.minimumf %144, %147 : vector<2x8x8xf32>
    %149 = vector.shape_cast %137 : vector<1x1xf32> to vector<1x1x1xf32>
    %150 = vector.broadcast %149 : vector<1x1x1xf32> to vector<2x8x8xf32>
    %151 = arith.subf %5, %150 : vector<2x8x8xf32>
    %152 = arith.mulf %151, %151 : vector<2x8x8xf32>
    %153 = vector.shape_cast %139 : vector<1x1xf32> to vector<1x1x1xf32>
    %154 = vector.broadcast %153 : vector<1x1x1xf32> to vector<2x8x8xf32>
    %155 = arith.mulf %154, %152 : vector<2x8x8xf32>
    %156 = vector.shape_cast %140 : vector<1x1xf32> to vector<1x1x1xf32>
    %157 = vector.broadcast %156 : vector<1x1x1xf32> to vector<2x8x8xf32>
    %158 = arith.mulf %157, %148 : vector<2x8x8xf32>
    %159 = arith.mulf %158, %148 : vector<2x8x8xf32>
    %160 = arith.addf %155, %159 : vector<2x8x8xf32>
    %161 = math.exp %160 : vector<2x8x8xf32>
    %162 = arith.addf %136, %161 : vector<2x8x8xf32>
    %163 = vector.extract_strided_slice %7 {offsets = [0, 6], sizes = [1, 1], strides = [1, 1]} : vector<4x8xf32> to vector<1x1xf32>
    %164 = vector.extract_strided_slice %7 {offsets = [1, 6], sizes = [1, 1], strides = [1, 1]} : vector<4x8xf32> to vector<1x1xf32>
    %165 = vector.extract_strided_slice %7 {offsets = [2, 6], sizes = [1, 1], strides = [1, 1]} : vector<4x8xf32> to vector<1x1xf32>
    %166 = vector.extract_strided_slice %7 {offsets = [3, 6], sizes = [1, 1], strides = [1, 1]} : vector<4x8xf32> to vector<1x1xf32>
    %167 = vector.shape_cast %164 : vector<1x1xf32> to vector<1x1x1xf32>
    %168 = vector.broadcast %167 : vector<1x1x1xf32> to vector<2x8x8xf32>
    %169 = arith.subf %6, %168 : vector<2x8x8xf32>
    %170 = math.absf %169 : vector<2x8x8xf32>
    %cst_17 = arith.constant 6.28318548 : f32
    %171 = vector.broadcast %cst_17 : f32 to vector<2x8x8xf32>
    %172 = arith.subf %171, %170 : vector<2x8x8xf32>
    %173 = math.absf %172 : vector<2x8x8xf32>
    %174 = arith.minimumf %170, %173 : vector<2x8x8xf32>
    %175 = vector.shape_cast %163 : vector<1x1xf32> to vector<1x1x1xf32>
    %176 = vector.broadcast %175 : vector<1x1x1xf32> to vector<2x8x8xf32>
    %177 = arith.subf %5, %176 : vector<2x8x8xf32>
    %178 = arith.mulf %177, %177 : vector<2x8x8xf32>
    %179 = vector.shape_cast %165 : vector<1x1xf32> to vector<1x1x1xf32>
    %180 = vector.broadcast %179 : vector<1x1x1xf32> to vector<2x8x8xf32>
    %181 = arith.mulf %180, %178 : vector<2x8x8xf32>
    %182 = vector.shape_cast %166 : vector<1x1xf32> to vector<1x1x1xf32>
    %183 = vector.broadcast %182 : vector<1x1x1xf32> to vector<2x8x8xf32>
    %184 = arith.mulf %183, %174 : vector<2x8x8xf32>
    %185 = arith.mulf %184, %174 : vector<2x8x8xf32>
    %186 = arith.addf %181, %185 : vector<2x8x8xf32>
    %187 = math.exp %186 : vector<2x8x8xf32>
    %188 = arith.addf %162, %187 : vector<2x8x8xf32>
    %189 = vector.extract_strided_slice %7 {offsets = [0, 7], sizes = [1, 1], strides = [1, 1]} : vector<4x8xf32> to vector<1x1xf32>
    %190 = vector.extract_strided_slice %7 {offsets = [1, 7], sizes = [1, 1], strides = [1, 1]} : vector<4x8xf32> to vector<1x1xf32>
    %191 = vector.extract_strided_slice %7 {offsets = [2, 7], sizes = [1, 1], strides = [1, 1]} : vector<4x8xf32> to vector<1x1xf32>
    %192 = vector.extract_strided_slice %7 {offsets = [3, 7], sizes = [1, 1], strides = [1, 1]} : vector<4x8xf32> to vector<1x1xf32>
    %193 = vector.shape_cast %190 : vector<1x1xf32> to vector<1x1x1xf32>
    %194 = vector.broadcast %193 : vector<1x1x1xf32> to vector<2x8x8xf32>
    %195 = arith.subf %6, %194 : vector<2x8x8xf32>
    %196 = math.absf %195 : vector<2x8x8xf32>
    %cst_18 = arith.constant 6.28318548 : f32
    %197 = vector.broadcast %cst_18 : f32 to vector<2x8x8xf32>
    %198 = arith.subf %197, %196 : vector<2x8x8xf32>
    %199 = math.absf %198 : vector<2x8x8xf32>
    %200 = arith.minimumf %196, %199 : vector<2x8x8xf32>
    %201 = vector.shape_cast %189 : vector<1x1xf32> to vector<1x1x1xf32>
    %202 = vector.broadcast %201 : vector<1x1x1xf32> to vector<2x8x8xf32>
    %203 = arith.subf %5, %202 : vector<2x8x8xf32>
    %204 = arith.mulf %203, %203 : vector<2x8x8xf32>
    %205 = vector.shape_cast %191 : vector<1x1xf32> to vector<1x1x1xf32>
    %206 = vector.broadcast %205 : vector<1x1x1xf32> to vector<2x8x8xf32>
    %207 = arith.mulf %206, %204 : vector<2x8x8xf32>
    %208 = vector.shape_cast %192 : vector<1x1xf32> to vector<1x1x1xf32>
    %209 = vector.broadcast %208 : vector<1x1x1xf32> to vector<2x8x8xf32>
    %210 = arith.mulf %209, %200 : vector<2x8x8xf32>
    %211 = arith.mulf %210, %200 : vector<2x8x8xf32>
    %212 = arith.addf %207, %211 : vector<2x8x8xf32>
    %213 = math.exp %212 : vector<2x8x8xf32>
    %214 = arith.addf %188, %213 : vector<2x8x8xf32>
    %cst_19 = arith.constant 9.99999968E-21 : f32
    %215 = vector.broadcast %cst_19 : f32 to vector<2x8x8xf32>
    %216 = arith.addf %214, %215 : vector<2x8x8xf32>
    %217 = tpu.reciprocal %216 {approx = true} : vector<2x8x8xf32> -> vector<2x8x8xf32>
    %218 = arith.mulf %32, %217 : vector<2x8x8xf32>
    %219 = arith.mulf %57, %217 : vector<2x8x8xf32>
    %220 = arith.mulf %83, %217 : vector<2x8x8xf32>
    %221 = arith.mulf %109, %217 : vector<2x8x8xf32>
    %222 = arith.mulf %135, %217 : vector<2x8x8xf32>
    %223 = arith.mulf %161, %217 : vector<2x8x8xf32>
    %224 = arith.mulf %187, %217 : vector<2x8x8xf32>
    %225 = arith.mulf %213, %217 : vector<2x8x8xf32>
    %c0_20 = arith.constant 0 : index
    %c0_21 = arith.constant 0 : index
    %c0_22 = arith.constant 0 : index
    %226 = vector.load %arg3[%c0_20, %c0_21, %c0_22] : memref<2x8x8xf32, #tpu.memory_space<vmem>>, vector<2x8x8xf32>
    %227 = arith.mulf %218, %226 : vector<2x8x8xf32>
    %228 = vector.extract_strided_slice %4 {offsets = [0, 0, 0], sizes = [2, 8, 4], strides = [1, 1, 1]} : vector<2x8x32xf32> to vector<2x8x4xf32>
    "tpu.trace_start"() <{level = 10 : i32, message = "bij,bjf->bif"}> : () -> ()
    %cst_23 = arith.constant dense<0.000000e+00> : vector<2x8x4xf32>
    %229 = tpu.matmul %227, %228, %cst_23 {dimension_numbers = #tpu.dot_dimension_numbers<[2], [1], [1], [2], [0, 0, 0, 1, 1, 2], [0], [0]>} : vector<2x8x8xf32>, vector<2x8x4xf32>, vector<2x8x4xf32> -> vector<2x8x4xf32>
    "tpu.trace_stop"() : () -> ()
    %230 = arith.mulf %219, %226 : vector<2x8x8xf32>
    %231 = vector.extract_strided_slice %4 {offsets = [0, 0, 4], sizes = [2, 8, 4], strides = [1, 1, 1]} : vector<2x8x32xf32> to vector<2x8x4xf32>
    "tpu.trace_start"() <{level = 10 : i32, message = "bij,bjf->bif"}> : () -> ()
    %cst_24 = arith.constant dense<0.000000e+00> : vector<2x8x4xf32>
    %232 = tpu.matmul %230, %231, %cst_24 {dimension_numbers = #tpu.dot_dimension_numbers<[2], [1], [1], [2], [0, 0, 0, 1, 1, 2], [0], [0]>} : vector<2x8x8xf32>, vector<2x8x4xf32>, vector<2x8x4xf32> -> vector<2x8x4xf32>
    "tpu.trace_stop"() : () -> ()
    %233 = arith.mulf %220, %226 : vector<2x8x8xf32>
    %234 = vector.extract_strided_slice %4 {offsets = [0, 0, 8], sizes = [2, 8, 4], strides = [1, 1, 1]} : vector<2x8x32xf32> to vector<2x8x4xf32>
    "tpu.trace_start"() <{level = 10 : i32, message = "bij,bjf->bif"}> : () -> ()
    %cst_25 = arith.constant dense<0.000000e+00> : vector<2x8x4xf32>
    %235 = tpu.matmul %233, %234, %cst_25 {dimension_numbers = #tpu.dot_dimension_numbers<[2], [1], [1], [2], [0, 0, 0, 1, 1, 2], [0], [0]>} : vector<2x8x8xf32>, vector<2x8x4xf32>, vector<2x8x4xf32> -> vector<2x8x4xf32>
    "tpu.trace_stop"() : () -> ()
    %236 = arith.mulf %221, %226 : vector<2x8x8xf32>
    %237 = vector.extract_strided_slice %4 {offsets = [0, 0, 12], sizes = [2, 8, 4], strides = [1, 1, 1]} : vector<2x8x32xf32> to vector<2x8x4xf32>
    "tpu.trace_start"() <{level = 10 : i32, message = "bij,bjf->bif"}> : () -> ()
    %cst_26 = arith.constant dense<0.000000e+00> : vector<2x8x4xf32>
    %238 = tpu.matmul %236, %237, %cst_26 {dimension_numbers = #tpu.dot_dimension_numbers<[2], [1], [1], [2], [0, 0, 0, 1, 1, 2], [0], [0]>} : vector<2x8x8xf32>, vector<2x8x4xf32>, vector<2x8x4xf32> -> vector<2x8x4xf32>
    "tpu.trace_stop"() : () -> ()
    %239 = arith.mulf %222, %226 : vector<2x8x8xf32>
    %240 = vector.extract_strided_slice %4 {offsets = [0, 0, 16], sizes = [2, 8, 4], strides = [1, 1, 1]} : vector<2x8x32xf32> to vector<2x8x4xf32>
    "tpu.trace_start"() <{level = 10 : i32, message = "bij,bjf->bif"}> : () -> ()
    %cst_27 = arith.constant dense<0.000000e+00> : vector<2x8x4xf32>
    %241 = tpu.matmul %239, %240, %cst_27 {dimension_numbers = #tpu.dot_dimension_numbers<[2], [1], [1], [2], [0, 0, 0, 1, 1, 2], [0], [0]>} : vector<2x8x8xf32>, vector<2x8x4xf32>, vector<2x8x4xf32> -> vector<2x8x4xf32>
    "tpu.trace_stop"() : () -> ()
    %242 = arith.mulf %223, %226 : vector<2x8x8xf32>
    %243 = vector.extract_strided_slice %4 {offsets = [0, 0, 20], sizes = [2, 8, 4], strides = [1, 1, 1]} : vector<2x8x32xf32> to vector<2x8x4xf32>
    "tpu.trace_start"() <{level = 10 : i32, message = "bij,bjf->bif"}> : () -> ()
    %cst_28 = arith.constant dense<0.000000e+00> : vector<2x8x4xf32>
    %244 = tpu.matmul %242, %243, %cst_28 {dimension_numbers = #tpu.dot_dimension_numbers<[2], [1], [1], [2], [0, 0, 0, 1, 1, 2], [0], [0]>} : vector<2x8x8xf32>, vector<2x8x4xf32>, vector<2x8x4xf32> -> vector<2x8x4xf32>
    "tpu.trace_stop"() : () -> ()
    %245 = arith.mulf %224, %226 : vector<2x8x8xf32>
    %246 = vector.extract_strided_slice %4 {offsets = [0, 0, 24], sizes = [2, 8, 4], strides = [1, 1, 1]} : vector<2x8x32xf32> to vector<2x8x4xf32>
    "tpu.trace_start"() <{level = 10 : i32, message = "bij,bjf->bif"}> : () -> ()
    %cst_29 = arith.constant dense<0.000000e+00> : vector<2x8x4xf32>
    %247 = tpu.matmul %245, %246, %cst_29 {dimension_numbers = #tpu.dot_dimension_numbers<[2], [1], [1], [2], [0, 0, 0, 1, 1, 2], [0], [0]>} : vector<2x8x8xf32>, vector<2x8x4xf32>, vector<2x8x4xf32> -> vector<2x8x4xf32>
    "tpu.trace_stop"() : () -> ()
    %248 = arith.mulf %225, %226 : vector<2x8x8xf32>
    %249 = vector.extract_strided_slice %4 {offsets = [0, 0, 28], sizes = [2, 8, 4], strides = [1, 1, 1]} : vector<2x8x32xf32> to vector<2x8x4xf32>
    "tpu.trace_start"() <{level = 10 : i32, message = "bij,bjf->bif"}> : () -> ()
    %cst_30 = arith.constant dense<0.000000e+00> : vector<2x8x4xf32>
    %250 = tpu.matmul %248, %249, %cst_30 {dimension_numbers = #tpu.dot_dimension_numbers<[2], [1], [1], [2], [0, 0, 0, 1, 1, 2], [0], [0]>} : vector<2x8x8xf32>, vector<2x8x4xf32>, vector<2x8x4xf32> -> vector<2x8x4xf32>
    "tpu.trace_stop"() : () -> ()
    %251 = tpu.concatenate %229, %232, %235, %238, %241, %244, %247, %250 in 2 : vector<2x8x4xf32>, vector<2x8x4xf32>, vector<2x8x4xf32>, vector<2x8x4xf32>, vector<2x8x4xf32>, vector<2x8x4xf32>, vector<2x8x4xf32>, vector<2x8x4xf32> -> vector<2x8x32xf32>
    %cst_31 = arith.constant 0.000000e+00 : f32
    %252 = vector.broadcast %cst_31 : f32 to vector<2x8x32xf32>
    %253 = arith.maximumf %251, %252 : vector<2x8x32xf32>
    %cst_32 = arith.constant dense<0xFF800000> : vector<2x32xf32>
    %254 = vector.multi_reduction <maximumf>, %253, %cst_32 [1] : vector<2x8x32xf32> to vector<2x32xf32>
    %c0_33 = arith.constant 0 : index
    %c0_34 = arith.constant 0 : index
    %255 = vector.load %arg6[%c0_33, %c0_34] : memref<2x32xf32, #tpu.memory_space<vmem>>, vector<2x32xf32>
    %cst_35 = arith.constant 0.000000e+00 : f32
    %256 = vector.broadcast %cst_35 : f32 to vector<2x32xf32>
    %257 = arith.maximumf %255, %256 : vector<2x32xf32>
    %258 = arith.mulf %257, %254 : vector<2x32xf32>
    %c0_36 = arith.constant 0 : index
    %c0_37 = arith.constant 0 : index
    %259 = vector.load %arg7[%c0_36, %c0_37] : memref<32x16xf32, #tpu.memory_space<vmem>>, vector<32x16xf32>
    %cst_38 = arith.constant dense<0.000000e+00> : vector<2x16xf32>
    %260 = tpu.matmul %258, %259, %cst_38 {dimension_numbers = #tpu.dot_dimension_numbers<[1], [0], [0], [1], [0, 0, 1, 1], [], []>} : vector<2x32xf32>, vector<32x16xf32>, vector<2x16xf32> -> vector<2x16xf32>
    %c0_39 = arith.constant 0 : index
    %c0_40 = arith.constant 0 : index
    %261 = vector.load %arg8[%c0_39, %c0_40] : memref<1x16xf32, #tpu.memory_space<vmem>>, vector<1x16xf32>
    %262 = vector.broadcast %261 : vector<1x16xf32> to vector<2x16xf32>
    %263 = arith.addf %260, %262 : vector<2x16xf32>
    %cst_41 = arith.constant 0.000000e+00 : f32
    %264 = vector.broadcast %cst_41 : f32 to vector<2x16xf32>
    %265 = arith.maximumf %263, %264 : vector<2x16xf32>
    %c0_42 = arith.constant 0 : index
    %c0_43 = arith.constant 0 : index
    %266 = vector.load %arg9[%c0_42, %c0_43] : memref<16x16xf32, #tpu.memory_space<vmem>>, vector<16x16xf32>
    %cst_44 = arith.constant dense<0.000000e+00> : vector<2x16xf32>
    %267 = tpu.matmul %265, %266, %cst_44 {dimension_numbers = #tpu.dot_dimension_numbers<[1], [0], [0], [1], [0, 0, 1, 1], [], []>} : vector<2x16xf32>, vector<16x16xf32>, vector<2x16xf32> -> vector<2x16xf32>
    %c0_45 = arith.constant 0 : index
    %c0_46 = arith.constant 0 : index
    %268 = vector.load %arg10[%c0_45, %c0_46] : memref<1x16xf32, #tpu.memory_space<vmem>>, vector<1x16xf32>
    %269 = vector.broadcast %268 : vector<1x16xf32> to vector<2x16xf32>
    %270 = arith.addf %267, %269 : vector<2x16xf32>
    %c0_47 = arith.constant 0 : index
    %c0_48 = arith.constant 0 : index
    %271 = vector.load %arg11[%c0_47, %c0_48] : memref<2x16xf32, #tpu.memory_space<vmem>>, vector<2x16xf32>
    tpu.vector_store %arg11[%c0_47, %c0_48], %270 {strides = array<i32>} : memref<2x16xf32, #tpu.memory_space<vmem>>, vector<2x16xf32>,
    return
  }
}

</mosaic_0001>

<llo_original>
// kernel: forward.3
$region0: #{forward.3}
  #allocation0 [shape = 'u32[]', space=smem, size = 0x4, offset = 0x4, fixed_abs, tag = 'smem constant byte address 0x4 - core index']
  #allocation1 [shape = 'u32[72,128]{1,0:T(1,128)}', space=vmem, size = 0x9000, scoped, tag = 'internal scratch']
  %s0 = inlined_call_operand.hbm [shape: f32[2,24], index: 0, kind: input, shape index: {}]
  %s1 = inlined_call_operand.vmem [shape: f32[16,64], index: 1, kind: input, shape index: {}]
  %s2 = inlined_call_operand.vmem [shape: bf16[24,32], index: 2, kind: input, shape index: {}]
  %s3 = inlined_call_operand.hbm [shape: f32[1,32], index: 3, kind: input, shape index: {}]
  %s4 = inlined_call_operand.hbm [shape: bf16[64,512], index: 4, kind: input, shape index: {}]
  %s5 = inlined_call_operand.vmem [shape: bf16[32,512], index: 5, kind: input, shape index: {}]
  %s6 = inlined_call_operand.vmem [shape: f32[1,512], index: 6, kind: input, shape index: {}]
  %s7 = inlined_call_operand.hbm [shape: bf16[512,512], index: 7, kind: input, shape index: {}]
  %s8 = inlined_call_operand.vmem [shape: f32[1,512], index: 8, kind: input, shape index: {}]
  %s9 = inlined_call_operand.vmem [shape: f32[2,32], index: 9, kind: output, shape index: {0}]
  %s10 = inlined_call_operand.vmem [shape: f32[2,8,8], index: 10, kind: output, shape index: {1}]
  %11 = xla_tuple %s9, %s10
  %s12 = sld [smem:[#allocation0]]
  $region70: #{forward.3} parent=0
    _
  %s14 = ssub.s32 1, %s12
  %s15 = scalar_select 0, %s14, %s12
  $region1: #{forward.3} parent=0
    #allocation2 [shape = 'u8[1024]{0}', space=vmem, size = 0x400, scoped, tag = 'input window, operand 0, single buffered']
    #allocation3 [shape = 's32[1]{0}', space=sflag, size = 0x4, scoped, tag = 'scoped memory for forward.3']
    #allocation4 [shape = 'u8[512]{0}', space=vmem, size = 0x400, scoped, tag = 'input window, operand 3, single buffered']
    #allocation5 [shape = 's32[1]{0}', space=sflag, size = 0x4, scoped, tag = 'scoped memory for forward.3']
    #allocation6 [shape = 'u8[65536]{0}', space=vmem, size = 0x10000, scoped, tag = 'input window, operand 4, single buffered']
    #allocation7 [shape = 'u8[524288]{0}', space=vmem, size = 0x80000, scoped, tag = 'input window, operand 7, single buffered']
    #allocation8 [shape = 's32[1]{0}', space=sflag, size = 0x4, scoped, tag = 'scoped memory for forward.3']
    %16 = vsyncpa [#allocation3], 0
    %17 = vsyncpa [#allocation5], 0
    %18 = vsyncpa [#allocation8], 0
    // Predicated region
    $region2: #{forward.3} parent=1 // pred_check
      _
    $region3: #{forward.3} parent=1 // pred_check_branch
      %20 = sbr.rel (0) target = $region5
    $region4: #{forward.3} parent=1 // pred_region
      %22 = vsyncadd [#allocation3], 0
      %s24 = sshll.u32 %s0, 4
      %s25 = int_to_ptr.hbm [resolvable:$true] %s24
      %s26 = sshll.u32 [#allocation2], 4
      %s27 = int_to_ptr.vmem [resolvable:$true] %s26
      %29 = dma.hbm_to_vmem [thread:$0]  %s25, 32, %s27, [#allocation3]
    $region5: #{forward.3} parent=1 // pred_fallthru
      _
    // Predicated region
    $region6: #{forward.3} parent=1 // pred_check
      _
    $region7: #{forward.3} parent=1 // pred_check_branch
      %31 = sbr.rel (0) target = $region9
    $region8: #{forward.3} parent=1 // pred_region
      _
    $region9: #{forward.3} parent=1 // pred_fallthru
      _
    // Predicated region
    $region10: #{forward.3} parent=1 // pred_check
      _
    $region11: #{forward.3} parent=1 // pred_check_branch
      %33 = sbr.rel (0) target = $region13
    $region12: #{forward.3} parent=1 // pred_region
      _
    $region13: #{forward.3} parent=1 // pred_fallthru
      _
    // Predicated region
    $region14: #{forward.3} parent=1 // pred_check
      _
    $region15: #{forward.3} parent=1 // pred_check_branch
      %35 = sbr.rel (0) target = $region17
    $region16: #{forward.3} parent=1 // pred_region
      %37 = vsyncadd [#allocation5], 0
      %s39 = sshll.u32 %s3, 4
      %s40 = int_to_ptr.hbm [resolvable:$true] %s39
      %s41 = sshll.u32 [#allocation4], 4
      %s42 = int_to_ptr.vmem [resolvable:$true] %s41
      %44 = dma.hbm_to_vmem [thread:$0]  %s40, 16, %s42, [#allocation5]
    $region17: #{forward.3} parent=1 // pred_fallthru
      _
    // Predicated region
    $region18: #{forward.3} parent=1 // pred_check
      _
    $region19: #{forward.3} parent=1 // pred_check_branch
      %46 = sbr.rel (0) target = $region21
    $region20: #{forward.3} parent=1 // pred_region
      %48 = vsyncadd [#allocation5], 0
      %s49 = sshll.u32 %s4, 4
      %s50 = int_to_ptr.hbm [resolvable:$true] %s49
      %s51 = sshll.u32 [#allocation6], 4
      %s52 = int_to_ptr.vmem [resolvable:$true] %s51
      %57 = dma.hbm_to_vmem [thread:$0]  %s50, 2048, %s52, [#allocation5], 256, 256, 16
    $region21: #{forward.3} parent=1 // pred_fallthru
      _
    // Predicated region
    $region22: #{forward.3} parent=1 // pred_check
      _
    $region23: #{forward.3} parent=1 // pred_check_branch
      %59 = sbr.rel (0) target = $region25
    $region24: #{forward.3} parent=1 // pred_region
      _
    $region25: #{forward.3} parent=1 // pred_fallthru
      _
    // Predicated region
    $region26: #{forward.3} parent=1 // pred_check
      _
    $region27: #{forward.3} parent=1 // pred_check_branch
      %61 = sbr.rel (0) target = $region29
    $region28: #{forward.3} parent=1 // pred_region
      _
    $region29: #{forward.3} parent=1 // pred_fallthru
      _
    // Predicated region
    $region30: #{forward.3} parent=1 // pred_check
      _
    $region31: #{forward.3} parent=1 // pred_check_branch
      %63 = sbr.rel (0) target = $region33
    $region32: #{forward.3} parent=1 // pred_region
      %65 = vsyncadd [#allocation8], 0
      %s66 = sshll.u32 %s7, 4
      %s67 = int_to_ptr.hbm [resolvable:$true] %s66
      %s68 = sshll.u32 [#allocation7], 4
      %s69 = int_to_ptr.vmem [resolvable:$true] %s68
      %74 = dma.hbm_to_vmem [thread:$0]  %s67, 16384, %s69, [#allocation8], 256, 256, 16
    $region33: #{forward.3} parent=1 // pred_fallthru
      _
    // Predicated region
    $region34: #{forward.3} parent=1 // pred_check
      _
    $region35: #{forward.3} parent=1 // pred_check_branch
      %76 = sbr.rel (0) target = $region37
    $region36: #{forward.3} parent=1 // pred_region
      _
    $region37: #{forward.3} parent=1 // pred_fallthru
      _
    // Predicated region
    $region38: #{forward.3} parent=1 // pred_check
      _
    $region39: #{forward.3} parent=1 // pred_check_branch
      %78 = sbr.rel (0) target = $region41
    $region40: #{forward.3} parent=1 // pred_region
      %80 = dma.done [#allocation3], 32
    $region41: #{forward.3} parent=1 // pred_fallthru
      _
    // Predicated region
    $region42: #{forward.3} parent=1 // pred_check
      _
    $region43: #{forward.3} parent=1 // pred_check_branch
      %82 = sbr.rel (0) target = $region45
    $region44: #{forward.3} parent=1 // pred_region
      %84 = dma.done [#allocation5], 16
    $region45: #{forward.3} parent=1 // pred_fallthru
      _
    // Predicated region
    $region46: #{forward.3} parent=1 // pred_check
      _
    $region47: #{forward.3} parent=1 // pred_check_branch
      %86 = sbr.rel (0) target = $region49
    $region48: #{forward.3} parent=1 // pred_region
      %88 = dma.done [#allocation5], 2048
    $region49: #{forward.3} parent=1 // pred_fallthru
      _
    // Predicated region
    $region50: #{forward.3} parent=1 // pred_check
      _
    $region51: #{forward.3} parent=1 // pred_check_branch
      %90 = sbr.rel (0) target = $region53
    $region52: #{forward.3} parent=1 // pred_region
      %92 = dma.done [#allocation8], 16384
    $region53: #{forward.3} parent=1 // pred_fallthru
      _
    %v94 = vld [vmem:[#allocation2] sm:$0x3]
    %v95 = vpack.c.bf16 %v94, %v94
    %v96 = vld [vmem:[%s2] sm:$0xf]
    %v97 = vld [vmem:[%s2 + $0x4] sm:$0xf]
    %v98 = vld [vmem:[%s2 + $0x8] sm:$0xf]
    %v99 = vld [vmem:[#allocation4] sm:$0x1]
    %v101 = vperm.slane %v99, 0
    %v106 = vunpack.c.l.b16 %v96
    %v107 = vunpack.c.l.b16 %v97
    %v108 = vunpack.c.l.b16 %v98
    %v109 = vpack.c.b16 %v107, %v106
    %v110 = vpack.c.b16 %v108, %v108
    %vm112 = vcmask 195584
    %v114 = vsel %vm112, %v95, 0
    %vm116 = vcmask 1043456
    %v118 = vsel %vm116, %v110, 0
    %120 = vmatpush.bf16.msra.mxu0 0
    %121 = vmatpush.bf16.msra.mxu0 0
    %122 = vmatpush.bf16.msra.mxu0 0
    %123 = vmatpush.bf16.msra.mxu0 0
    %124 = vmatpush.bf16.msra.mxu0 0
    %125 = vmatpush.bf16.msra.mxu0 0
    %126 = vmatpush.bf16.msra.mxu0 %v118
    %127 = vmatpush.bf16.msra.mxu0 %v109
    %128 = vmatmul.bf16.gmra.mxu0 %v114
    %v129 = vpop.f32.mrf.mxu0
    %v130 = vadd.f32 %v101, %v129
    %v131 = vpop.f32.mrf.mxu0
    %132 = vdwg.mxu0
    %vm133 = vcmask 254976
    %134 = vst.msk [vmem:[%s9] sm:$0x3] %vm133, %v130
    %v135 = vld [vmem:[%s1] sm:$0xff]
    %v136 = vld [vmem:[%s1 + $0x8] sm:$0xff]
    %v137 = vpack.c.bf16 %v136, %v135
    %v138 = vld [vmem:[#allocation6] sm:$0xff]
    %v139 = vld [vmem:[#allocation6 + $0x8] sm:$0xff]
    %v140 = vld [vmem:[#allocation6 + $0x10] sm:$0xff]
    %v141 = vld [vmem:[#allocation6 + $0x18] sm:$0xff]
    %v142 = vld [vmem:[#allocation6 + $0x20] sm:$0xff]
    %v143 = vld [vmem:[#allocation6 + $0x28] sm:$0xff]
    %v144 = vld [vmem:[#allocation6 + $0x30] sm:$0xff]
    %v145 = vld [vmem:[#allocation6 + $0x38] sm:$0xff]
    %v146 = vld [vmem:[#allocation6 + $0x40] sm:$0xff]
    %v147 = vld [vmem:[#allocation6 + $0x48] sm:$0xff]
    %v148 = vld [vmem:[#allocation6 + $0x50] sm:$0xff]
    %v149 = vld [vmem:[#allocation6 + $0x58] sm:$0xff]
    %v150 = vld [vmem:[#allocation6 + $0x60] sm:$0xff]
    %v151 = vld [vmem:[#allocation6 + $0x68] sm:$0xff]
    %v152 = vld [vmem:[#allocation6 + $0x70] sm:$0xff]
    %v153 = vld [vmem:[#allocation6 + $0x78] sm:$0xff]
    %v170 = vunpack.c.l.b16 %v138
    %v171 = vunpack.c.h.b16 %v138
    %v172 = vunpack.c.l.b16 %v139
    %v173 = vunpack.c.h.b16 %v139
    %v174 = vunpack.c.l.b16 %v140
    %v175 = vunpack.c.h.b16 %v140
    %v176 = vunpack.c.l.b16 %v141
    %v177 = vunpack.c.h.b16 %v141
    %v178 = vunpack.c.l.b16 %v142
    %v179 = vunpack.c.h.b16 %v142
    %v180 = vunpack.c.l.b16 %v143
    %v181 = vunpack.c.h.b16 %v143
    %v182 = vunpack.c.l.b16 %v144
    %v183 = vunpack.c.h.b16 %v144
    %v184 = vunpack.c.l.b16 %v145
    %v185 = vunpack.c.h.b16 %v145
    %v186 = vunpack.c.l.b16 %v146
    %v187 = vunpack.c.h.b16 %v146
    %v188 = vunpack.c.l.b16 %v147
    %v189 = vunpack.c.h.b16 %v147
    %v190 = vunpack.c.l.b16 %v148
    %v191 = vunpack.c.h.b16 %v148
    %v192 = vunpack.c.l.b16 %v149
    %v193 = vunpack.c.h.b16 %v149
    %v194 = vunpack.c.l.b16 %v150
    %v195 = vunpack.c.h.b16 %v150
    %v196 = vunpack.c.l.b16 %v151
    %v197 = vunpack.c.h.b16 %v151
    %v198 = vunpack.c.l.b16 %v152
    %v199 = vunpack.c.h.b16 %v152
    %v200 = vunpack.c.l.b16 %v153
    %v201 = vunpack.c.h.b16 %v153
    %v202 = vpack.c.b16 %v174, %v170
    %v203 = vpack.c.b16 %v175, %v171
    %v204 = vpack.c.b16 %v176, %v172
    %v205 = vpack.c.b16 %v177, %v173
    %v206 = vpack.c.b16 %v182, %v178
    %v207 = vpack.c.b16 %v183, %v179
    %v208 = vpack.c.b16 %v184, %v180
    %v209 = vpack.c.b16 %v185, %v181
    %v210 = vpack.c.b16 %v190, %v186
    %v211 = vpack.c.b16 %v191, %v187
    %v212 = vpack.c.b16 %v192, %v188
    %v213 = vpack.c.b16 %v193, %v189
    %v214 = vpack.c.b16 %v198, %v194
    %v215 = vpack.c.b16 %v199, %v195
    %v216 = vpack.c.b16 %v200, %v196
    %v217 = vpack.c.b16 %v201, %v197
    %vm234 = vcmask 523264
    %v236 = vsel %vm234, %v137, 0
    %238 = vmatpush.bf16.msra.mxu0 0
    %239 = vmatpush.bf16.msra.mxu0 0
    %240 = vmatpush.bf16.msra.mxu0 0
    %241 = vmatpush.bf16.msra.mxu0 0
    %242 = vmatpush.bf16.msra.mxu0 %v214
    %243 = vmatpush.bf16.msra.mxu0 %v210
    %244 = vmatpush.bf16.msra.mxu0 %v206
    %245 = vmatpush.bf16.msra.mxu0 %v202
    %246 = vmatmul.bf16.gmra.mxu0 %v236
    %v247 = vpop.f32.mrf.mxu0
    %v248 = vadd.f32 0.0, %v247
    %v249 = vpop.f32.mrf.mxu0
    %v250 = vadd.f32 0.0, %v249
    %251 = vdwg.mxu0
    %252 = vmatpush.bf16.msra.mxu0 0
    %253 = vmatpush.bf16.msra.mxu0 0
    %254 = vmatpush.bf16.msra.mxu0 0
    %255 = vmatpush.bf16.msra.mxu0 0
    %256 = vmatpush.bf16.msra.mxu0 %v215
    %257 = vmatpush.bf16.msra.mxu0 %v211
    %258 = vmatpush.bf16.msra.mxu0 %v207
    %259 = vmatpush.bf16.msra.mxu0 %v203
    %260 = vmatmul.bf16.gmra.mxu0 %v236
    %v261 = vpop.f32.mrf.mxu0
    %v262 = vadd.f32 0.0, %v261
    %v263 = vpop.f32.mrf.mxu0
    %v264 = vadd.f32 0.0, %v263
    %265 = vdwg.mxu0
    %266 = vmatpush.bf16.msra.mxu0 0
    %267 = vmatpush.bf16.msra.mxu0 0
    %268 = vmatpush.bf16.msra.mxu0 0
    %269 = vmatpush.bf16.msra.mxu0 0
    %270 = vmatpush.bf16.msra.mxu0 %v216
    %271 = vmatpush.bf16.msra.mxu0 %v212
    %272 = vmatpush.bf16.msra.mxu0 %v208
    %273 = vmatpush.bf16.msra.mxu0 %v204
    %274 = vmatmul.bf16.gmra.mxu0 %v236
    %v275 = vpop.f32.mrf.mxu0
    %v276 = vadd.f32 0.0, %v275
    %v277 = vpop.f32.mrf.mxu0
    %v278 = vadd.f32 0.0, %v277
    %279 = vdwg.mxu0
    %280 = vmatpush.bf16.msra.mxu0 0
    %281 = vmatpush.bf16.msra.mxu0 0
    %282 = vmatpush.bf16.msra.mxu0 0
    %283 = vmatpush.bf16.msra.mxu0 0
    %284 = vmatpush.bf16.msra.mxu0 %v217
    %285 = vmatpush.bf16.msra.mxu0 %v213
    %286 = vmatpush.bf16.msra.mxu0 %v209
    %287 = vmatpush.bf16.msra.mxu0 %v205
    %288 = vmatmul.bf16.gmra.mxu0 %v236
    %v289 = vpop.f32.mrf.mxu0
    %v290 = vadd.f32 0.0, %v289
    %v291 = vpop.f32.mrf.mxu0
    %v292 = vadd.f32 0.0, %v291
    %293 = vdwg.mxu0
    %v294 = vpack.c.bf16 %v130, %v130
    %v295 = vld [vmem:[%s5] sm:$0xff]
    %v296 = vld [vmem:[%s5 + $0x8] sm:$0xff]
    %v297 = vld [vmem:[%s5 + $0x10] sm:$0xff]
    %v298 = vld [vmem:[%s5 + $0x18] sm:$0xff]
    %v299 = vld [vmem:[%s5 + $0x20] sm:$0xff]
    %v300 = vld [vmem:[%s5 + $0x28] sm:$0xff]
    %v301 = vld [vmem:[%s5 + $0x30] sm:$0xff]
    %v302 = vld [vmem:[%s5 + $0x38] sm:$0xff]
    %v303 = vld [vmem:[%s6] sm:$0xf]
    %v305 = vperm.slane %v303, 0
    %v306 = vperm.slane %v303, 1
    %v307 = vperm.slane %v303, 2
    %v308 = vperm.slane %v303, 3
    %v321 = vunpack.c.l.b16 %v295
    %v322 = vunpack.c.h.b16 %v295
    %v323 = vunpack.c.l.b16 %v296
    %v324 = vunpack.c.h.b16 %v296
    %v325 = vunpack.c.l.b16 %v297
    %v326 = vunpack.c.h.b16 %v297
    %v327 = vunpack.c.l.b16 %v298
    %v328 = vunpack.c.h.b16 %v298
    %v329 = vunpack.c.l.b16 %v299
    %v330 = vunpack.c.h.b16 %v299
    %v331 = vunpack.c.l.b16 %v300
    %v332 = vunpack.c.h.b16 %v300
    %v333 = vunpack.c.l.b16 %v301
    %v334 = vunpack.c.h.b16 %v301
    %v335 = vunpack.c.l.b16 %v302
    %v336 = vunpack.c.h.b16 %v302
    %v337 = vpack.c.b16 %v325, %v321
    %v338 = vpack.c.b16 %v326, %v322
    %v339 = vpack.c.b16 %v327, %v323
    %v340 = vpack.c.b16 %v328, %v324
    %v341 = vpack.c.b16 %v333, %v329
    %v342 = vpack.c.b16 %v334, %v330
    %v343 = vpack.c.b16 %v335, %v331
    %v344 = vpack.c.b16 %v336, %v332
    %vm353 = vcmask 261120
    %v355 = vsel %vm353, %v294, 0
    %357 = vmatpush.bf16.msra.mxu0 0
    %358 = vmatpush.bf16.msra.mxu0 0
    %359 = vmatpush.bf16.msra.mxu0 0
    %360 = vmatpush.bf16.msra.mxu0 0
    %361 = vmatpush.bf16.msra.mxu0 0
    %362 = vmatpush.bf16.msra.mxu0 0
    %363 = vmatpush.bf16.msra.mxu0 %v341
    %364 = vmatpush.bf16.msra.mxu0 %v337
    %365 = vmatmul.bf16.gmra.mxu0 %v355
    %v366 = vpop.f32.mrf.mxu0
    %v367 = vadd.f32 %v305, %v366
    %v368 = vpop.f32.mrf.mxu0
    %369 = vdwg.mxu0
    %370 = vmatpush.bf16.msra.mxu0 0
    %371 = vmatpush.bf16.msra.mxu0 0
    %372 = vmatpush.bf16.msra.mxu0 0
    %373 = vmatpush.bf16.msra.mxu0 0
    %374 = vmatpush.bf16.msra.mxu0 0
    %375 = vmatpush.bf16.msra.mxu0 0
    %376 = vmatpush.bf16.msra.mxu0 %v342
    %377 = vmatpush.bf16.msra.mxu0 %v338
    %378 = vmatmul.bf16.gmra.mxu0 %v355
    %v379 = vpop.f32.mrf.mxu0
    %v380 = vadd.f32 %v306, %v379
    %v381 = vpop.f32.mrf.mxu0
    %382 = vdwg.mxu0
    %383 = vmatpush.bf16.msra.mxu0 0
    %384 = vmatpush.bf16.msra.mxu0 0
    %385 = vmatpush.bf16.msra.mxu0 0
    %386 = vmatpush.bf16.msra.mxu0 0
    %387 = vmatpush.bf16.msra.mxu0 0
    %388 = vmatpush.bf16.msra.mxu0 0
    %389 = vmatpush.bf16.msra.mxu0 %v343
    %390 = vmatpush.bf16.msra.mxu0 %v339
    %391 = vmatmul.bf16.gmra.mxu0 %v355
    %v392 = vpop.f32.mrf.mxu0
    %v393 = vadd.f32 %v307, %v392
    %v394 = vpop.f32.mrf.mxu0
    %395 = vdwg.mxu0
    %396 = vmatpush.bf16.msra.mxu0 0
    %397 = vmatpush.bf16.msra.mxu0 0
    %398 = vmatpush.bf16.msra.mxu0 0
    %399 = vmatpush.bf16.msra.mxu0 0
    %400 = vmatpush.bf16.msra.mxu0 0
    %401 = vmatpush.bf16.msra.mxu0 0
    %402 = vmatpush.bf16.msra.mxu0 %v344
    %403 = vmatpush.bf16.msra.mxu0 %v340
    %404 = vmatmul.bf16.gmra.mxu0 %v355
    %v405 = vpop.f32.mrf.mxu0
    %v406 = vadd.f32 %v308, %v405
    %v407 = vpop.f32.mrf.mxu0
    %408 = vdwg.mxu0
    %v413 = vrot.slane %v380, 7
    %v414 = vrot.slane %v393, 6
    %v415 = vrot.slane %v406, 5
    %vm416 = vcmask 1040384
    %v417 = vsel %vm416, %v367, %v413
    %vm418 = vcmask 1042434
    %v419 = vsel %vm418, %v414, %v415
    %vm420 = vcmask 1041408
    %v421 = vsel %vm420, %v417, %v419
    %vm422 = vcmask 1041409
    %v423 = vsel %vm422, %v367, %v413
    %vm424 = vcmask 1043459
    %v425 = vsel %vm424, %v414, %v415
    %vm426 = vcmask 1042433
    %v427 = vsel %vm426, %v423, %v425
    %v428 = vrot.slane %v427, 1
    %v429 = vperm.slane %v421, 0
    %v430 = vperm.slane %v421, 1
    %v431 = vperm.slane %v421, 2
    %v432 = vperm.slane %v421, 3
    %v433 = vperm.slane %v428, 0
    %v434 = vperm.slane %v428, 1
    %v435 = vperm.slane %v428, 2
    %v436 = vperm.slane %v428, 3
    %v445 = vadd.f32 %v248, %v429
    %v446 = vadd.f32 %v262, %v430
    %v447 = vadd.f32 %v276, %v431
    %v448 = vadd.f32 %v290, %v432
    %v449 = vadd.f32 %v250, %v433
    %v450 = vadd.f32 %v264, %v434
    %v451 = vadd.f32 %v278, %v435
    %v452 = vadd.f32 %v292, %v436
    %v453 = vmax.f32 %v445, 0.0
    %v454 = vmax.f32 %v446, 0.0
    %v455 = vmax.f32 %v447, 0.0
    %v456 = vmax.f32 %v448, 0.0
    %v457 = vmax.f32 %v449, 0.0
    %v458 = vmax.f32 %v450, 0.0
    %v459 = vmax.f32 %v451, 0.0
    %v460 = vmax.f32 %v452, 0.0
    %v461 = vpack.c.bf16 %v457, %v453
    %v462 = vpack.c.bf16 %v458, %v454
    %v463 = vpack.c.bf16 %v459, %v455
    %v464 = vpack.c.bf16 %v460, %v456
    %v465 = vld [vmem:[#allocation7] sm:$0xff]
    %v466 = vld [vmem:[#allocation7 + $0x8] sm:$0xff]
    %v467 = vld [vmem:[#allocation7 + $0x10] sm:$0xff]
    %v468 = vld [vmem:[#allocation7 + $0x18] sm:$0xff]
    %v469 = vld [vmem:[#allocation7 + $0x20] sm:$0xff]
    %v470 = vld [vmem:[#allocation7 + $0x28] sm:$0xff]
    %v471 = vld [vmem:[#allocation7 + $0x30] sm:$0xff]
    %v472 = vld [vmem:[#allocation7 + $0x38] sm:$0xff]
    %v473 = vld [vmem:[#allocation7 + $0x40] sm:$0xff]
    %v474 = vld [vmem:[#allocation7 + $0x48] sm:$0xff]
    %v475 = vld [vmem:[#allocation7 + $0x50] sm:$0xff]
    %v476 = vld [vmem:[#allocation7 + $0x58] sm:$0xff]
    %v477 = vld [vmem:[#allocation7 + $0x60] sm:$0xff]
    %v478 = vld [vmem:[#allocation7 + $0x68] sm:$0xff]
    %v479 = vld [vmem:[#allocation7 + $0x70] sm:$0xff]
    %v480 = vld [vmem:[#allocation7 + $0x78] sm:$0xff]
    %v481 = vld [vmem:[#allocation7 + $0x80] sm:$0xff]
    %v482 = vld [vmem:[#allocation7 + $0x88] sm:$0xff]
    %v483 = vld [vmem:[#allocation7 + $0x90] sm:$0xff]
    %v484 = vld [vmem:[#allocation7 + $0x98] sm:$0xff]
    %v485 = vld [vmem:[#allocation7 + $0xa0] sm:$0xff]
    %v486 = vld [vmem:[#allocation7 + $0xa8] sm:$0xff]
    %v487 = vld [vmem:[#allocation7 + $0xb0] sm:$0xff]
    %v488 = vld [vmem:[#allocation7 + $0xb8] sm:$0xff]
    %v489 = vld [vmem:[#allocation7 + $0xc0] sm:$0xff]
    %v490 = vld [vmem:[#allocation7 + $0xc8] sm:$0xff]
    %v491 = vld [vmem:[#allocation7 + $0xd0] sm:$0xff]
    %v492 = vld [vmem:[#allocation7 + $0xd8] sm:$0xff]
    %v493 = vld [vmem:[#allocation7 + $0xe0] sm:$0xff]
    %v494 = vld [vmem:[#allocation7 + $0xe8] sm:$0xff]
    %v495 = vld [vmem:[#allocation7 + $0xf0] sm:$0xff]
    %v496 = vld [vmem:[#allocation7 + $0xf8] sm:$0xff]
    %v497 = vld [vmem:[#allocation7 + $0x100] sm:$0xff]
    %v498 = vld [vmem:[#allocation7 + $0x108] sm:$0xff]
    %v499 = vld [vmem:[#allocation7 + $0x110] sm:$0xff]
    %v500 = vld [vmem:[#allocation7 + $0x118] sm:$0xff]
    %v501 = vld [vmem:[#allocation7 + $0x120] sm:$0xff]
    %v502 = vld [vmem:[#allocation7 + $0x128] sm:$0xff]
    %v503 = vld [vmem:[#allocation7 + $0x130] sm:$0xff]
    %v504 = vld [vmem:[#allocation7 + $0x138] sm:$0xff]
    %v505 = vld [vmem:[#allocation7 + $0x140] sm:$0xff]
    %v506 = vld [vmem:[#allocation7 + $0x148] sm:$0xff]
    %v507 = vld [vmem:[#allocation7 + $0x150] sm:$0xff]
    %v508 = vld [vmem:[#allocation7 + $0x158] sm:$0xff]
    %v509 = vld [vmem:[#allocation7 + $0x160] sm:$0xff]
    %v510 = vld [vmem:[#allocation7 + $0x168] sm:$0xff]
    %v511 = vld [vmem:[#allocation7 + $0x170] sm:$0xff]
    %v512 = vld [vmem:[#allocation7 + $0x178] sm:$0xff]
    %v513 = vld [vmem:[#allocation7 + $0x180] sm:$0xff]
    %v514 = vld [vmem:[#allocation7 + $0x188] sm:$0xff]
    %v515 = vld [vmem:[#allocation7 + $0x190] sm:$0xff]
    %v516 = vld [vmem:[#allocation7 + $0x198] sm:$0xff]
    %v517 = vld [vmem:[#allocation7 + $0x1a0] sm:$0xff]
    %v518 = vld [vmem:[#allocation7 + $0x1a8] sm:$0xff]
    %v519 = vld [vmem:[#allocation7 + $0x1b0] sm:$0xff]
    %v520 = vld [vmem:[#allocation7 + $0x1b8] sm:$0xff]
    %v521 = vld [vmem:[#allocation7 + $0x1c0] sm:$0xff]
    %v522 = vld [vmem:[#allocation7 + $0x1c8] sm:$0xff]
    %v523 = vld [vmem:[#allocation7 + $0x1d0] sm:$0xff]
    %v524 = vld [vmem:[#allocation7 + $0x1d8] sm:$0xff]
    %v525 = vld [vmem:[#allocation7 + $0x1e0] sm:$0xff]
    %v526 = vld [vmem:[#allocation7 + $0x1e8] sm:$0xff]
    %v527 = vld [vmem:[#allocation7 + $0x1f0] sm:$0xff]
    %v528 = vld [vmem:[#allocation7 + $0x1f8] sm:$0xff]
    %v529 = vld [vmem:[#allocation7 + $0x200] sm:$0xff]
    %v530 = vld [vmem:[#allocation7 + $0x208] sm:$0xff]
    %v531 = vld [vmem:[#allocation7 + $0x210] sm:$0xff]
    %v532 = vld [vmem:[#allocation7 + $0x218] sm:$0xff]
    %v533 = vld [vmem:[#allocation7 + $0x220] sm:$0xff]
    %v534 = vld [vmem:[#allocation7 + $0x228] sm:$0xff]
    %v535 = vld [vmem:[#allocation7 + $0x230] sm:$0xff]
    %v536 = vld [vmem:[#allocation7 + $0x238] sm:$0xff]
    %v537 = vld [vmem:[#allocation7 + $0x240] sm:$0xff]
    %v538 = vld [vmem:[#allocation7 + $0x248] sm:$0xff]
    %v539 = vld [vmem:[#allocation7 + $0x250] sm:$0xff]
    %v540 = vld [vmem:[#allocation7 + $0x258] sm:$0xff]
    %v541 = vld [vmem:[#allocation7 + $0x260] sm:$0xff]
    %v542 = vld [vmem:[#allocation7 + $0x268] sm:$0xff]
    %v543 = vld [vmem:[#allocation7 + $0x270] sm:$0xff]
    %v544 = vld [vmem:[#allocation7 + $0x278] sm:$0xff]
    %v545 = vld [vmem:[#allocation7 + $0x280] sm:$0xff]
    %v546 = vld [vmem:[#allocation7 + $0x288] sm:$0xff]
    %v547 = vld [vmem:[#allocation7 + $0x290] sm:$0xff]
    %v548 = vld [vmem:[#allocation7 + $0x298] sm:$0xff]
    %v549 = vld [vmem:[#allocation7 + $0x2a0] sm:$0xff]
    %v550 = vld [vmem:[#allocation7 + $0x2a8] sm:$0xff]
    %v551 = vld [vmem:[#allocation7 + $0x2b0] sm:$0xff]
    %v552 = vld [vmem:[#allocation7 + $0x2b8] sm:$0xff]
    %v553 = vld [vmem:[#allocation7 + $0x2c0] sm:$0xff]
    %v554 = vld [vmem:[#allocation7 + $0x2c8] sm:$0xff]
    %v555 = vld [vmem:[#allocation7 + $0x2d0] sm:$0xff]
    %v556 = vld [vmem:[#allocation7 + $0x2d8] sm:$0xff]
    %v557 = vld [vmem:[#allocation7 + $0x2e0] sm:$0xff]
    %v558 = vld [vmem:[#allocation7 + $0x2e8] sm:$0xff]
    %v559 = vld [vmem:[#allocation7 + $0x2f0] sm:$0xff]
    %v560 = vld [vmem:[#allocation7 + $0x2f8] sm:$0xff]
    %v561 = vld [vmem:[#allocation7 + $0x300] sm:$0xff]
    %v562 = vld [vmem:[#allocation7 + $0x308] sm:$0xff]
    %v563 = vld [vmem:[#allocation7 + $0x310] sm:$0xff]
    %v564 = vld [vmem:[#allocation7 + $0x318] sm:$0xff]
    %v565 = vld [vmem:[#allocation7 + $0x320] sm:$0xff]
    %v566 = vld [vmem:[#allocation7 + $0x328] sm:$0xff]
    %v567 = vld [vmem:[#allocation7 + $0x330] sm:$0xff]
    %v568 = vld [vmem:[#allocation7 + $0x338] sm:$0xff]
    %v569 = vld [vmem:[#allocation7 + $0x340] sm:$0xff]
    %v570 = vld [vmem:[#allocation7 + $0x348] sm:$0xff]
    %v571 = vld [vmem:[#allocation7 + $0x350] sm:$0xff]
    %v572 = vld [vmem:[#allocation7 + $0x358] sm:$0xff]
    %v573 = vld [vmem:[#allocation7 + $0x360] sm:$0xff]
    %v574 = vld [vmem:[#allocation7 + $0x368] sm:$0xff]
    %v575 = vld [vmem:[#allocation7 + $0x370] sm:$0xff]
    %v576 = vld [vmem:[#allocation7 + $0x378] sm:$0xff]
    %v577 = vld [vmem:[#allocation7 + $0x380] sm:$0xff]
    %v578 = vld [vmem:[#allocation7 + $0x388] sm:$0xff]
    %v579 = vld [vmem:[#allocation7 + $0x390] sm:$0xff]
    %v580 = vld [vmem:[#allocation7 + $0x398] sm:$0xff]
    %v581 = vld [vmem:[#allocation7 + $0x3a0] sm:$0xff]
    %v582 = vld [vmem:[#allocation7 + $0x3a8] sm:$0xff]
    %v583 = vld [vmem:[#allocation7 + $0x3b0] sm:$0xff]
    %v584 = vld [vmem:[#allocation7 + $0x3b8] sm:$0xff]
    %v585 = vld [vmem:[#allocation7 + $0x3c0] sm:$0xff]
    %v586 = vld [vmem:[#allocation7 + $0x3c8] sm:$0xff]
    %v587 = vld [vmem:[#allocation7 + $0x3d0] sm:$0xff]
    %v588 = vld [vmem:[#allocation7 + $0x3d8] sm:$0xff]
    %v589 = vld [vmem:[#allocation7 + $0x3e0] sm:$0xff]
    %v590 = vld [vmem:[#allocation7 + $0x3e8] sm:$0xff]
    %v591 = vld [vmem:[#allocation7 + $0x3f0] sm:$0xff]
    %v592 = vld [vmem:[#allocation7 + $0x3f8] sm:$0xff]
    %v593 = vld [vmem:[%s8] sm:$0xf]
    %v595 = vperm.slane %v593, 0
    %v596 = vperm.slane %v593, 1
    %v597 = vperm.slane %v593, 2
    %v598 = vperm.slane %v593, 3
    %v731 = vunpack.c.l.b16 %v465
    %v732 = vunpack.c.h.b16 %v465
    %v733 = vunpack.c.l.b16 %v466
    %v734 = vunpack.c.h.b16 %v466
    %v735 = vunpack.c.l.b16 %v467
    %v736 = vunpack.c.h.b16 %v467
    %v737 = vunpack.c.l.b16 %v468
    %v738 = vunpack.c.h.b16 %v468
    %v739 = vunpack.c.l.b16 %v469
    %v740 = vunpack.c.h.b16 %v469
    %v741 = vunpack.c.l.b16 %v470
    %v742 = vunpack.c.h.b16 %v470
    %v743 = vunpack.c.l.b16 %v471
    %v744 = vunpack.c.h.b16 %v471
    %v745 = vunpack.c.l.b16 %v472
    %v746 = vunpack.c.h.b16 %v472
    %v747 = vunpack.c.l.b16 %v473
    %v748 = vunpack.c.h.b16 %v473
    %v749 = vunpack.c.l.b16 %v474
    %v750 = vunpack.c.h.b16 %v474
    %v751 = vunpack.c.l.b16 %v475
    %v752 = vunpack.c.h.b16 %v475
    %v753 = vunpack.c.l.b16 %v476
    %v754 = vunpack.c.h.b16 %v476
    %v755 = vunpack.c.l.b16 %v477
    %v756 = vunpack.c.h.b16 %v477
    %v757 = vunpack.c.l.b16 %v478
    %v758 = vunpack.c.h.b16 %v478
    %v759 = vunpack.c.l.b16 %v479
    %v760 = vunpack.c.h.b16 %v479
    %v761 = vunpack.c.l.b16 %v480
    %v762 = vunpack.c.h.b16 %v480
    %v763 = vunpack.c.l.b16 %v481
    %v764 = vunpack.c.h.b16 %v481
    %v765 = vunpack.c.l.b16 %v482
    %v766 = vunpack.c.h.b16 %v482
    %v767 = vunpack.c.l.b16 %v483
    %v768 = vunpack.c.h.b16 %v483
    %v769 = vunpack.c.l.b16 %v484
    %v770 = vunpack.c.h.b16 %v484
    %v771 = vunpack.c.l.b16 %v485
    %v772 = vunpack.c.h.b16 %v485
    %v773 = vunpack.c.l.b16 %v486
    %v774 = vunpack.c.h.b16 %v486
    %v775 = vunpack.c.l.b16 %v487
    %v776 = vunpack.c.h.b16 %v487
    %v777 = vunpack.c.l.b16 %v488
    %v778 = vunpack.c.h.b16 %v488
    %v779 = vunpack.c.l.b16 %v489
    %v780 = vunpack.c.h.b16 %v489
    %v781 = vunpack.c.l.b16 %v490
    %v782 = vunpack.c.h.b16 %v490
    %v783 = vunpack.c.l.b16 %v491
    %v784 = vunpack.c.h.b16 %v491
    %v785 = vunpack.c.l.b16 %v492
    %v786 = vunpack.c.h.b16 %v492
    %v787 = vunpack.c.l.b16 %v493
    %v788 = vunpack.c.h.b16 %v493
    %v789 = vunpack.c.l.b16 %v494
    %v790 = vunpack.c.h.b16 %v494
    %v791 = vunpack.c.l.b16 %v495
    %v792 = vunpack.c.h.b16 %v495
    %v793 = vunpack.c.l.b16 %v496
    %v794 = vunpack.c.h.b16 %v496
    %v795 = vunpack.c.l.b16 %v497
    %v796 = vunpack.c.h.b16 %v497
    %v797 = vunpack.c.l.b16 %v498
    %v798 = vunpack.c.h.b16 %v498
    %v799 = vunpack.c.l.b16 %v499
    %v800 = vunpack.c.h.b16 %v499
    %v801 = vunpack.c.l.b16 %v500
    %v802 = vunpack.c.h.b16 %v500
    %v803 = vunpack.c.l.b16 %v501
    %v804 = vunpack.c.h.b16 %v501
    %v805 = vunpack.c.l.b16 %v502
    %v806 = vunpack.c.h.b16 %v502
    %v807 = vunpack.c.l.b16 %v503
    %v808 = vunpack.c.h.b16 %v503
    %v809 = vunpack.c.l.b16 %v504
    %v810 = vunpack.c.h.b16 %v504
    %v811 = vunpack.c.l.b16 %v505
    %v812 = vunpack.c.h.b16 %v505
    %v813 = vunpack.c.l.b16 %v506
    %v814 = vunpack.c.h.b16 %v506
    %v815 = vunpack.c.l.b16 %v507
    %v816 = vunpack.c.h.b16 %v507
    %v817 = vunpack.c.l.b16 %v508
    %v818 = vunpack.c.h.b16 %v508
    %v819 = vunpack.c.l.b16 %v509
    %v820 = vunpack.c.h.b16 %v509
    %v821 = vunpack.c.l.b16 %v510
    %v822 = vunpack.c.h.b16 %v510
    %v823 = vunpack.c.l.b16 %v511
    %v824 = vunpack.c.h.b16 %v511
    %v825 = vunpack.c.l.b16 %v512
    %v826 = vunpack.c.h.b16 %v512
    %v827 = vunpack.c.l.b16 %v513
    %v828 = vunpack.c.h.b16 %v513
    %v829 = vunpack.c.l.b16 %v514
    %v830 = vunpack.c.h.b16 %v514
    %v831 = vunpack.c.l.b16 %v515
    %v832 = vunpack.c.h.b16 %v515
    %v833 = vunpack.c.l.b16 %v516
    %v834 = vunpack.c.h.b16 %v516
    %v835 = vunpack.c.l.b16 %v517
    %v836 = vunpack.c.h.b16 %v517
    %v837 = vunpack.c.l.b16 %v518
    %v838 = vunpack.c.h.b16 %v518
    %v839 = vunpack.c.l.b16 %v519
    %v840 = vunpack.c.h.b16 %v519
    %v841 = vunpack.c.l.b16 %v520
    %v842 = vunpack.c.h.b16 %v520
    %v843 = vunpack.c.l.b16 %v521
    %v844 = vunpack.c.h.b16 %v521
    %v845 = vunpack.c.l.b16 %v522
    %v846 = vunpack.c.h.b16 %v522
    %v847 = vunpack.c.l.b16 %v523
    %v848 = vunpack.c.h.b16 %v523
    %v849 = vunpack.c.l.b16 %v524
    %v850 = vunpack.c.h.b16 %v524
    %v851 = vunpack.c.l.b16 %v525
    %v852 = vunpack.c.h.b16 %v525
    %v853 = vunpack.c.l.b16 %v526
    %v854 = vunpack.c.h.b16 %v526
    %v855 = vunpack.c.l.b16 %v527
    %v856 = vunpack.c.h.b16 %v527
    %v857 = vunpack.c.l.b16 %v528
    %v858 = vunpack.c.h.b16 %v528
    %v859 = vunpack.c.l.b16 %v529
    %v860 = vunpack.c.h.b16 %v529
    %v861 = vunpack.c.l.b16 %v530
    %v862 = vunpack.c.h.b16 %v530
    %v863 = vunpack.c.l.b16 %v531
    %v864 = vunpack.c.h.b16 %v531
    %v865 = vunpack.c.l.b16 %v532
    %v866 = vunpack.c.h.b16 %v532
    %v867 = vunpack.c.l.b16 %v533
    %v868 = vunpack.c.h.b16 %v533
    %v869 = vunpack.c.l.b16 %v534
    %v870 = vunpack.c.h.b16 %v534
    %v871 = vunpack.c.l.b16 %v535
    %v872 = vunpack.c.h.b16 %v535
    %v873 = vunpack.c.l.b16 %v536
    %v874 = vunpack.c.h.b16 %v536
    %v875 = vunpack.c.l.b16 %v537
    %v876 = vunpack.c.h.b16 %v537
    %v877 = vunpack.c.l.b16 %v538
    %v878 = vunpack.c.h.b16 %v538
    %v879 = vunpack.c.l.b16 %v539
    %v880 = vunpack.c.h.b16 %v539
    %v881 = vunpack.c.l.b16 %v540
    %v882 = vunpack.c.h.b16 %v540
    %v883 = vunpack.c.l.b16 %v541
    %v884 = vunpack.c.h.b16 %v541
    %v885 = vunpack.c.l.b16 %v542
    %v886 = vunpack.c.h.b16 %v542
    %v887 = vunpack.c.l.b16 %v543
    %v888 = vunpack.c.h.b16 %v543
    %v889 = vunpack.c.l.b16 %v544
    %v890 = vunpack.c.h.b16 %v544
    %v891 = vunpack.c.l.b16 %v545
    %v892 = vunpack.c.h.b16 %v545
    %v893 = vunpack.c.l.b16 %v546
    %v894 = vunpack.c.h.b16 %v546
    %v895 = vunpack.c.l.b16 %v547
    %v896 = vunpack.c.h.b16 %v547
    %v897 = vunpack.c.l.b16 %v548
    %v898 = vunpack.c.h.b16 %v548
    %v899 = vunpack.c.l.b16 %v549
    %v900 = vunpack.c.h.b16 %v549
    %v901 = vunpack.c.l.b16 %v550
    %v902 = vunpack.c.h.b16 %v550
    %v903 = vunpack.c.l.b16 %v551
    %v904 = vunpack.c.h.b16 %v551
    %v905 = vunpack.c.l.b16 %v552
    %v906 = vunpack.c.h.b16 %v552
    %v907 = vunpack.c.l.b16 %v553
    %v908 = vunpack.c.h.b16 %v553
    %v909 = vunpack.c.l.b16 %v554
    %v910 = vunpack.c.h.b16 %v554
    %v911 = vunpack.c.l.b16 %v555
    %v912 = vunpack.c.h.b16 %v555
    %v913 = vunpack.c.l.b16 %v556
    %v914 = vunpack.c.h.b16 %v556
    %v915 = vunpack.c.l.b16 %v557
    %v916 = vunpack.c.h.b16 %v557
    %v917 = vunpack.c.l.b16 %v558
    %v918 = vunpack.c.h.b16 %v558
    %v919 = vunpack.c.l.b16 %v559
    %v920 = vunpack.c.h.b16 %v559
    %v921 = vunpack.c.l.b16 %v560
    %v922 = vunpack.c.h.b16 %v560
    %v923 = vunpack.c.l.b16 %v561
    %v924 = vunpack.c.h.b16 %v561
    %v925 = vunpack.c.l.b16 %v562
    %v926 = vunpack.c.h.b16 %v562
    %v927 = vunpack.c.l.b16 %v563
    %v928 = vunpack.c.h.b16 %v563
    %v929 = vunpack.c.l.b16 %v564
    %v930 = vunpack.c.h.b16 %v564
    %v931 = vunpack.c.l.b16 %v565
    %v932 = vunpack.c.h.b16 %v565
    %v933 = vunpack.c.l.b16 %v566
    %v934 = vunpack.c.h.b16 %v566
    %v935 = vunpack.c.l.b16 %v567
    %v936 = vunpack.c.h.b16 %v567
    %v937 = vunpack.c.l.b16 %v568
    %v938 = vunpack.c.h.b16 %v568
    %v939 = vunpack.c.l.b16 %v569
    %v940 = vunpack.c.h.b16 %v569
    %v941 = vunpack.c.l.b16 %v570
    %v942 = vunpack.c.h.b16 %v570
    %v943 = vunpack.c.l.b16 %v571
    %v944 = vunpack.c.h.b16 %v571
    %v945 = vunpack.c.l.b16 %v572
    %v946 = vunpack.c.h.b16 %v572
    %v947 = vunpack.c.l.b16 %v573
    %v948 = vunpack.c.h.b16 %v573
    %v949 = vunpack.c.l.b16 %v574
    %v950 = vunpack.c.h.b16 %v574
    %v951 = vunpack.c.l.b16 %v575
    %v952 = vunpack.c.h.b16 %v575
    %v953 = vunpack.c.l.b16 %v576
    %v954 = vunpack.c.h.b16 %v576
    %v955 = vunpack.c.l.b16 %v577
    %v956 = vunpack.c.h.b16 %v577
    %v957 = vunpack.c.l.b16 %v578
    %v958 = vunpack.c.h.b16 %v578
    %v959 = vunpack.c.l.b16 %v579
    %v960 = vunpack.c.h.b16 %v579
    %v961 = vunpack.c.l.b16 %v580
    %v962 = vunpack.c.h.b16 %v580
    %v963 = vunpack.c.l.b16 %v581
    %v964 = vunpack.c.h.b16 %v581
    %v965 = vunpack.c.l.b16 %v582
    %v966 = vunpack.c.h.b16 %v582
    %v967 = vunpack.c.l.b16 %v583
    %v968 = vunpack.c.h.b16 %v583
    %v969 = vunpack.c.l.b16 %v584
    %v970 = vunpack.c.h.b16 %v584
    %v971 = vunpack.c.l.b16 %v585
    %v972 = vunpack.c.h.b16 %v585
    %v973 = vunpack.c.l.b16 %v586
    %v974 = vunpack.c.h.b16 %v586
    %v975 = vunpack.c.l.b16 %v587
    %v976 = vunpack.c.h.b16 %v587
    %v977 = vunpack.c.l.b16 %v588
    %v978 = vunpack.c.h.b16 %v588
    %v979 = vunpack.c.l.b16 %v589
    %v980 = vunpack.c.h.b16 %v589
    %v981 = vunpack.c.l.b16 %v590
    %v982 = vunpack.c.h.b16 %v590
    %v983 = vunpack.c.l.b16 %v591
    %v984 = vunpack.c.h.b16 %v591
    %v985 = vunpack.c.l.b16 %v592
    %v986 = vunpack.c.h.b16 %v592
    %v987 = vpack.c.b16 %v735, %v731
    %v988 = vpack.c.b16 %v736, %v732
    %v989 = vpack.c.b16 %v737, %v733
    %v990 = vpack.c.b16 %v738, %v734
    %v991 = vpack.c.b16 %v743, %v739
    %v992 = vpack.c.b16 %v744, %v740
    %v993 = vpack.c.b16 %v745, %v741
    %v994 = vpack.c.b16 %v746, %v742
    %v995 = vpack.c.b16 %v751, %v747
    %v996 = vpack.c.b16 %v752, %v748
    %v997 = vpack.c.b16 %v753, %v749
    %v998 = vpack.c.b16 %v754, %v750
    %v999 = vpack.c.b16 %v759, %v755
    %v1000 = vpack.c.b16 %v760, %v756
    %v1001 = vpack.c.b16 %v761, %v757
    %v1002 = vpack.c.b16 %v762, %v758
    %v1003 = vpack.c.b16 %v767, %v763
    %v1004 = vpack.c.b16 %v768, %v764
    %v1005 = vpack.c.b16 %v769, %v765
    %v1006 = vpack.c.b16 %v770, %v766
    %v1007 = vpack.c.b16 %v775, %v771
    %v1008 = vpack.c.b16 %v776, %v772
    %v1009 = vpack.c.b16 %v777, %v773
    %v1010 = vpack.c.b16 %v778, %v774
    %v1011 = vpack.c.b16 %v783, %v779
    %v1012 = vpack.c.b16 %v784, %v780
    %v1013 = vpack.c.b16 %v785, %v781
    %v1014 = vpack.c.b16 %v786, %v782
    %v1015 = vpack.c.b16 %v791, %v787
    %v1016 = vpack.c.b16 %v792, %v788
    %v1017 = vpack.c.b16 %v793, %v789
    %v1018 = vpack.c.b16 %v794, %v790
    %v1019 = vpack.c.b16 %v799, %v795
    %v1020 = vpack.c.b16 %v800, %v796
    %v1021 = vpack.c.b16 %v801, %v797
    %v1022 = vpack.c.b16 %v802, %v798
    %v1023 = vpack.c.b16 %v807, %v803
    %v1024 = vpack.c.b16 %v808, %v804
    %v1025 = vpack.c.b16 %v809, %v805
    %v1026 = vpack.c.b16 %v810, %v806
    %v1027 = vpack.c.b16 %v815, %v811
    %v1028 = vpack.c.b16 %v816, %v812
    %v1029 = vpack.c.b16 %v817, %v813
    %v1030 = vpack.c.b16 %v818, %v814
    %v1031 = vpack.c.b16 %v823, %v819
    %v1032 = vpack.c.b16 %v824, %v820
    %v1033 = vpack.c.b16 %v825, %v821
    %v1034 = vpack.c.b16 %v826, %v822
    %v1035 = vpack.c.b16 %v831, %v827
    %v1036 = vpack.c.b16 %v832, %v828
    %v1037 = vpack.c.b16 %v833, %v829
    %v1038 = vpack.c.b16 %v834, %v830
    %v1039 = vpack.c.b16 %v839, %v835
    %v1040 = vpack.c.b16 %v840, %v836
    %v1041 = vpack.c.b16 %v841, %v837
    %v1042 = vpack.c.b16 %v842, %v838
    %v1043 = vpack.c.b16 %v847, %v843
    %v1044 = vpack.c.b16 %v848, %v844
    %v1045 = vpack.c.b16 %v849, %v845
    %v1046 = vpack.c.b16 %v850, %v846
    %v1047 = vpack.c.b16 %v855, %v851
    %v1048 = vpack.c.b16 %v856, %v852
    %v1049 = vpack.c.b16 %v857, %v853
    %v1050 = vpack.c.b16 %v858, %v854
    %v1051 = vpack.c.b16 %v863, %v859
    %v1052 = vpack.c.b16 %v864, %v860
    %v1053 = vpack.c.b16 %v865, %v861
    %v1054 = vpack.c.b16 %v866, %v862
    %v1055 = vpack.c.b16 %v871, %v867
    %v1056 = vpack.c.b16 %v872, %v868
    %v1057 = vpack.c.b16 %v873, %v869
    %v1058 = vpack.c.b16 %v874, %v870
    %v1059 = vpack.c.b16 %v879, %v875
    %v1060 = vpack.c.b16 %v880, %v876
    %v1061 = vpack.c.b16 %v881, %v877
    %v1062 = vpack.c.b16 %v882, %v878
    %v1063 = vpack.c.b16 %v887, %v883
    %v1064 = vpack.c.b16 %v888, %v884
    %v1065 = vpack.c.b16 %v889, %v885
    %v1066 = vpack.c.b16 %v890, %v886
    %v1067 = vpack.c.b16 %v895, %v891
    %v1068 = vpack.c.b16 %v896, %v892
    %v1069 = vpack.c.b16 %v897, %v893
    %v1070 = vpack.c.b16 %v898, %v894
    %v1071 = vpack.c.b16 %v903, %v899
    %v1072 = vpack.c.b16 %v904, %v900
    %v1073 = vpack.c.b16 %v905, %v901
    %v1074 = vpack.c.b16 %v906, %v902
    %v1075 = vpack.c.b16 %v911, %v907
    %v1076 = vpack.c.b16 %v912, %v908
    %v1077 = vpack.c.b16 %v913, %v909
    %v1078 = vpack.c.b16 %v914, %v910
    %v1079 = vpack.c.b16 %v919, %v915
    %v1080 = vpack.c.b16 %v920, %v916
    %v1081 = vpack.c.b16 %v921, %v917
    %v1082 = vpack.c.b16 %v922, %v918
    %v1083 = vpack.c.b16 %v927, %v923
    %v1084 = vpack.c.b16 %v928, %v924
    %v1085 = vpack.c.b16 %v929, %v925
    %v1086 = vpack.c.b16 %v930, %v926
    %v1087 = vpack.c.b16 %v935, %v931
    %v1088 = vpack.c.b16 %v936, %v932
    %v1089 = vpack.c.b16 %v937, %v933
    %v1090 = vpack.c.b16 %v938, %v934
    %v1091 = vpack.c.b16 %v943, %v939
    %v1092 = vpack.c.b16 %v944, %v940
    %v1093 = vpack.c.b16 %v945, %v941
    %v1094 = vpack.c.b16 %v946, %v942
    %v1095 = vpack.c.b16 %v951, %v947
    %v1096 = vpack.c.b16 %v952, %v948
    %v1097 = vpack.c.b16 %v953, %v949
    %v1098 = vpack.c.b16 %v954, %v950
    %v1099 = vpack.c.b16 %v959, %v955
    %v1100 = vpack.c.b16 %v960, %v956
    %v1101 = vpack.c.b16 %v961, %v957
    %v1102 = vpack.c.b16 %v962, %v958
    %v1103 = vpack.c.b16 %v967, %v963
    %v1104 = vpack.c.b16 %v968, %v964
    %v1105 = vpack.c.b16 %v969, %v965
    %v1106 = vpack.c.b16 %v970, %v966
    %v1107 = vpack.c.b16 %v975, %v971
    %v1108 = vpack.c.b16 %v976, %v972
    %v1109 = vpack.c.b16 %v977, %v973
    %v1110 = vpack.c.b16 %v978, %v974
    %v1111 = vpack.c.b16 %v983, %v979
    %v1112 = vpack.c.b16 %v984, %v980
    %v1113 = vpack.c.b16 %v985, %v981
    %v1114 = vpack.c.b16 %v986, %v982
    %1243 = vmatpush.bf16.msra.mxu0 %v1015
    %1244 = vmatpush.bf16.msra.mxu0 %v1011
    %1245 = vmatpush.bf16.msra.mxu0 %v1007
    %1246 = vmatpush.bf16.msra.mxu0 %v1003
    %1247 = vmatpush.bf16.msra.mxu0 %v999
    %1248 = vmatpush.bf16.msra.mxu0 %v995
    %1249 = vmatpush.bf16.msra.mxu0 %v991
    %1250 = vmatpush.bf16.msra.mxu0 %v987
    %1251 = vmatmul.bf16.gmra.mxu0 %v461
    %v1252 = vpop.f32.mrf.mxu0
    %v1253 = vadd.f32 %v595, %v1252
    %v1254 = vpop.f32.mrf.mxu0
    %v1255 = vadd.f32 %v595, %v1254
    %1256 = vdwg.mxu0
    %1257 = vmatpush.bf16.msra.mxu0 %v1047
    %1258 = vmatpush.bf16.msra.mxu0 %v1043
    %1259 = vmatpush.bf16.msra.mxu0 %v1039
    %1260 = vmatpush.bf16.msra.mxu0 %v1035
    %1261 = vmatpush.bf16.msra.mxu0 %v1031
    %1262 = vmatpush.bf16.msra.mxu0 %v1027
    %1263 = vmatpush.bf16.msra.mxu0 %v1023
    %1264 = vmatpush.bf16.msra.mxu0 %v1019
    %1265 = vmatmul.bf16.gmra.mxu0 %v462
    %v1266 = vpop.f32.mrf.mxu0
    %v1267 = vadd.f32 %v1253, %v1266
    %v1268 = vpop.f32.mrf.mxu0
    %v1269 = vadd.f32 %v1255, %v1268
    %1270 = vdwg.mxu0
    %1271 = vmatpush.bf16.msra.mxu0 %v1079
    %1272 = vmatpush.bf16.msra.mxu0 %v1075
    %1273 = vmatpush.bf16.msra.mxu0 %v1071
    %1274 = vmatpush.bf16.msra.mxu0 %v1067
    %1275 = vmatpush.bf16.msra.mxu0 %v1063
    %1276 = vmatpush.bf16.msra.mxu0 %v1059
    %1277 = vmatpush.bf16.msra.mxu0 %v1055
    %1278 = vmatpush.bf16.msra.mxu0 %v1051
    %1279 = vmatmul.bf16.gmra.mxu0 %v463
    %v1280 = vpop.f32.mrf.mxu0
    %v1281 = vadd.f32 %v1267, %v1280
    %v1282 = vpop.f32.mrf.mxu0
    %v1283 = vadd.f32 %v1269, %v1282
    %1284 = vdwg.mxu0
    %1285 = vmatpush.bf16.msra.mxu0 %v1111
    %1286 = vmatpush.bf16.msra.mxu0 %v1107
    %1287 = vmatpush.bf16.msra.mxu0 %v1103
    %1288 = vmatpush.bf16.msra.mxu0 %v1099
    %1289 = vmatpush.bf16.msra.mxu0 %v1095
    %1290 = vmatpush.bf16.msra.mxu0 %v1091
    %1291 = vmatpush.bf16.msra.mxu0 %v1087
    %1292 = vmatpush.bf16.msra.mxu0 %v1083
    %1293 = vmatmul.bf16.gmra.mxu0 %v464
    %v1294 = vpop.f32.mrf.mxu0
    %v1295 = vadd.f32 %v1281, %v1294
    %v1296 = vpop.f32.mrf.mxu0
    %v1297 = vadd.f32 %v1283, %v1296
    %1298 = vdwg.mxu0
    %1299 = vmatpush.bf16.msra.mxu0 %v1016
    %1300 = vmatpush.bf16.msra.mxu0 %v1012
    %1301 = vmatpush.bf16.msra.mxu0 %v1008
    %1302 = vmatpush.bf16.msra.mxu0 %v1004
    %1303 = vmatpush.bf16.msra.mxu0 %v1000
    %1304 = vmatpush.bf16.msra.mxu0 %v996
    %1305 = vmatpush.bf16.msra.mxu0 %v992
    %1306 = vmatpush.bf16.msra.mxu0 %v988
    %1307 = vmatmul.bf16.gmra.mxu0 %v461
    %v1308 = vpop.f32.mrf.mxu0
    %v1309 = vadd.f32 %v596, %v1308
    %v1310 = vpop.f32.mrf.mxu0
    %v1311 = vadd.f32 %v596, %v1310
    %1312 = vdwg.mxu0
    %1313 = vmatpush.bf16.msra.mxu0 %v1048
    %1314 = vmatpush.bf16.msra.mxu0 %v1044
    %1315 = vmatpush.bf16.msra.mxu0 %v1040
    %1316 = vmatpush.bf16.msra.mxu0 %v1036
    %1317 = vmatpush.bf16.msra.mxu0 %v1032
    %1318 = vmatpush.bf16.msra.mxu0 %v1028
    %1319 = vmatpush.bf16.msra.mxu0 %v1024
    %1320 = vmatpush.bf16.msra.mxu0 %v1020
    %1321 = vmatmul.bf16.gmra.mxu0 %v462
    %v1322 = vpop.f32.mrf.mxu0
    %v1323 = vadd.f32 %v1309, %v1322
    %v1324 = vpop.f32.mrf.mxu0
    %v1325 = vadd.f32 %v1311, %v1324
    %1326 = vdwg.mxu0
    %1327 = vmatpush.bf16.msra.mxu0 %v1080
    %1328 = vmatpush.bf16.msra.mxu0 %v1076
    %1329 = vmatpush.bf16.msra.mxu0 %v1072
    %1330 = vmatpush.bf16.msra.mxu0 %v1068
    %1331 = vmatpush.bf16.msra.mxu0 %v1064
    %1332 = vmatpush.bf16.msra.mxu0 %v1060
    %1333 = vmatpush.bf16.msra.mxu0 %v1056
    %1334 = vmatpush.bf16.msra.mxu0 %v1052
    %1335 = vmatmul.bf16.gmra.mxu0 %v463
    %v1336 = vpop.f32.mrf.mxu0
    %v1337 = vadd.f32 %v1323, %v1336
    %v1338 = vpop.f32.mrf.mxu0
    %v1339 = vadd.f32 %v1325, %v1338
    %1340 = vdwg.mxu0
    %1341 = vmatpush.bf16.msra.mxu0 %v1112
    %1342 = vmatpush.bf16.msra.mxu0 %v1108
    %1343 = vmatpush.bf16.msra.mxu0 %v1104
    %1344 = vmatpush.bf16.msra.mxu0 %v1100
    %1345 = vmatpush.bf16.msra.mxu0 %v1096
    %1346 = vmatpush.bf16.msra.mxu0 %v1092
    %1347 = vmatpush.bf16.msra.mxu0 %v1088
    %1348 = vmatpush.bf16.msra.mxu0 %v1084
    %1349 = vmatmul.bf16.gmra.mxu0 %v464
    %v1350 = vpop.f32.mrf.mxu0
    %v1351 = vadd.f32 %v1337, %v1350
    %v1352 = vpop.f32.mrf.mxu0
    %v1353 = vadd.f32 %v1339, %v1352
    %1354 = vdwg.mxu0
    %1355 = vmatpush.bf16.msra.mxu0 %v1017
    %1356 = vmatpush.bf16.msra.mxu0 %v1013
    %1357 = vmatpush.bf16.msra.mxu0 %v1009
    %1358 = vmatpush.bf16.msra.mxu0 %v1005
    %1359 = vmatpush.bf16.msra.mxu0 %v1001
    %1360 = vmatpush.bf16.msra.mxu0 %v997
    %1361 = vmatpush.bf16.msra.mxu0 %v993
    %1362 = vmatpush.bf16.msra.mxu0 %v989
    %1363 = vmatmul.bf16.gmra.mxu0 %v461
    %v1364 = vpop.f32.mrf.mxu0
    %v1365 = vadd.f32 %v597, %v1364
    %v1366 = vpop.f32.mrf.mxu0
    %v1367 = vadd.f32 %v597, %v1366
    %1368 = vdwg.mxu0
    %1369 = vmatpush.bf16.msra.mxu0 %v1049
    %1370 = vmatpush.bf16.msra.mxu0 %v1045
    %1371 = vmatpush.bf16.msra.mxu0 %v1041
    %1372 = vmatpush.bf16.msra.mxu0 %v1037
    %1373 = vmatpush.bf16.msra.mxu0 %v1033
    %1374 = vmatpush.bf16.msra.mxu0 %v1029
    %1375 = vmatpush.bf16.msra.mxu0 %v1025
    %1376 = vmatpush.bf16.msra.mxu0 %v1021
    %1377 = vmatmul.bf16.gmra.mxu0 %v462
    %v1378 = vpop.f32.mrf.mxu0
    %v1379 = vadd.f32 %v1365, %v1378
    %v1380 = vpop.f32.mrf.mxu0
    %v1381 = vadd.f32 %v1367, %v1380
    %1382 = vdwg.mxu0
    %1383 = vmatpush.bf16.msra.mxu0 %v1081
    %1384 = vmatpush.bf16.msra.mxu0 %v1077
    %1385 = vmatpush.bf16.msra.mxu0 %v1073
    %1386 = vmatpush.bf16.msra.mxu0 %v1069
    %1387 = vmatpush.bf16.msra.mxu0 %v1065
    %1388 = vmatpush.bf16.msra.mxu0 %v1061
    %1389 = vmatpush.bf16.msra.mxu0 %v1057
    %1390 = vmatpush.bf16.msra.mxu0 %v1053
    %1391 = vmatmul.bf16.gmra.mxu0 %v463
    %v1392 = vpop.f32.mrf.mxu0
    %v1393 = vadd.f32 %v1379, %v1392
    %v1394 = vpop.f32.mrf.mxu0
    %v1395 = vadd.f32 %v1381, %v1394
    %1396 = vdwg.mxu0
    %1397 = vmatpush.bf16.msra.mxu0 %v1113
    %1398 = vmatpush.bf16.msra.mxu0 %v1109
    %1399 = vmatpush.bf16.msra.mxu0 %v1105
    %1400 = vmatpush.bf16.msra.mxu0 %v1101
    %1401 = vmatpush.bf16.msra.mxu0 %v1097
    %1402 = vmatpush.bf16.msra.mxu0 %v1093
    %1403 = vmatpush.bf16.msra.mxu0 %v1089
    %1404 = vmatpush.bf16.msra.mxu0 %v1085
    %1405 = vmatmul.bf16.gmra.mxu0 %v464
    %v1406 = vpop.f32.mrf.mxu0
    %v1407 = vadd.f32 %v1393, %v1406
    %v1408 = vpop.f32.mrf.mxu0
    %v1409 = vadd.f32 %v1395, %v1408
    %1410 = vdwg.mxu0
    %1411 = vmatpush.bf16.msra.mxu0 %v1018
    %1412 = vmatpush.bf16.msra.mxu0 %v1014
    %1413 = vmatpush.bf16.msra.mxu0 %v1010
    %1414 = vmatpush.bf16.msra.mxu0 %v1006
    %1415 = vmatpush.bf16.msra.mxu0 %v1002
    %1416 = vmatpush.bf16.msra.mxu0 %v998
    %1417 = vmatpush.bf16.msra.mxu0 %v994
    %1418 = vmatpush.bf16.msra.mxu0 %v990
    %1419 = vmatmul.bf16.gmra.mxu0 %v461
    %v1420 = vpop.f32.mrf.mxu0
    %v1421 = vadd.f32 %v598, %v1420
    %v1422 = vpop.f32.mrf.mxu0
    %v1423 = vadd.f32 %v598, %v1422
    %1424 = vdwg.mxu0
    %1425 = vmatpush.bf16.msra.mxu0 %v1050
    %1426 = vmatpush.bf16.msra.mxu0 %v1046
    %1427 = vmatpush.bf16.msra.mxu0 %v1042
    %1428 = vmatpush.bf16.msra.mxu0 %v1038
    %1429 = vmatpush.bf16.msra.mxu0 %v1034
    %1430 = vmatpush.bf16.msra.mxu0 %v1030
    %1431 = vmatpush.bf16.msra.mxu0 %v1026
    %1432 = vmatpush.bf16.msra.mxu0 %v1022
    %1433 = vmatmul.bf16.gmra.mxu0 %v462
    %v1434 = vpop.f32.mrf.mxu0
    %v1435 = vadd.f32 %v1421, %v1434
    %v1436 = vpop.f32.mrf.mxu0
    %v1437 = vadd.f32 %v1423, %v1436
    %1438 = vdwg.mxu0
    %1439 = vmatpush.bf16.msra.mxu0 %v1082
    %1440 = vmatpush.bf16.msra.mxu0 %v1078
    %1441 = vmatpush.bf16.msra.mxu0 %v1074
    %1442 = vmatpush.bf16.msra.mxu0 %v1070
    %1443 = vmatpush.bf16.msra.mxu0 %v1066
    %1444 = vmatpush.bf16.msra.mxu0 %v1062
    %1445 = vmatpush.bf16.msra.mxu0 %v1058
    %1446 = vmatpush.bf16.msra.mxu0 %v1054
    %1447 = vmatmul.bf16.gmra.mxu0 %v463
    %v1448 = vpop.f32.mrf.mxu0
    %v1449 = vadd.f32 %v1435, %v1448
    %v1450 = vpop.f32.mrf.mxu0
    %v1451 = vadd.f32 %v1437, %v1450
    %1452 = vdwg.mxu0
    %1453 = vmatpush.bf16.msra.mxu0 %v1114
    %1454 = vmatpush.bf16.msra.mxu0 %v1110
    %1455 = vmatpush.bf16.msra.mxu0 %v1106
    %1456 = vmatpush.bf16.msra.mxu0 %v1102
    %1457 = vmatpush.bf16.msra.mxu0 %v1098
    %1458 = vmatpush.bf16.msra.mxu0 %v1094
    %1459 = vmatpush.bf16.msra.mxu0 %v1090
    %1460 = vmatpush.bf16.msra.mxu0 %v1086
    %1461 = vmatmul.bf16.gmra.mxu0 %v464
    %v1462 = vpop.f32.mrf.mxu0
    %v1463 = vadd.f32 %v1449, %v1462
    %v1464 = vpop.f32.mrf.mxu0
    %v1465 = vadd.f32 %v1451, %v1464
    %1466 = vdwg.mxu0
    %v1467 = vmax.f32 %v1295, 0.0
    %v1468 = vmax.f32 %v1351, 0.0
    %v1469 = vmax.f32 %v1407, 0.0
    %v1470 = vmax.f32 %v1463, 0.0
    %v1471 = vmax.f32 %v1297, 0.0
    %v1472 = vmax.f32 %v1353, 0.0
    %v1473 = vmax.f32 %v1409, 0.0
    %v1474 = vmax.f32 %v1465, 0.0
    %v1475 = vpack.c.bf16 %v1468, %v1467
    %v1476 = vpack.c.bf16 %v1470, %v1469
    %v1477 = vpack.c.bf16 %v1472, %v1471
    %v1478 = vpack.c.bf16 %v1474, %v1473
    %v1481 = vunpack.c.l.b16 %v1475
    %v1482 = vunpack.c.h.b16 %v1475
    %v1483 = vunpack.c.l.b16 %v1476
    %v1484 = vunpack.c.h.b16 %v1476
    %v1485 = vpack.c.b16 %v1481, %v1481
    %v1486 = vpack.c.b16 %v1482, %v1482
    %v1487 = vpack.c.b16 %v1483, %v1483
    %v1488 = vpack.c.b16 %v1484, %v1484
    %1493 = vmatpush.bf16.xpose.msra.mxu0 0
    %1494 = vmatpush.bf16.xpose.msra.mxu0 0
    %1495 = vmatpush.bf16.xpose.msra.mxu0 0
    %1496 = vmatpush.bf16.xpose.msra.mxu0 0
    %1497 = vmatpush.bf16.xpose.msra.mxu0 0
    %1498 = vmatpush.bf16.xpose.msra.mxu0 0
    %1499 = vmatpush.bf16.xpose.msra.mxu0 0
    %1500 = vmatpush.bf16.xpose.msra.mxu0 %v1485
    %1501 = vmatmul.bf16.gmra.mxu0 %v1485
    %v1502 = vpop.f32.mrf.mxu0
    %v1503 = vadd.f32 0.0, %v1502
    %v1504 = vpop.f32.mrf.mxu0
    %1505 = vdwg.mxu0
    %1506 = vmatpush.bf16.xpose.msra.mxu0 0
    %1507 = vmatpush.bf16.xpose.msra.mxu0 0
    %1508 = vmatpush.bf16.xpose.msra.mxu0 0
    %1509 = vmatpush.bf16.xpose.msra.mxu0 0
    %1510 = vmatpush.bf16.xpose.msra.mxu0 0
    %1511 = vmatpush.bf16.xpose.msra.mxu0 0
    %1512 = vmatpush.bf16.xpose.msra.mxu0 0
    %1513 = vmatpush.bf16.xpose.msra.mxu0 %v1486
    %1514 = vmatmul.bf16.gmra.mxu0 %v1486
    %v1515 = vpop.f32.mrf.mxu0
    %v1516 = vadd.f32 %v1503, %v1515
    %v1517 = vpop.f32.mrf.mxu0
    %1518 = vdwg.mxu0
    %1519 = vmatpush.bf16.xpose.msra.mxu0 0
    %1520 = vmatpush.bf16.xpose.msra.mxu0 0
    %1521 = vmatpush.bf16.xpose.msra.mxu0 0
    %1522 = vmatpush.bf16.xpose.msra.mxu0 0
    %1523 = vmatpush.bf16.xpose.msra.mxu0 0
    %1524 = vmatpush.bf16.xpose.msra.mxu0 0
    %1525 = vmatpush.bf16.xpose.msra.mxu0 0
    %1526 = vmatpush.bf16.xpose.msra.mxu0 %v1487
    %1527 = vmatmul.bf16.gmra.mxu0 %v1487
    %v1528 = vpop.f32.mrf.mxu0
    %v1529 = vadd.f32 %v1516, %v1528
    %v1530 = vpop.f32.mrf.mxu0
    %1531 = vdwg.mxu0
    %1532 = vmatpush.bf16.xpose.msra.mxu0 0
    %1533 = vmatpush.bf16.xpose.msra.mxu0 0
    %1534 = vmatpush.bf16.xpose.msra.mxu0 0
    %1535 = vmatpush.bf16.xpose.msra.mxu0 0
    %1536 = vmatpush.bf16.xpose.msra.mxu0 0
    %1537 = vmatpush.bf16.xpose.msra.mxu0 0
    %1538 = vmatpush.bf16.xpose.msra.mxu0 0
    %1539 = vmatpush.bf16.xpose.msra.mxu0 %v1488
    %1540 = vmatmul.bf16.gmra.mxu0 %v1488
    %v1541 = vpop.f32.mrf.mxu0
    %v1542 = vadd.f32 %v1529, %v1541
    %v1543 = vpop.f32.mrf.mxu0
    %1544 = vdwg.mxu0
    %v1547 = vunpack.c.l.b16 %v1477
    %v1548 = vunpack.c.h.b16 %v1477
    %v1549 = vunpack.c.l.b16 %v1478
    %v1550 = vunpack.c.h.b16 %v1478
    %v1551 = vpack.c.b16 %v1547, %v1547
    %v1552 = vpack.c.b16 %v1548, %v1548
    %v1553 = vpack.c.b16 %v1549, %v1549
    %v1554 = vpack.c.b16 %v1550, %v1550
    %1559 = vmatpush.bf16.xpose.msra.mxu0 0
    %1560 = vmatpush.bf16.xpose.msra.mxu0 0
    %1561 = vmatpush.bf16.xpose.msra.mxu0 0
    %1562 = vmatpush.bf16.xpose.msra.mxu0 0
    %1563 = vmatpush.bf16.xpose.msra.mxu0 0
    %1564 = vmatpush.bf16.xpose.msra.mxu0 0
    %1565 = vmatpush.bf16.xpose.msra.mxu0 0
    %1566 = vmatpush.bf16.xpose.msra.mxu0 %v1551
    %1567 = vmatmul.bf16.gmra.mxu0 %v1551
    %v1568 = vpop.f32.mrf.mxu0
    %v1569 = vadd.f32 0.0, %v1568
    %v1570 = vpop.f32.mrf.mxu0
    %1571 = vdwg.mxu0
    %1572 = vmatpush.bf16.xpose.msra.mxu0 0
    %1573 = vmatpush.bf16.xpose.msra.mxu0 0
    %1574 = vmatpush.bf16.xpose.msra.mxu0 0
    %1575 = vmatpush.bf16.xpose.msra.mxu0 0
    %1576 = vmatpush.bf16.xpose.msra.mxu0 0
    %1577 = vmatpush.bf16.xpose.msra.mxu0 0
    %1578 = vmatpush.bf16.xpose.msra.mxu0 0
    %1579 = vmatpush.bf16.xpose.msra.mxu0 %v1552
    %1580 = vmatmul.bf16.gmra.mxu0 %v1552
    %v1581 = vpop.f32.mrf.mxu0
    %v1582 = vadd.f32 %v1569, %v1581
    %v1583 = vpop.f32.mrf.mxu0
    %1584 = vdwg.mxu0
    %1585 = vmatpush.bf16.xpose.msra.mxu0 0
    %1586 = vmatpush.bf16.xpose.msra.mxu0 0
    %1587 = vmatpush.bf16.xpose.msra.mxu0 0
    %1588 = vmatpush.bf16.xpose.msra.mxu0 0
    %1589 = vmatpush.bf16.xpose.msra.mxu0 0
    %1590 = vmatpush.bf16.xpose.msra.mxu0 0
    %1591 = vmatpush.bf16.xpose.msra.mxu0 0
    %1592 = vmatpush.bf16.xpose.msra.mxu0 %v1553
    %1593 = vmatmul.bf16.gmra.mxu0 %v1553
    %v1594 = vpop.f32.mrf.mxu0
    %v1595 = vadd.f32 %v1582, %v1594
    %v1596 = vpop.f32.mrf.mxu0
    %1597 = vdwg.mxu0
    %1598 = vmatpush.bf16.xpose.msra.mxu0 0
    %1599 = vmatpush.bf16.xpose.msra.mxu0 0
    %1600 = vmatpush.bf16.xpose.msra.mxu0 0
    %1601 = vmatpush.bf16.xpose.msra.mxu0 0
    %1602 = vmatpush.bf16.xpose.msra.mxu0 0
    %1603 = vmatpush.bf16.xpose.msra.mxu0 0
    %1604 = vmatpush.bf16.xpose.msra.mxu0 0
    %1605 = vmatpush.bf16.xpose.msra.mxu0 %v1554
    %1606 = vmatmul.bf16.gmra.mxu0 %v1554
    %v1607 = vpop.f32.mrf.mxu0
    %v1608 = vadd.f32 %v1595, %v1607
    %v1609 = vpop.f32.mrf.mxu0
    %1610 = vdwg.mxu0
    %vm1611 = vcmask 64512
    %1612 = vst.msk [vmem:[%s10] sm:$0xff] %vm1611, %v1542
    %1613 = vst.msk [vmem:[%s10 + $0x8] sm:$0xff] %vm1611, %v1608
    // Predicated region
    $region54: #{forward.3} parent=1 // pred_check
      _
    $region55: #{forward.3} parent=1 // pred_check_branch
      %1615 = sbr.rel (0) target = $region57
    $region56: #{forward.3} parent=1 // pred_region
      _
    $region57: #{forward.3} parent=1 // pred_fallthru
      _
    // Predicated region
    $region58: #{forward.3} parent=1 // pred_check
      _
    $region59: #{forward.3} parent=1 // pred_check_branch
      %1617 = sbr.rel (0) target = $region61
    $region60: #{forward.3} parent=1 // pred_region
      _
    $region61: #{forward.3} parent=1 // pred_fallthru
      _
    // Predicated region
    $region62: #{forward.3} parent=1 // pred_check
      _
    $region63: #{forward.3} parent=1 // pred_check_branch
      %1619 = sbr.rel (0) target = $region65
    $region64: #{forward.3} parent=1 // pred_region
      _
    $region65: #{forward.3} parent=1 // pred_fallthru
      _
    // Predicated region
    $region66: #{forward.3} parent=1 // pred_check
      _
    $region67: #{forward.3} parent=1 // pred_check_branch
      %1621 = sbr.rel (0) target = $region69
    $region68: #{forward.3} parent=1 // pred_region
      _
    $region69: #{forward.3} parent=1 // pred_fallthru
      _
    %1622 = vsyncpa [#allocation3], 1
    %1623 = vsyncpa [#allocation5], 1
    %1624 = vsyncpa [#allocation8], 1

// kernel: forward.4
$region0: #{forward.4}
  #allocation0 [shape = 'u32[]', space=smem, size = 0x4, offset = 0x4, fixed_abs, tag = 'smem constant byte address 0x4 - core index']
  #allocation1 [shape = 'u32[72,128]{1,0:T(1,128)}', space=vmem, size = 0x9000, scoped, tag = 'internal scratch']
  %s0 = inlined_call_operand.vmem [shape: f32[2,8,64], index: 0, kind: input, shape index: {}]
  %s1 = inlined_call_operand.vmem [shape: f32[2,8,8], index: 1, kind: input, shape index: {}]
  %s2 = inlined_call_operand.vmem [shape: f32[2,8,8], index: 2, kind: input, shape index: {}]
  %s3 = inlined_call_operand.vmem [shape: f32[2,8,8], index: 3, kind: input, shape index: {}]
  %s4 = inlined_call_operand.vmem [shape: bf16[64,64], index: 4, kind: input, shape index: {}]
  %s5 = inlined_call_operand.vmem [shape: f32[4,8], index: 5, kind: input, shape index: {}]
  %s6 = inlined_call_operand.vmem [shape: f32[2,8,64], index: 6, kind: output, shape index: {}]
  %s7 = sld [smem:[#allocation0]]
  $region57: #{forward.4} parent=0
    _
  %s9 = ssub.s32 1, %s7
  %s10 = scalar_select 0, %s9, %s7
  loop: start=0, step=1, limit=4
  $region2: #{forward.4} parent=0 // loop_pre_header
    _
  $region3: #{forward.4} parent=0 // loop_header
    %s12 = sphi 0, %s16
    %p13 = scmp.ge.s32.totalorder %s12, 4
    %s22 = sphi 0, %s24
    %s25 = sphi 0, %s22
    %s26 = sphi 0, %s25
    %s42 = sphi 0, %s26
    %s48 = sphi 0, %s50
    %s51 = sphi 0, %s48
    %s52 = sphi 0, %s51
    %s68 = sphi 0, %s52
    %s74 = sphi 0, %s76
    %s77 = sphi 0, %s74
    %s78 = sphi 0, %s77
    %s94 = sphi 0, %s78
    %s100 = sphi 0, %s102
    %s103 = sphi 0, %s100
    %s104 = sphi 0, %s103
    %s120 = sphi 0, %s104
    %s124 = sphi 0, %s124
    %s126 = sphi 0, %s124
    %s127 = sphi 0, %s126
    %s141 = sphi 0, %s127
    %s145 = sphi 0, %s145
    %s147 = sphi 0, %s145
    %s148 = sphi 0, %s147
    %s162 = sphi 0, %s148
    %s168 = sphi 0, %s170
    %s171 = sphi 0, %s168
    %s172 = sphi 0, %s171
    %s188 = sphi 0, %s172
  $region4: #{forward.4} parent=0 // loop_header_branch
    %15 = sbr.rel (%p13) target = $region8
  $region5: #{forward.4} parent=0 // loop_body
    %s17 = ssub.s32 %s12, 1
    %s18 = ssub.s32 %s12, 2
    %s19 = sadd.s32 %s12, 1
    %s20 = ssub.s32 %s12, %s19
    %p21 = scmp.eq.s32.totalorder %s20, 0
    %s23 = sadd.s32 %s22, 1
    %s24 = scalar_select %p21, %s22, %s23
    %p27 = pneg %p21
    %p28 = scmp.eq.s32.totalorder %s12, 1
    %p29 = por %p27, %p28
    %p30 = scmp.ne.s32.totalorder %s22, %s25
    %p31 = scmp.eq.s32.totalorder %s12, 0
    %p32 = por %p30, %p31
    %p33 = scmp.ne.s32.totalorder %s22, %s25
    %p34 = scmp.eq.s32.totalorder %s17, 1
    %p35 = por %p33, %p34
    %p36 = scmp.ne.s32.totalorder %s25, %s26
    %p37 = scmp.eq.s32.totalorder %s17, 0
    %p38 = por %p36, %p37
    %p39 = scmp.ne.s32.totalorder %s25, %s26
    %p40 = scmp.eq.s32.totalorder %s18, 1
    %p41 = por %p39, %p40
    %p43 = scmp.ne.s32.totalorder %s26, %s42
    %p44 = scmp.eq.s32.totalorder %s18, 0
    %p45 = por %p43, %p44
    %s46 = ssub.s32 %s12, %s19
    %p47 = scmp.eq.s32.totalorder %s46, 0
    %s49 = sadd.s32 %s48, 1
    %s50 = scalar_select %p47, %s48, %s49
    %p53 = pneg %p47
    %p54 = scmp.eq.s32.totalorder %s12, 1
    %p55 = por %p53, %p54
    %p56 = scmp.ne.s32.totalorder %s48, %s51
    %p57 = scmp.eq.s32.totalorder %s12, 0
    %p58 = por %p56, %p57
    %p59 = scmp.ne.s32.totalorder %s48, %s51
    %p60 = scmp.eq.s32.totalorder %s17, 1
    %p61 = por %p59, %p60
    %p62 = scmp.ne.s32.totalorder %s51, %s52
    %p63 = scmp.eq.s32.totalorder %s17, 0
    %p64 = por %p62, %p63
    %p65 = scmp.ne.s32.totalorder %s51, %s52
    %p66 = scmp.eq.s32.totalorder %s18, 1
    %p67 = por %p65, %p66
    %p69 = scmp.ne.s32.totalorder %s52, %s68
    %p70 = scmp.eq.s32.totalorder %s18, 0
    %p71 = por %p69, %p70
    %s72 = ssub.s32 %s12, %s19
    %p73 = scmp.eq.s32.totalorder %s72, 0
    %s75 = sadd.s32 %s74, 1
    %s76 = scalar_select %p73, %s74, %s75
    %p79 = pneg %p73
    %p80 = scmp.eq.s32.totalorder %s12, 1
    %p81 = por %p79, %p80
    %p82 = scmp.ne.s32.totalorder %s74, %s77
    %p83 = scmp.eq.s32.totalorder %s12, 0
    %p84 = por %p82, %p83
    %p85 = scmp.ne.s32.totalorder %s74, %s77
    %p86 = scmp.eq.s32.totalorder %s17, 1
    %p87 = por %p85, %p86
    %p88 = scmp.ne.s32.totalorder %s77, %s78
    %p89 = scmp.eq.s32.totalorder %s17, 0
    %p90 = por %p88, %p89
    %p91 = scmp.ne.s32.totalorder %s77, %s78
    %p92 = scmp.eq.s32.totalorder %s18, 1
    %p93 = por %p91, %p92
    %p95 = scmp.ne.s32.totalorder %s78, %s94
    %p96 = scmp.eq.s32.totalorder %s18, 0
    %p97 = por %p95, %p96
    %s98 = ssub.s32 %s12, %s19
    %p99 = scmp.eq.s32.totalorder %s98, 0
    %s101 = sadd.s32 %s100, 1
    %s102 = scalar_select %p99, %s100, %s101
    %p105 = pneg %p99
    %p106 = scmp.eq.s32.totalorder %s12, 1
    %p107 = por %p105, %p106
    %p108 = scmp.ne.s32.totalorder %s100, %s103
    %p109 = scmp.eq.s32.totalorder %s12, 0
    %p110 = por %p108, %p109
    %p111 = scmp.ne.s32.totalorder %s100, %s103
    %p112 = scmp.eq.s32.totalorder %s17, 1
    %p113 = por %p111, %p112
    %p114 = scmp.ne.s32.totalorder %s103, %s104
    %p115 = scmp.eq.s32.totalorder %s17, 0
    %p116 = por %p114, %p115
    %p117 = scmp.ne.s32.totalorder %s103, %s104
    %p118 = scmp.eq.s32.totalorder %s18, 1
    %p119 = por %p117, %p118
    %p121 = scmp.ne.s32.totalorder %s104, %s120
    %p122 = scmp.eq.s32.totalorder %s18, 0
    %p123 = por %p121, %p122
    %s125 = sadd.s32 %s124, 1
    %p128 = scmp.eq.s32.totalorder %s12, 1
    %p129 = scmp.ne.s32.totalorder %s124, %s126
    %p130 = scmp.eq.s32.totalorder %s12, 0
    %p131 = por %p129, %p130
    %p132 = scmp.ne.s32.totalorder %s124, %s126
    %p133 = scmp.eq.s32.totalorder %s17, 1
    %p134 = por %p132, %p133
    %p135 = scmp.ne.s32.totalorder %s126, %s127
    %p136 = scmp.eq.s32.totalorder %s17, 0
    %p137 = por %p135, %p136
    %p138 = scmp.ne.s32.totalorder %s126, %s127
    %p139 = scmp.eq.s32.totalorder %s18, 1
    %p140 = por %p138, %p139
    %p142 = scmp.ne.s32.totalorder %s127, %s141
    %p143 = scmp.eq.s32.totalorder %s18, 0
    %p144 = por %p142, %p143
    %s146 = sadd.s32 %s145, 1
    %p149 = scmp.eq.s32.totalorder %s12, 1
    %p150 = scmp.ne.s32.totalorder %s145, %s147
    %p151 = scmp.eq.s32.totalorder %s12, 0
    %p152 = por %p150, %p151
    %p153 = scmp.ne.s32.totalorder %s145, %s147
    %p154 = scmp.eq.s32.totalorder %s17, 1
    %p155 = por %p153, %p154
    %p156 = scmp.ne.s32.totalorder %s147, %s148
    %p157 = scmp.eq.s32.totalorder %s17, 0
    %p158 = por %p156, %p157
    %p159 = scmp.ne.s32.totalorder %s147, %s148
    %p160 = scmp.eq.s32.totalorder %s18, 1
    %p161 = por %p159, %p160
    %p163 = scmp.ne.s32.totalorder %s148, %s162
    %p164 = scmp.eq.s32.totalorder %s18, 0
    %p165 = por %p163, %p164
    %s166 = ssub.s32 %s12, %s19
    %p167 = scmp.eq.s32.totalorder %s166, 0
    %s169 = sadd.s32 %s168, 1
    %s170 = scalar_select %p167, %s168, %s169
    %p173 = pneg %p167
    %p174 = scmp.eq.s32.totalorder %s12, 1
    %p175 = por %p173, %p174
    %p176 = scmp.ne.s32.totalorder %s168, %s171
    %p177 = scmp.eq.s32.totalorder %s12, 0
    %p178 = por %p176, %p177
    %p179 = scmp.ne.s32.totalorder %s168, %s171
    %p180 = scmp.eq.s32.totalorder %s17, 1
    %p181 = por %p179, %p180
    %p182 = scmp.ne.s32.totalorder %s171, %s172
    %p183 = scmp.eq.s32.totalorder %s17, 0
    %p184 = por %p182, %p183
    %p185 = scmp.ne.s32.totalorder %s171, %s172
    %p186 = scmp.eq.s32.totalorder %s18, 1
    %p187 = por %p185, %p186
    %p189 = scmp.ne.s32.totalorder %s172, %s188
    %p190 = scmp.eq.s32.totalorder %s18, 0
    %p191 = por %p189, %p190
    %p192 = scmp.le.s32.totalorder 1, %s12
    %p193 = scmp.lt.s32.totalorder %s12, 3
    %p194 = pnand %p192, %p193
    %p195 = pneg %p194
    // Predicated region
    $region9: #{forward.4} parent=5 // pred_check
      _
    $region10: #{forward.4} parent=5 // pred_check_branch
      %197 = sbr.rel (%p194) target = $region12
    $region11: #{forward.4} parent=5 // pred_region
      %s198 = ssub.s32 %s12, 1
      // Predicated region
      $region13: #{forward.4} parent=11 // pred_check
        %p199 = pneg %p137
      $region14: #{forward.4} parent=11 // pred_check_branch
        %201 = sbr.rel (%p199) target = $region16
      $region15: #{forward.4} parent=11 // pred_region
        _
      $region16: #{forward.4} parent=11 // pred_fallthru
        _
      // Predicated region
      $region17: #{forward.4} parent=11 // pred_check
        %p202 = pneg %p158
      $region18: #{forward.4} parent=11 // pred_check_branch
        %204 = sbr.rel (%p202) target = $region20
      $region19: #{forward.4} parent=11 // pred_region
        _
      $region20: #{forward.4} parent=11 // pred_fallthru
        _
    $region12: #{forward.4} parent=5 // pred_fallthru
      _
    %p205 = scmp.lt.s32.totalorder %s12, 2
    // Predicated region
    $region21: #{forward.4} parent=5 // pred_check
      %p206 = pneg %p205
    $region22: #{forward.4} parent=5 // pred_check_branch
      %208 = sbr.rel (%p206) target = $region24
    $region23: #{forward.4} parent=5 // pred_region
      // Predicated region
      $region25: #{forward.4} parent=23 // pred_check
        %p209 = pneg %p32
      $region26: #{forward.4} parent=23 // pred_check_branch
        %211 = sbr.rel (%p209) target = $region28
      $region27: #{forward.4} parent=23 // pred_region
        %p212 = scmp.lt.s32.totalorder %s12, 1
        %s213 = scalar_select %p212, %s12, 1
        %s214 = smul.addr %s213, 8
        %s215 = scalar_lea.vmem %s0, %s214
      $region28: #{forward.4} parent=23 // pred_fallthru
        _
      // Predicated region
      $region29: #{forward.4} parent=23 // pred_check
        %p216 = pneg %p58
      $region30: #{forward.4} parent=23 // pred_check_branch
        %218 = sbr.rel (%p216) target = $region32
      $region31: #{forward.4} parent=23 // pred_region
        %p219 = scmp.lt.s32.totalorder %s12, 1
        %s220 = scalar_select %p219, %s12, 1
        %s221 = smul.addr %s220, 8
        %s222 = scalar_lea.vmem %s1, %s221
      $region32: #{forward.4} parent=23 // pred_fallthru
        _
      // Predicated region
      $region33: #{forward.4} parent=23 // pred_check
        %p223 = pneg %p84
      $region34: #{forward.4} parent=23 // pred_check_branch
        %225 = sbr.rel (%p223) target = $region36
      $region35: #{forward.4} parent=23 // pred_region
        %p226 = scmp.lt.s32.totalorder %s12, 1
        %s227 = scalar_select %p226, %s12, 1
        %s228 = smul.addr %s227, 8
        %s229 = scalar_lea.vmem %s2, %s228
      $region36: #{forward.4} parent=23 // pred_fallthru
        _
      // Predicated region
      $region37: #{forward.4} parent=23 // pred_check
        %p230 = pneg %p110
      $region38: #{forward.4} parent=23 // pred_check_branch
        %232 = sbr.rel (%p230) target = $region40
      $region39: #{forward.4} parent=23 // pred_region
        %p233 = scmp.lt.s32.totalorder %s12, 1
        %s234 = scalar_select %p233, %s12, 1
        %s235 = smul.addr %s234, 8
        %s236 = scalar_lea.vmem %s3, %s235
      $region40: #{forward.4} parent=23 // pred_fallthru
        _
    $region24: #{forward.4} parent=5 // pred_fallthru
      _
    %p237 = scmp.le.s32.totalorder 1, %s12
    %p238 = scmp.lt.s32.totalorder %s12, 3
    %p239 = pnand %p237, %p238
    %p240 = pneg %p239
    // Predicated region
    $region41: #{forward.4} parent=5 // pred_check
      _
    $region42: #{forward.4} parent=5 // pred_check_branch
      %242 = sbr.rel (%p239) target = $region44
    $region43: #{forward.4} parent=5 // pred_region
      %s243 = ssub.s32 %s12, 1
      %p244 = scmp.lt.s32.totalorder %s17, 1
      %s245 = scalar_select %p244, %s17, 1
      %s246 = smul.addr %s245, 8
      %s247 = scalar_lea.vmem %s0, %s246
      %p248 = pneg %p38
      %p249 = pneg %p35
      %p250 = scmp.lt.s32.totalorder %s17, 1
      %s251 = scalar_select %p250, %s17, 1
      %s252 = smul.addr %s251, 8
      %s253 = scalar_lea.vmem %s1, %s252
      %p254 = pneg %p64
      %p255 = pneg %p61
      %p256 = scmp.lt.s32.totalorder %s17, 1
      %s257 = scalar_select %p256, %s17, 1
      %s258 = smul.addr %s257, 8
      %s259 = scalar_lea.vmem %s2, %s258
      %p260 = pneg %p90
      %p261 = pneg %p87
      %p262 = scmp.lt.s32.totalorder %s17, 1
      %s263 = scalar_select %p262, %s17, 1
      %s264 = smul.addr %s263, 8
      %s265 = scalar_lea.vmem %s3, %s264
      %p266 = pneg %p116
      %p267 = pneg %p113
      %p268 = pneg %p137
      %p269 = pneg %p134
      %p270 = pneg %p158
      %p271 = pneg %p155
      %p272 = pneg %p184
      %p273 = pneg %p181
      %p274 = scmp.lt.s32.totalorder %s17, 1
      %s275 = scalar_select %p274, %s17, 1
      %s276 = smul.addr %s275, 8
      %s277 = scalar_lea.vmem %s6, %s276
      %p278 = scmp.lt.s32.totalorder %s17, 1
      %s279 = scalar_select %p278, %s17, 1
      %s280 = smul.addr %s279, 8
      %s281 = scalar_lea.vmem %s0, %s280
      %p282 = scmp.lt.s32.totalorder %s17, 1
      %s283 = scalar_select %p282, %s17, 1
      %s284 = smul.addr %s283, 8
      %s285 = scalar_lea.vmem %s1, %s284
      %p286 = scmp.lt.s32.totalorder %s17, 1
      %s287 = scalar_select %p286, %s17, 1
      %s288 = smul.addr %s287, 8
      %s289 = scalar_lea.vmem %s2, %s288
      %p290 = scmp.lt.s32.totalorder %s17, 1
      %s291 = scalar_select %p290, %s17, 1
      %s292 = smul.addr %s291, 8
      %s293 = scalar_lea.vmem %s3, %s292
      %p294 = scmp.lt.s32.totalorder %s17, 1
      %s295 = scalar_select %p294, %s17, 1
      %s296 = smul.addr %s295, 8
      %s297 = scalar_lea.vmem %s6, %s296
      %v299 = vld [vmem:[%s281] sm:$0xff]
      %v300 = vpack.c.bf16 %v299, %v299
      %v301 = vld [vmem:[%s4] sm:$0xf]
      %v302 = vld [vmem:[%s4 + $0x4] sm:$0xf]
      %v303 = vld [vmem:[%s4 + $0x8] sm:$0xf]
      %v304 = vld [vmem:[%s4 + $0xc] sm:$0xf]
      %v305 = vld [vmem:[%s4 + $0x10] sm:$0xf]
      %v306 = vld [vmem:[%s4 + $0x14] sm:$0xf]
      %v307 = vld [vmem:[%s4 + $0x18] sm:$0xf]
      %v308 = vld [vmem:[%s4 + $0x1c] sm:$0xf]
      %v317 = vunpack.c.l.b16 %v301
      %v318 = vunpack.c.l.b16 %v302
      %v319 = vunpack.c.l.b16 %v303
      %v320 = vunpack.c.l.b16 %v304
      %v321 = vunpack.c.l.b16 %v305
      %v322 = vunpack.c.l.b16 %v306
      %v323 = vunpack.c.l.b16 %v307
      %v324 = vunpack.c.l.b16 %v308
      %v325 = vpack.c.b16 %v318, %v317
      %v326 = vpack.c.b16 %v320, %v319
      %v327 = vpack.c.b16 %v322, %v321
      %v328 = vpack.c.b16 %v324, %v323
      %vm333 = vcmask 523264
      %v335 = vsel %vm333, %v300, 0
      %337 = vmatpush.bf16.msra.mxu0 0
      %338 = vmatpush.bf16.msra.mxu0 0
      %339 = vmatpush.bf16.msra.mxu0 0
      %340 = vmatpush.bf16.msra.mxu0 0
      %341 = vmatpush.bf16.msra.mxu0 %v328
      %342 = vmatpush.bf16.msra.mxu0 %v327
      %343 = vmatpush.bf16.msra.mxu0 %v326
      %344 = vmatpush.bf16.msra.mxu0 %v325
      %345 = vmatmul.bf16.gmra.mxu0 %v335
      %v346 = vpop.f32.mrf.mxu0
      %v347 = vadd.f32 0.0, %v346
      %v348 = vpop.f32.mrf.mxu0
      %349 = vdwg.mxu0
      %v350 = vld [vmem:[%s285] sm:$0xff]
      %v351 = vld [vmem:[%s289] sm:$0xff]
      %v352 = vld [vmem:[%s5] sm:$0xf]
      %v354 = vrot.slane %v352, 1
      %s355 = vtos %v354
      %v356 = vstv %s355
      %v358 = vsub.f32 %v351, %v356
      %v359 = vand.u32 2147483647, %v358
      %v360 = vsub.f32 6.2831855, %v359
      %v361 = vand.u32 2147483647, %v360
      %v362 = vmin.f32 %v359, %v361
      %s363 = vtos %v352
      %v364 = vstv %s363
      %v366 = vsub.f32 %v350, %v364
      %v367 = vmul.f32 %v366, %v366
      %v368 = vrot.slane %v352, 2
      %s369 = vtos %v368
      %v370 = vstv %s369
      %v372 = vmul.f32 %v370, %v367
      %v373 = vrot.slane %v352, 3
      %s374 = vtos %v373
      %v375 = vstv %s374
      %v377 = vmul.f32 %v375, %v362
      %v378 = vmul.f32 %v377, %v362
      %v379 = vadd.f32 %v372, %v378
      %v380 = vmul.f32 %v379, 1.442695
      %v381 = vpow.pop %v380
      %382 = vrot.lane.b32.xlu0 %v354, 127
      %v383 = vpop.permute.xlu0 %382
      %s384 = vtos %v383
      %v385 = vstv %s384
      %v387 = vsub.f32 %v351, %v385
      %v388 = vand.u32 2147483647, %v387
      %v389 = vsub.f32 6.2831855, %v388
      %v390 = vand.u32 2147483647, %v389
      %v391 = vmin.f32 %v388, %v390
      %392 = vrot.lane.b32.xlu0 %v352, 127
      %v393 = vpop.permute.xlu0 %392
      %s394 = vtos %v393
      %v395 = vstv %s394
      %v397 = vsub.f32 %v350, %v395
      %v398 = vmul.f32 %v397, %v397
      %399 = vrot.lane.b32.xlu0 %v368, 127
      %v400 = vpop.permute.xlu0 %399
      %s401 = vtos %v400
      %v402 = vstv %s401
      %v404 = vmul.f32 %v402, %v398
      %405 = vrot.lane.b32.xlu0 %v373, 127
      %v406 = vpop.permute.xlu0 %405
      %s407 = vtos %v406
      %v408 = vstv %s407
      %v410 = vmul.f32 %v408, %v391
      %v411 = vmul.f32 %v410, %v391
      %v412 = vadd.f32 %v404, %v411
      %v413 = vmul.f32 %v412, 1.442695
      %v414 = vpow.pop %v413
      %v415 = vadd.f32 %v381, %v414
      %416 = vrot.lane.b32.xlu0 %v354, 126
      %v417 = vpop.permute.xlu0 %416
      %s418 = vtos %v417
      %v419 = vstv %s418
      %v421 = vsub.f32 %v351, %v419
      %v422 = vand.u32 2147483647, %v421
      %v423 = vsub.f32 6.2831855, %v422
      %v424 = vand.u32 2147483647, %v423
      %v425 = vmin.f32 %v422, %v424
      %426 = vrot.lane.b32.xlu0 %v352, 126
      %v427 = vpop.permute.xlu0 %426
      %s428 = vtos %v427
      %v429 = vstv %s428
      %v431 = vsub.f32 %v350, %v429
      %v432 = vmul.f32 %v431, %v431
      %433 = vrot.lane.b32.xlu0 %v368, 126
      %v434 = vpop.permute.xlu0 %433
      %s435 = vtos %v434
      %v436 = vstv %s435
      %v438 = vmul.f32 %v436, %v432
      %439 = vrot.lane.b32.xlu0 %v373, 126
      %v440 = vpop.permute.xlu0 %439
      %s441 = vtos %v440
      %v442 = vstv %s441
      %v444 = vmul.f32 %v442, %v425
      %v445 = vmul.f32 %v444, %v425
      %v446 = vadd.f32 %v438, %v445
      %v447 = vmul.f32 %v446, 1.442695
      %v448 = vpow.pop %v447
      %v449 = vadd.f32 %v415, %v448
      %450 = vrot.lane.b32.xlu0 %v354, 125
      %v451 = vpop.permute.xlu0 %450
      %s452 = vtos %v451
      %v453 = vstv %s452
      %v455 = vsub.f32 %v351, %v453
      %v456 = vand.u32 2147483647, %v455
      %v457 = vsub.f32 6.2831855, %v456
      %v458 = vand.u32 2147483647, %v457
      %v459 = vmin.f32 %v456, %v458
      %460 = vrot.lane.b32.xlu0 %v352, 125
      %v461 = vpop.permute.xlu0 %460
      %s462 = vtos %v461
      %v463 = vstv %s462
      %v465 = vsub.f32 %v350, %v463
      %v466 = vmul.f32 %v465, %v465
      %467 = vrot.lane.b32.xlu0 %v368, 125
      %v468 = vpop.permute.xlu0 %467
      %s469 = vtos %v468
      %v470 = vstv %s469
      %v472 = vmul.f32 %v470, %v466
      %473 = vrot.lane.b32.xlu0 %v373, 125
      %v474 = vpop.permute.xlu0 %473
      %s475 = vtos %v474
      %v476 = vstv %s475
      %v478 = vmul.f32 %v476, %v459
      %v479 = vmul.f32 %v478, %v459
      %v480 = vadd.f32 %v472, %v479
      %v481 = vmul.f32 %v480, 1.442695
      %v482 = vpow.pop %v481
      %v483 = vadd.f32 %v449, %v482
      %484 = vrot.lane.b32.xlu0 %v354, 124
      %v485 = vpop.permute.xlu0 %484
      %s486 = vtos %v485
      %v487 = vstv %s486
      %v489 = vsub.f32 %v351, %v487
      %v490 = vand.u32 2147483647, %v489
      %v491 = vsub.f32 6.2831855, %v490
      %v492 = vand.u32 2147483647, %v491
      %v493 = vmin.f32 %v490, %v492
      %494 = vrot.lane.b32.xlu0 %v352, 124
      %v495 = vpop.permute.xlu0 %494
      %s496 = vtos %v495
      %v497 = vstv %s496
      %v499 = vsub.f32 %v350, %v497
      %v500 = vmul.f32 %v499, %v499
      %501 = vrot.lane.b32.xlu0 %v368, 124
      %v502 = vpop.permute.xlu0 %501
      %s503 = vtos %v502
      %v504 = vstv %s503
      %v506 = vmul.f32 %v504, %v500
      %507 = vrot.lane.b32.xlu0 %v373, 124
      %v508 = vpop.permute.xlu0 %507
      %s509 = vtos %v508
      %v510 = vstv %s509
      %v512 = vmul.f32 %v510, %v493
      %v513 = vmul.f32 %v512, %v493
      %v514 = vadd.f32 %v506, %v513
      %v515 = vmul.f32 %v514, 1.442695
      %v516 = vpow.pop %v515
      %v517 = vadd.f32 %v483, %v516
      %518 = vrot.lane.b32.xlu0 %v354, 123
      %v519 = vpop.permute.xlu0 %518
      %s520 = vtos %v519
      %v521 = vstv %s520
      %v523 = vsub.f32 %v351, %v521
      %v524 = vand.u32 2147483647, %v523
      %v525 = vsub.f32 6.2831855, %v524
      %v526 = vand.u32 2147483647, %v525
      %v527 = vmin.f32 %v524, %v526
      %528 = vrot.lane.b32.xlu0 %v352, 123
      %v529 = vpop.permute.xlu0 %528
      %s530 = vtos %v529
      %v531 = vstv %s530
      %v533 = vsub.f32 %v350, %v531
      %v534 = vmul.f32 %v533, %v533
      %535 = vrot.lane.b32.xlu0 %v368, 123
      %v536 = vpop.permute.xlu0 %535
      %s537 = vtos %v536
      %v538 = vstv %s537
      %v540 = vmul.f32 %v538, %v534
      %541 = vrot.lane.b32.xlu0 %v373, 123
      %v542 = vpop.permute.xlu0 %541
      %s543 = vtos %v542
      %v544 = vstv %s543
      %v546 = vmul.f32 %v544, %v527
      %v547 = vmul.f32 %v546, %v527
      %v548 = vadd.f32 %v540, %v547
      %v549 = vmul.f32 %v548, 1.442695
      %v550 = vpow.pop %v549
      %v551 = vadd.f32 %v517, %v550
      %552 = vrot.lane.b32.xlu0 %v354, 122
      %v553 = vpop.permute.xlu0 %552
      %s554 = vtos %v553
      %v555 = vstv %s554
      %v557 = vsub.f32 %v351, %v555
      %v558 = vand.u32 2147483647, %v557
      %v559 = vsub.f32 6.2831855, %v558
      %v560 = vand.u32 2147483647, %v559
      %v561 = vmin.f32 %v558, %v560
      %562 = vrot.lane.b32.xlu0 %v352, 122
      %v563 = vpop.permute.xlu0 %562
      %s564 = vtos %v563
      %v565 = vstv %s564
      %v567 = vsub.f32 %v350, %v565
      %v568 = vmul.f32 %v567, %v567
      %569 = vrot.lane.b32.xlu0 %v368, 122
      %v570 = vpop.permute.xlu0 %569
      %s571 = vtos %v570
      %v572 = vstv %s571
      %v574 = vmul.f32 %v572, %v568
      %575 = vrot.lane.b32.xlu0 %v373, 122
      %v576 = vpop.permute.xlu0 %575
      %s577 = vtos %v576
      %v578 = vstv %s577
      %v580 = vmul.f32 %v578, %v561
      %v581 = vmul.f32 %v580, %v561
      %v582 = vadd.f32 %v574, %v581
      %v583 = vmul.f32 %v582, 1.442695
      %v584 = vpow.pop %v583
      %v585 = vadd.f32 %v551, %v584
      %586 = vrot.lane.b32.xlu0 %v354, 121
      %v587 = vpop.permute.xlu0 %586
      %s588 = vtos %v587
      %v589 = vstv %s588
      %v591 = vsub.f32 %v351, %v589
      %v592 = vand.u32 2147483647, %v591
      %v593 = vsub.f32 6.2831855, %v592
      %v594 = vand.u32 2147483647, %v593
      %v595 = vmin.f32 %v592, %v594
      %596 = vrot.lane.b32.xlu0 %v352, 121
      %v597 = vpop.permute.xlu0 %596
      %s598 = vtos %v597
      %v599 = vstv %s598
      %v601 = vsub.f32 %v350, %v599
      %v602 = vmul.f32 %v601, %v601
      %603 = vrot.lane.b32.xlu0 %v368, 121
      %v604 = vpop.permute.xlu0 %603
      %s605 = vtos %v604
      %v606 = vstv %s605
      %v608 = vmul.f32 %v606, %v602
      %609 = vrot.lane.b32.xlu0 %v373, 121
      %v610 = vpop.permute.xlu0 %609
      %s611 = vtos %v610
      %v612 = vstv %s611
      %v614 = vmul.f32 %v612, %v595
      %v615 = vmul.f32 %v614, %v595
      %v616 = vadd.f32 %v608, %v615
      %v617 = vmul.f32 %v616, 1.442695
      %v618 = vpow.pop %v617
      %v619 = vadd.f32 %v585, %v618
      %v620 = vadd.f32 %v619, 1e-20
      %v621 = vrcp.pop %v620
      %v622 = vmul.f32 %v381, %v621
      %v623 = vmul.f32 %v414, %v621
      %v624 = vmul.f32 %v448, %v621
      %v625 = vmul.f32 %v482, %v621
      %v626 = vmul.f32 %v516, %v621
      %v627 = vmul.f32 %v550, %v621
      %v628 = vmul.f32 %v584, %v621
      %v629 = vmul.f32 %v618, %v621
      %v630 = vld [vmem:[%s293] sm:$0xff]
      %v631 = vmul.f32 %v622, %v630
      %vm632 = vcmask 64512
      %v634 = vsel %vm632, %v631, 0
      %636 = vmatpush.msra.mxu0 0.0
      %637 = vmatpush.msra.mxu0 0.0
      %638 = vmatpush.msra.mxu0 0.0
      %639 = vmatpush.msra.mxu0 0.0
      %640 = vmatpush.msra.mxu0 0.0
      %641 = vmatpush.msra.mxu0 0.0
      %642 = vmatpush.msra.mxu0 0.0
      %643 = vmatpush.msra.mxu0 0.0
      %644 = vmatpush.msra.mxu0 0.0
      %645 = vmatpush.msra.mxu0 0.0
      %646 = vmatpush.msra.mxu0 0.0
      %647 = vmatpush.msra.mxu0 0.0
      %648 = vmatpush.msra.mxu0 0.0
      %649 = vmatpush.msra.mxu0 0.0
      %650 = vmatpush.msra.mxu0 0.0
      %651 = vmatpush.msra.mxu0 %v347
      %652 = vmatmul.f32.gmra.mxu0 %v634
      %v653 = vpop.f32.mrf.mxu0
      %v654 = vadd.f32 0.0, %v653
      %655 = vdwg.mxu0
      %v656 = vmul.f32 %v623, %v630
      %658 = vrot.lane.b32.xlu0 %v347, 120
      %v659 = vpop.permute.xlu0 %658
      %v662 = vsel %vm632, %v656, 0
      %664 = vmatpush.msra.mxu0 0.0
      %665 = vmatpush.msra.mxu0 0.0
      %666 = vmatpush.msra.mxu0 0.0
      %667 = vmatpush.msra.mxu0 0.0
      %668 = vmatpush.msra.mxu0 0.0
      %669 = vmatpush.msra.mxu0 0.0
      %670 = vmatpush.msra.mxu0 0.0
      %671 = vmatpush.msra.mxu0 0.0
      %672 = vmatpush.msra.mxu0 0.0
      %673 = vmatpush.msra.mxu0 0.0
      %674 = vmatpush.msra.mxu0 0.0
      %675 = vmatpush.msra.mxu0 0.0
      %676 = vmatpush.msra.mxu0 0.0
      %677 = vmatpush.msra.mxu0 0.0
      %678 = vmatpush.msra.mxu0 0.0
      %679 = vmatpush.msra.mxu0 %v659
      %680 = vmatmul.f32.gmra.mxu0 %v662
      %v681 = vpop.f32.mrf.mxu0
      %v682 = vadd.f32 0.0, %v681
      %683 = vdwg.mxu0
      %v684 = vmul.f32 %v624, %v630
      %685 = vrot.lane.b32.xlu0 %v347, 112
      %v686 = vpop.permute.xlu0 %685
      %v689 = vsel %vm632, %v684, 0
      %691 = vmatpush.msra.mxu0 0.0
      %692 = vmatpush.msra.mxu0 0.0
      %693 = vmatpush.msra.mxu0 0.0
      %694 = vmatpush.msra.mxu0 0.0
      %695 = vmatpush.msra.mxu0 0.0
      %696 = vmatpush.msra.mxu0 0.0
      %697 = vmatpush.msra.mxu0 0.0
      %698 = vmatpush.msra.mxu0 0.0
      %699 = vmatpush.msra.mxu0 0.0
      %700 = vmatpush.msra.mxu0 0.0
      %701 = vmatpush.msra.mxu0 0.0
      %702 = vmatpush.msra.mxu0 0.0
      %703 = vmatpush.msra.mxu0 0.0
      %704 = vmatpush.msra.mxu0 0.0
      %705 = vmatpush.msra.mxu0 0.0
      %706 = vmatpush.msra.mxu0 %v686
      %707 = vmatmul.f32.gmra.mxu0 %v689
      %v708 = vpop.f32.mrf.mxu0
      %v709 = vadd.f32 0.0, %v708
      %710 = vdwg.mxu0
      %v711 = vmul.f32 %v625, %v630
      %712 = vrot.lane.b32.xlu0 %v347, 104
      %v713 = vpop.permute.xlu0 %712
      %v716 = vsel %vm632, %v711, 0
      %718 = vmatpush.msra.mxu0 0.0
      %719 = vmatpush.msra.mxu0 0.0
      %720 = vmatpush.msra.mxu0 0.0
      %721 = vmatpush.msra.mxu0 0.0
      %722 = vmatpush.msra.mxu0 0.0
      %723 = vmatpush.msra.mxu0 0.0
      %724 = vmatpush.msra.mxu0 0.0
      %725 = vmatpush.msra.mxu0 0.0
      %726 = vmatpush.msra.mxu0 0.0
      %727 = vmatpush.msra.mxu0 0.0
      %728 = vmatpush.msra.mxu0 0.0
      %729 = vmatpush.msra.mxu0 0.0
      %730 = vmatpush.msra.mxu0 0.0
      %731 = vmatpush.msra.mxu0 0.0
      %732 = vmatpush.msra.mxu0 0.0
      %733 = vmatpush.msra.mxu0 %v713
      %734 = vmatmul.f32.gmra.mxu0 %v716
      %v735 = vpop.f32.mrf.mxu0
      %v736 = vadd.f32 0.0, %v735
      %737 = vdwg.mxu0
      %v738 = vmul.f32 %v626, %v630
      %739 = vrot.lane.b32.xlu0 %v347, 96
      %v740 = vpop.permute.xlu0 %739
      %v743 = vsel %vm632, %v738, 0
      %745 = vmatpush.msra.mxu0 0.0
      %746 = vmatpush.msra.mxu0 0.0
      %747 = vmatpush.msra.mxu0 0.0
      %748 = vmatpush.msra.mxu0 0.0
      %749 = vmatpush.msra.mxu0 0.0
      %750 = vmatpush.msra.mxu0 0.0
      %751 = vmatpush.msra.mxu0 0.0
      %752 = vmatpush.msra.mxu0 0.0
      %753 = vmatpush.msra.mxu0 0.0
      %754 = vmatpush.msra.mxu0 0.0
      %755 = vmatpush.msra.mxu0 0.0
      %756 = vmatpush.msra.mxu0 0.0
      %757 = vmatpush.msra.mxu0 0.0
      %758 = vmatpush.msra.mxu0 0.0
      %759 = vmatpush.msra.mxu0 0.0
      %760 = vmatpush.msra.mxu0 %v740
      %761 = vmatmul.f32.gmra.mxu0 %v743
      %v762 = vpop.f32.mrf.mxu0
      %v763 = vadd.f32 0.0, %v762
      %764 = vdwg.mxu0
      %v765 = vmul.f32 %v627, %v630
      %766 = vrot.lane.b32.xlu0 %v347, 88
      %v767 = vpop.permute.xlu0 %766
      %v770 = vsel %vm632, %v765, 0
      %772 = vmatpush.msra.mxu0 0.0
      %773 = vmatpush.msra.mxu0 0.0
      %774 = vmatpush.msra.mxu0 0.0
      %775 = vmatpush.msra.mxu0 0.0
      %776 = vmatpush.msra.mxu0 0.0
      %777 = vmatpush.msra.mxu0 0.0
      %778 = vmatpush.msra.mxu0 0.0
      %779 = vmatpush.msra.mxu0 0.0
      %780 = vmatpush.msra.mxu0 0.0
      %781 = vmatpush.msra.mxu0 0.0
      %782 = vmatpush.msra.mxu0 0.0
      %783 = vmatpush.msra.mxu0 0.0
      %784 = vmatpush.msra.mxu0 0.0
      %785 = vmatpush.msra.mxu0 0.0
      %786 = vmatpush.msra.mxu0 0.0
      %787 = vmatpush.msra.mxu0 %v767
      %788 = vmatmul.f32.gmra.mxu0 %v770
      %v789 = vpop.f32.mrf.mxu0
      %v790 = vadd.f32 0.0, %v789
      %791 = vdwg.mxu0
      %v792 = vmul.f32 %v628, %v630
      %793 = vrot.lane.b32.xlu0 %v347, 80
      %v794 = vpop.permute.xlu0 %793
      %v797 = vsel %vm632, %v792, 0
      %799 = vmatpush.msra.mxu0 0.0
      %800 = vmatpush.msra.mxu0 0.0
      %801 = vmatpush.msra.mxu0 0.0
      %802 = vmatpush.msra.mxu0 0.0
      %803 = vmatpush.msra.mxu0 0.0
      %804 = vmatpush.msra.mxu0 0.0
      %805 = vmatpush.msra.mxu0 0.0
      %806 = vmatpush.msra.mxu0 0.0
      %807 = vmatpush.msra.mxu0 0.0
      %808 = vmatpush.msra.mxu0 0.0
      %809 = vmatpush.msra.mxu0 0.0
      %810 = vmatpush.msra.mxu0 0.0
      %811 = vmatpush.msra.mxu0 0.0
      %812 = vmatpush.msra.mxu0 0.0
      %813 = vmatpush.msra.mxu0 0.0
      %814 = vmatpush.msra.mxu0 %v794
      %815 = vmatmul.f32.gmra.mxu0 %v797
      %v816 = vpop.f32.mrf.mxu0
      %v817 = vadd.f32 0.0, %v816
      %818 = vdwg.mxu0
      %v819 = vmul.f32 %v629, %v630
      %820 = vrot.lane.b32.xlu0 %v347, 72
      %v821 = vpop.permute.xlu0 %820
      %v824 = vsel %vm632, %v819, 0
      %826 = vmatpush.msra.mxu0 0.0
      %827 = vmatpush.msra.mxu0 0.0
      %828 = vmatpush.msra.mxu0 0.0
      %829 = vmatpush.msra.mxu0 0.0
      %830 = vmatpush.msra.mxu0 0.0
      %831 = vmatpush.msra.mxu0 0.0
      %832 = vmatpush.msra.mxu0 0.0
      %833 = vmatpush.msra.mxu0 0.0
      %834 = vmatpush.msra.mxu0 0.0
      %835 = vmatpush.msra.mxu0 0.0
      %836 = vmatpush.msra.mxu0 0.0
      %837 = vmatpush.msra.mxu0 0.0
      %838 = vmatpush.msra.mxu0 0.0
      %839 = vmatpush.msra.mxu0 0.0
      %840 = vmatpush.msra.mxu0 0.0
      %841 = vmatpush.msra.mxu0 %v821
      %842 = vmatmul.f32.gmra.mxu0 %v824
      %v843 = vpop.f32.mrf.mxu0
      %v844 = vadd.f32 0.0, %v843
      %845 = vdwg.mxu0
      %847 = vrot.lane.b32.xlu0 %v682, 8
      %v848 = vpop.permute.xlu0 %847
      %851 = vrot.lane.b32.xlu0 %v709, 16
      %v852 = vpop.permute.xlu0 %851
      %855 = vrot.lane.b32.xlu0 %v736, 24
      %v856 = vpop.permute.xlu0 %855
      %859 = vrot.lane.b32.xlu0 %v763, 32
      %v860 = vpop.permute.xlu0 %859
      %863 = vrot.lane.b32.xlu0 %v790, 40
      %v864 = vpop.permute.xlu0 %863
      %867 = vrot.lane.b32.xlu0 %v817, 48
      %v868 = vpop.permute.xlu0 %867
      %871 = vrot.lane.b32.xlu0 %v844, 56
      %v872 = vpop.permute.xlu0 %871
      %v874 = vsel %vm632, %v654, %v848
      %vm875 = vcmask 130048
      %v876 = vsel %vm875, %v874, %v852
      %vm877 = vcmask 195584
      %v878 = vsel %vm877, %v876, %v856
      %vm879 = vcmask 261120
      %v880 = vsel %vm879, %v878, %v860
      %vm881 = vcmask 326656
      %v882 = vsel %vm881, %v880, %v864
      %vm883 = vcmask 392192
      %v884 = vsel %vm883, %v882, %v868
      %vm885 = vcmask 457728
      %v886 = vsel %vm885, %v884, %v872
      %v887 = vmax.f32 %v886, 0.0
      %888 = vst.msk [vmem:[%s297] sm:$0xff] %vm333, %v887
      %p889 = scmp.lt.s32.totalorder %s17, 1
      %s890 = scalar_select %p889, %s17, 1
      %s891 = smul.addr %s890, 8
      %s892 = scalar_lea.vmem %s6, %s891
      // Predicated region
      $region45: #{forward.4} parent=43 // pred_check
        %p893 = pneg %p181
      $region46: #{forward.4} parent=43 // pred_check_branch
        %895 = sbr.rel (%p893) target = $region48
      $region47: #{forward.4} parent=43 // pred_region
        _
      $region48: #{forward.4} parent=43 // pred_fallthru
        _
    $region44: #{forward.4} parent=5 // pred_fallthru
      _
    %p896 = scmp.le.s32.totalorder 2, %s12
    // Predicated region
    $region49: #{forward.4} parent=5 // pred_check
      %p897 = pneg %p896
    $region50: #{forward.4} parent=5 // pred_check_branch
      %899 = sbr.rel (%p897) target = $region52
    $region51: #{forward.4} parent=5 // pred_region
      %s900 = ssub.s32 %s12, 2
      // Predicated region
      $region53: #{forward.4} parent=51 // pred_check
        %p901 = pneg %p187
      $region54: #{forward.4} parent=51 // pred_check_branch
        %903 = sbr.rel (%p901) target = $region56
      $region55: #{forward.4} parent=51 // pred_region
        %p904 = scmp.lt.s32.totalorder %s18, 1
        %s905 = scalar_select %p904, %s18, 1
        %s906 = smul.addr %s905, 8
        %s907 = scalar_lea.vmem %s6, %s906
      $region56: #{forward.4} parent=51 // pred_fallthru
        _
    $region52: #{forward.4} parent=5 // pred_fallthru
      _
  $region6: #{forward.4} parent=0 // loop_footer
    %s16 = sadd.s32 1, %s12
  $region7: #{forward.4} parent=0 // loop_footer_branch
    %11 = sbr.rel target = $region3
  $region8: #{forward.4} parent=0 // loop_exit
    _

// kernel: forward.5
$region0: #{forward.5}
  #allocation0 [shape = 'u32[]', space=smem, size = 0x4, offset = 0x4, fixed_abs, tag = 'smem constant byte address 0x4 - core index']
  #allocation1 [shape = 'u32[72,128]{1,0:T(1,128)}', space=vmem, size = 0x9000, scoped, tag = 'internal scratch']
  %s0 = inlined_call_operand.vmem [shape: f32[16,64], index: 0, kind: input, shape index: {}]
  %s1 = inlined_call_operand.vmem [shape: f32[2,8,8], index: 1, kind: input, shape index: {}]
  %s2 = inlined_call_operand.vmem [shape: f32[2,8,8], index: 2, kind: input, shape index: {}]
  %s3 = inlined_call_operand.vmem [shape: f32[2,8,8], index: 3, kind: input, shape index: {}]
  %s4 = inlined_call_operand.vmem [shape: bf16[64,32], index: 4, kind: input, shape index: {}]
  %s5 = inlined_call_operand.vmem [shape: f32[4,8], index: 5, kind: input, shape index: {}]
  %s6 = inlined_call_operand.vmem [shape: f32[2,32], index: 6, kind: input, shape index: {}]
  %s7 = inlined_call_operand.vmem [shape: f32[32,16], index: 7, kind: input, shape index: {}]
  %s8 = inlined_call_operand.vmem [shape: f32[1,16], index: 8, kind: input, shape index: {}]
  %s9 = inlined_call_operand.vmem [shape: f32[16,16], index: 9, kind: input, shape index: {}]
  %s10 = inlined_call_operand.vmem [shape: f32[1,16], index: 10, kind: input, shape index: {}]
  %s11 = inlined_call_operand.hbm [shape: f32[2,16], index: 11, kind: output, shape index: {}]
  %s12 = sld [smem:[#allocation0]]
  $region54: #{forward.5} parent=0
    _
  %s14 = ssub.s32 1, %s12
  %s15 = scalar_select 0, %s14, %s12
  $region1: #{forward.5} parent=0
    #allocation2 [shape = 'u8[1024]{0}', space=vmem, size = 0x400, scoped, tag = 'output window, operand 0, single buffered']
    #allocation3 [shape = 's32[1]{0}', space=sflag, size = 0x4, scoped, tag = 'scoped memory for forward.5']
    %16 = vsyncpa [#allocation3], 0
    // Predicated region
    $region2: #{forward.5} parent=1 // pred_check
      _
    $region3: #{forward.5} parent=1 // pred_check_branch
      %18 = sbr.rel (0) target = $region5
    $region4: #{forward.5} parent=1 // pred_region
      _
    $region5: #{forward.5} parent=1 // pred_fallthru
      _
    // Predicated region
    $region6: #{forward.5} parent=1 // pred_check
      _
    $region7: #{forward.5} parent=1 // pred_check_branch
      %20 = sbr.rel (0) target = $region9
    $region8: #{forward.5} parent=1 // pred_region
      _
    $region9: #{forward.5} parent=1 // pred_fallthru
      _
    // Predicated region
    $region10: #{forward.5} parent=1 // pred_check
      _
    $region11: #{forward.5} parent=1 // pred_check_branch
      %22 = sbr.rel (0) target = $region13
    $region12: #{forward.5} parent=1 // pred_region
      _
    $region13: #{forward.5} parent=1 // pred_fallthru
      _
    // Predicated region
    $region14: #{forward.5} parent=1 // pred_check
      _
    $region15: #{forward.5} parent=1 // pred_check_branch
      %24 = sbr.rel (0) target = $region17
    $region16: #{forward.5} parent=1 // pred_region
      _
    $region17: #{forward.5} parent=1 // pred_fallthru
      _
    // Predicated region
    $region18: #{forward.5} parent=1 // pred_check
      _
    $region19: #{forward.5} parent=1 // pred_check_branch
      %26 = sbr.rel (0) target = $region21
    $region20: #{forward.5} parent=1 // pred_region
      _
    $region21: #{forward.5} parent=1 // pred_fallthru
      _
    // Predicated region
    $region22: #{forward.5} parent=1 // pred_check
      _
    $region23: #{forward.5} parent=1 // pred_check_branch
      %28 = sbr.rel (0) target = $region25
    $region24: #{forward.5} parent=1 // pred_region
      _
    $region25: #{forward.5} parent=1 // pred_fallthru
      _
    // Predicated region
    $region26: #{forward.5} parent=1 // pred_check
      _
    $region27: #{forward.5} parent=1 // pred_check_branch
      %30 = sbr.rel (0) target = $region29
    $region28: #{forward.5} parent=1 // pred_region
      _
    $region29: #{forward.5} parent=1 // pred_fallthru
      _
    // Predicated region
    $region30: #{forward.5} parent=1 // pred_check
      _
    $region31: #{forward.5} parent=1 // pred_check_branch
      %32 = sbr.rel (0) target = $region33
    $region32: #{forward.5} parent=1 // pred_region
      _
    $region33: #{forward.5} parent=1 // pred_fallthru
      _
    // Predicated region
    $region34: #{forward.5} parent=1 // pred_check
      _
    $region35: #{forward.5} parent=1 // pred_check_branch
      %34 = sbr.rel (0) target = $region37
    $region36: #{forward.5} parent=1 // pred_region
      _
    $region37: #{forward.5} parent=1 // pred_fallthru
      _
    // Predicated region
    $region38: #{forward.5} parent=1 // pred_check
      _
    $region39: #{forward.5} parent=1 // pred_check_branch
      %36 = sbr.rel (0) target = $region41
    $region40: #{forward.5} parent=1 // pred_region
      _
    $region41: #{forward.5} parent=1 // pred_fallthru
      _
    // Predicated region
    $region42: #{forward.5} parent=1 // pred_check
      _
    $region43: #{forward.5} parent=1 // pred_check_branch
      %38 = sbr.rel (0) target = $region45
    $region44: #{forward.5} parent=1 // pred_region
      _
    $region45: #{forward.5} parent=1 // pred_fallthru
      _
    %v40 = vld [vmem:[%s0] sm:$0xff]
    %v41 = vld [vmem:[%s0 + $0x8] sm:$0xff]
    %v42 = vpack.c.bf16 %v41, %v40
    %v43 = vld [vmem:[%s4] sm:$0xf]
    %v44 = vld [vmem:[%s4 + $0x4] sm:$0xf]
    %v45 = vld [vmem:[%s4 + $0x8] sm:$0xf]
    %v46 = vld [vmem:[%s4 + $0xc] sm:$0xf]
    %v47 = vld [vmem:[%s4 + $0x10] sm:$0xf]
    %v48 = vld [vmem:[%s4 + $0x14] sm:$0xf]
    %v49 = vld [vmem:[%s4 + $0x18] sm:$0xf]
    %v50 = vld [vmem:[%s4 + $0x1c] sm:$0xf]
    %v59 = vunpack.c.l.b16 %v43
    %v60 = vunpack.c.l.b16 %v44
    %v61 = vunpack.c.l.b16 %v45
    %v62 = vunpack.c.l.b16 %v46
    %v63 = vunpack.c.l.b16 %v47
    %v64 = vunpack.c.l.b16 %v48
    %v65 = vunpack.c.l.b16 %v49
    %v66 = vunpack.c.l.b16 %v50
    %v67 = vpack.c.b16 %v60, %v59
    %v68 = vpack.c.b16 %v62, %v61
    %v69 = vpack.c.b16 %v64, %v63
    %v70 = vpack.c.b16 %v66, %v65
    %vm75 = vcmask 523264
    %v77 = vsel %vm75, %v42, 0
    %79 = vmatpush.bf16.msra.mxu0 0
    %80 = vmatpush.bf16.msra.mxu0 0
    %81 = vmatpush.bf16.msra.mxu0 0
    %82 = vmatpush.bf16.msra.mxu0 0
    %83 = vmatpush.bf16.msra.mxu0 %v70
    %84 = vmatpush.bf16.msra.mxu0 %v69
    %85 = vmatpush.bf16.msra.mxu0 %v68
    %86 = vmatpush.bf16.msra.mxu0 %v67
    %87 = vmatmul.bf16.gmra.mxu0 %v77
    %v88 = vpop.f32.mrf.mxu0
    %v89 = vadd.f32 0.0, %v88
    %v90 = vpop.f32.mrf.mxu0
    %v91 = vadd.f32 0.0, %v90
    %92 = vdwg.mxu0
    %v93 = vld [vmem:[%s1] sm:$0xff]
    %v94 = vld [vmem:[%s1 + $0x8] sm:$0xff]
    %v95 = vld [vmem:[%s2] sm:$0xff]
    %v96 = vld [vmem:[%s2 + $0x8] sm:$0xff]
    %v97 = vld [vmem:[%s5] sm:$0xf]
    %v99 = vrot.slane %v97, 1
    %s100 = vtos %v99
    %v101 = vstv %s100
    %v103 = vsub.f32 %v95, %v101
    %v104 = vsub.f32 %v96, %v101
    %v105 = vand.u32 2147483647, %v103
    %v106 = vand.u32 2147483647, %v104
    %v107 = vsub.f32 6.2831855, %v105
    %v108 = vsub.f32 6.2831855, %v106
    %v109 = vand.u32 2147483647, %v107
    %v110 = vand.u32 2147483647, %v108
    %v111 = vmin.f32 %v105, %v109
    %v112 = vmin.f32 %v106, %v110
    %s113 = vtos %v97
    %v114 = vstv %s113
    %v116 = vsub.f32 %v93, %v114
    %v117 = vsub.f32 %v94, %v114
    %v118 = vmul.f32 %v116, %v116
    %v119 = vmul.f32 %v117, %v117
    %v120 = vrot.slane %v97, 2
    %s121 = vtos %v120
    %v122 = vstv %s121
    %v124 = vmul.f32 %v122, %v118
    %v125 = vmul.f32 %v122, %v119
    %v126 = vrot.slane %v97, 3
    %s127 = vtos %v126
    %v128 = vstv %s127
    %v130 = vmul.f32 %v128, %v111
    %v131 = vmul.f32 %v128, %v112
    %v132 = vmul.f32 %v130, %v111
    %v133 = vmul.f32 %v131, %v112
    %v134 = vadd.f32 %v124, %v132
    %v135 = vadd.f32 %v125, %v133
    %v136 = vmul.f32 %v134, 1.442695
    %v137 = vpow.pop %v136
    %v138 = vmul.f32 %v135, 1.442695
    %v139 = vpow.pop %v138
    %140 = vrot.lane.b32.xlu0 %v99, 127
    %v141 = vpop.permute.xlu0 %140
    %s142 = vtos %v141
    %v143 = vstv %s142
    %v145 = vsub.f32 %v95, %v143
    %v146 = vsub.f32 %v96, %v143
    %v147 = vand.u32 2147483647, %v145
    %v148 = vand.u32 2147483647, %v146
    %v149 = vsub.f32 6.2831855, %v147
    %v150 = vsub.f32 6.2831855, %v148
    %v151 = vand.u32 2147483647, %v149
    %v152 = vand.u32 2147483647, %v150
    %v153 = vmin.f32 %v147, %v151
    %v154 = vmin.f32 %v148, %v152
    %155 = vrot.lane.b32.xlu0 %v97, 127
    %v156 = vpop.permute.xlu0 %155
    %s157 = vtos %v156
    %v158 = vstv %s157
    %v160 = vsub.f32 %v93, %v158
    %v161 = vsub.f32 %v94, %v158
    %v162 = vmul.f32 %v160, %v160
    %v163 = vmul.f32 %v161, %v161
    %164 = vrot.lane.b32.xlu0 %v120, 127
    %v165 = vpop.permute.xlu0 %164
    %s166 = vtos %v165
    %v167 = vstv %s166
    %v169 = vmul.f32 %v167, %v162
    %v170 = vmul.f32 %v167, %v163
    %171 = vrot.lane.b32.xlu0 %v126, 127
    %v172 = vpop.permute.xlu0 %171
    %s173 = vtos %v172
    %v174 = vstv %s173
    %v176 = vmul.f32 %v174, %v153
    %v177 = vmul.f32 %v174, %v154
    %v178 = vmul.f32 %v176, %v153
    %v179 = vmul.f32 %v177, %v154
    %v180 = vadd.f32 %v169, %v178
    %v181 = vadd.f32 %v170, %v179
    %v182 = vmul.f32 %v180, 1.442695
    %v183 = vpow.pop %v182
    %v184 = vmul.f32 %v181, 1.442695
    %v185 = vpow.pop %v184
    %v186 = vadd.f32 %v137, %v183
    %v187 = vadd.f32 %v139, %v185
    %188 = vrot.lane.b32.xlu0 %v99, 126
    %v189 = vpop.permute.xlu0 %188
    %s190 = vtos %v189
    %v191 = vstv %s190
    %v193 = vsub.f32 %v95, %v191
    %v194 = vsub.f32 %v96, %v191
    %v195 = vand.u32 2147483647, %v193
    %v196 = vand.u32 2147483647, %v194
    %v197 = vsub.f32 6.2831855, %v195
    %v198 = vsub.f32 6.2831855, %v196
    %v199 = vand.u32 2147483647, %v197
    %v200 = vand.u32 2147483647, %v198
    %v201 = vmin.f32 %v195, %v199
    %v202 = vmin.f32 %v196, %v200
    %203 = vrot.lane.b32.xlu0 %v97, 126
    %v204 = vpop.permute.xlu0 %203
    %s205 = vtos %v204
    %v206 = vstv %s205
    %v208 = vsub.f32 %v93, %v206
    %v209 = vsub.f32 %v94, %v206
    %v210 = vmul.f32 %v208, %v208
    %v211 = vmul.f32 %v209, %v209
    %212 = vrot.lane.b32.xlu0 %v120, 126
    %v213 = vpop.permute.xlu0 %212
    %s214 = vtos %v213
    %v215 = vstv %s214
    %v217 = vmul.f32 %v215, %v210
    %v218 = vmul.f32 %v215, %v211
    %219 = vrot.lane.b32.xlu0 %v126, 126
    %v220 = vpop.permute.xlu0 %219
    %s221 = vtos %v220
    %v222 = vstv %s221
    %v224 = vmul.f32 %v222, %v201
    %v225 = vmul.f32 %v222, %v202
    %v226 = vmul.f32 %v224, %v201
    %v227 = vmul.f32 %v225, %v202
    %v228 = vadd.f32 %v217, %v226
    %v229 = vadd.f32 %v218, %v227
    %v230 = vmul.f32 %v228, 1.442695
    %v231 = vpow.pop %v230
    %v232 = vmul.f32 %v229, 1.442695
    %v233 = vpow.pop %v232
    %v234 = vadd.f32 %v186, %v231
    %v235 = vadd.f32 %v187, %v233
    %236 = vrot.lane.b32.xlu0 %v99, 125
    %v237 = vpop.permute.xlu0 %236
    %s238 = vtos %v237
    %v239 = vstv %s238
    %v241 = vsub.f32 %v95, %v239
    %v242 = vsub.f32 %v96, %v239
    %v243 = vand.u32 2147483647, %v241
    %v244 = vand.u32 2147483647, %v242
    %v245 = vsub.f32 6.2831855, %v243
    %v246 = vsub.f32 6.2831855, %v244
    %v247 = vand.u32 2147483647, %v245
    %v248 = vand.u32 2147483647, %v246
    %v249 = vmin.f32 %v243, %v247
    %v250 = vmin.f32 %v244, %v248
    %251 = vrot.lane.b32.xlu0 %v97, 125
    %v252 = vpop.permute.xlu0 %251
    %s253 = vtos %v252
    %v254 = vstv %s253
    %v256 = vsub.f32 %v93, %v254
    %v257 = vsub.f32 %v94, %v254
    %v258 = vmul.f32 %v256, %v256
    %v259 = vmul.f32 %v257, %v257
    %260 = vrot.lane.b32.xlu0 %v120, 125
    %v261 = vpop.permute.xlu0 %260
    %s262 = vtos %v261
    %v263 = vstv %s262
    %v265 = vmul.f32 %v263, %v258
    %v266 = vmul.f32 %v263, %v259
    %267 = vrot.lane.b32.xlu0 %v126, 125
    %v268 = vpop.permute.xlu0 %267
    %s269 = vtos %v268
    %v270 = vstv %s269
    %v272 = vmul.f32 %v270, %v249
    %v273 = vmul.f32 %v270, %v250
    %v274 = vmul.f32 %v272, %v249
    %v275 = vmul.f32 %v273, %v250
    %v276 = vadd.f32 %v265, %v274
    %v277 = vadd.f32 %v266, %v275
    %v278 = vmul.f32 %v276, 1.442695
    %v279 = vpow.pop %v278
    %v280 = vmul.f32 %v277, 1.442695
    %v281 = vpow.pop %v280
    %v282 = vadd.f32 %v234, %v279
    %v283 = vadd.f32 %v235, %v281
    %284 = vrot.lane.b32.xlu0 %v99, 124
    %v285 = vpop.permute.xlu0 %284
    %s286 = vtos %v285
    %v287 = vstv %s286
    %v289 = vsub.f32 %v95, %v287
    %v290 = vsub.f32 %v96, %v287
    %v291 = vand.u32 2147483647, %v289
    %v292 = vand.u32 2147483647, %v290
    %v293 = vsub.f32 6.2831855, %v291
    %v294 = vsub.f32 6.2831855, %v292
    %v295 = vand.u32 2147483647, %v293
    %v296 = vand.u32 2147483647, %v294
    %v297 = vmin.f32 %v291, %v295
    %v298 = vmin.f32 %v292, %v296
    %299 = vrot.lane.b32.xlu0 %v97, 124
    %v300 = vpop.permute.xlu0 %299
    %s301 = vtos %v300
    %v302 = vstv %s301
    %v304 = vsub.f32 %v93, %v302
    %v305 = vsub.f32 %v94, %v302
    %v306 = vmul.f32 %v304, %v304
    %v307 = vmul.f32 %v305, %v305
    %308 = vrot.lane.b32.xlu0 %v120, 124
    %v309 = vpop.permute.xlu0 %308
    %s310 = vtos %v309
    %v311 = vstv %s310
    %v313 = vmul.f32 %v311, %v306
    %v314 = vmul.f32 %v311, %v307
    %315 = vrot.lane.b32.xlu0 %v126, 124
    %v316 = vpop.permute.xlu0 %315
    %s317 = vtos %v316
    %v318 = vstv %s317
    %v320 = vmul.f32 %v318, %v297
    %v321 = vmul.f32 %v318, %v298
    %v322 = vmul.f32 %v320, %v297
    %v323 = vmul.f32 %v321, %v298
    %v324 = vadd.f32 %v313, %v322
    %v325 = vadd.f32 %v314, %v323
    %v326 = vmul.f32 %v324, 1.442695
    %v327 = vpow.pop %v326
    %v328 = vmul.f32 %v325, 1.442695
    %v329 = vpow.pop %v328
    %v330 = vadd.f32 %v282, %v327
    %v331 = vadd.f32 %v283, %v329
    %332 = vrot.lane.b32.xlu0 %v99, 123
    %v333 = vpop.permute.xlu0 %332
    %s334 = vtos %v333
    %v335 = vstv %s334
    %v337 = vsub.f32 %v95, %v335
    %v338 = vsub.f32 %v96, %v335
    %v339 = vand.u32 2147483647, %v337
    %v340 = vand.u32 2147483647, %v338
    %v341 = vsub.f32 6.2831855, %v339
    %v342 = vsub.f32 6.2831855, %v340
    %v343 = vand.u32 2147483647, %v341
    %v344 = vand.u32 2147483647, %v342
    %v345 = vmin.f32 %v339, %v343
    %v346 = vmin.f32 %v340, %v344
    %347 = vrot.lane.b32.xlu0 %v97, 123
    %v348 = vpop.permute.xlu0 %347
    %s349 = vtos %v348
    %v350 = vstv %s349
    %v352 = vsub.f32 %v93, %v350
    %v353 = vsub.f32 %v94, %v350
    %v354 = vmul.f32 %v352, %v352
    %v355 = vmul.f32 %v353, %v353
    %356 = vrot.lane.b32.xlu0 %v120, 123
    %v357 = vpop.permute.xlu0 %356
    %s358 = vtos %v357
    %v359 = vstv %s358
    %v361 = vmul.f32 %v359, %v354
    %v362 = vmul.f32 %v359, %v355
    %363 = vrot.lane.b32.xlu0 %v126, 123
    %v364 = vpop.permute.xlu0 %363
    %s365 = vtos %v364
    %v366 = vstv %s365
    %v368 = vmul.f32 %v366, %v345
    %v369 = vmul.f32 %v366, %v346
    %v370 = vmul.f32 %v368, %v345
    %v371 = vmul.f32 %v369, %v346
    %v372 = vadd.f32 %v361, %v370
    %v373 = vadd.f32 %v362, %v371
    %v374 = vmul.f32 %v372, 1.442695
    %v375 = vpow.pop %v374
    %v376 = vmul.f32 %v373, 1.442695
    %v377 = vpow.pop %v376
    %v378 = vadd.f32 %v330, %v375
    %v379 = vadd.f32 %v331, %v377
    %380 = vrot.lane.b32.xlu0 %v99, 122
    %v381 = vpop.permute.xlu0 %380
    %s382 = vtos %v381
    %v383 = vstv %s382
    %v385 = vsub.f32 %v95, %v383
    %v386 = vsub.f32 %v96, %v383
    %v387 = vand.u32 2147483647, %v385
    %v388 = vand.u32 2147483647, %v386
    %v389 = vsub.f32 6.2831855, %v387
    %v390 = vsub.f32 6.2831855, %v388
    %v391 = vand.u32 2147483647, %v389
    %v392 = vand.u32 2147483647, %v390
    %v393 = vmin.f32 %v387, %v391
    %v394 = vmin.f32 %v388, %v392
    %395 = vrot.lane.b32.xlu0 %v97, 122
    %v396 = vpop.permute.xlu0 %395
    %s397 = vtos %v396
    %v398 = vstv %s397
    %v400 = vsub.f32 %v93, %v398
    %v401 = vsub.f32 %v94, %v398
    %v402 = vmul.f32 %v400, %v400
    %v403 = vmul.f32 %v401, %v401
    %404 = vrot.lane.b32.xlu0 %v120, 122
    %v405 = vpop.permute.xlu0 %404
    %s406 = vtos %v405
    %v407 = vstv %s406
    %v409 = vmul.f32 %v407, %v402
    %v410 = vmul.f32 %v407, %v403
    %411 = vrot.lane.b32.xlu0 %v126, 122
    %v412 = vpop.permute.xlu0 %411
    %s413 = vtos %v412
    %v414 = vstv %s413
    %v416 = vmul.f32 %v414, %v393
    %v417 = vmul.f32 %v414, %v394
    %v418 = vmul.f32 %v416, %v393
    %v419 = vmul.f32 %v417, %v394
    %v420 = vadd.f32 %v409, %v418
    %v421 = vadd.f32 %v410, %v419
    %v422 = vmul.f32 %v420, 1.442695
    %v423 = vpow.pop %v422
    %v424 = vmul.f32 %v421, 1.442695
    %v425 = vpow.pop %v424
    %v426 = vadd.f32 %v378, %v423
    %v427 = vadd.f32 %v379, %v425
    %428 = vrot.lane.b32.xlu0 %v99, 121
    %v429 = vpop.permute.xlu0 %428
    %s430 = vtos %v429
    %v431 = vstv %s430
    %v433 = vsub.f32 %v95, %v431
    %v434 = vsub.f32 %v96, %v431
    %v435 = vand.u32 2147483647, %v433
    %v436 = vand.u32 2147483647, %v434
    %v437 = vsub.f32 6.2831855, %v435
    %v438 = vsub.f32 6.2831855, %v436
    %v439 = vand.u32 2147483647, %v437
    %v440 = vand.u32 2147483647, %v438
    %v441 = vmin.f32 %v435, %v439
    %v442 = vmin.f32 %v436, %v440
    %443 = vrot.lane.b32.xlu0 %v97, 121
    %v444 = vpop.permute.xlu0 %443
    %s445 = vtos %v444
    %v446 = vstv %s445
    %v448 = vsub.f32 %v93, %v446
    %v449 = vsub.f32 %v94, %v446
    %v450 = vmul.f32 %v448, %v448
    %v451 = vmul.f32 %v449, %v449
    %452 = vrot.lane.b32.xlu0 %v120, 121
    %v453 = vpop.permute.xlu0 %452
    %s454 = vtos %v453
    %v455 = vstv %s454
    %v457 = vmul.f32 %v455, %v450
    %v458 = vmul.f32 %v455, %v451
    %459 = vrot.lane.b32.xlu0 %v126, 121
    %v460 = vpop.permute.xlu0 %459
    %s461 = vtos %v460
    %v462 = vstv %s461
    %v464 = vmul.f32 %v462, %v441
    %v465 = vmul.f32 %v462, %v442
    %v466 = vmul.f32 %v464, %v441
    %v467 = vmul.f32 %v465, %v442
    %v468 = vadd.f32 %v457, %v466
    %v469 = vadd.f32 %v458, %v467
    %v470 = vmul.f32 %v468, 1.442695
    %v471 = vpow.pop %v470
    %v472 = vmul.f32 %v469, 1.442695
    %v473 = vpow.pop %v472
    %v474 = vadd.f32 %v426, %v471
    %v475 = vadd.f32 %v427, %v473
    %v476 = vadd.f32 %v474, 1e-20
    %v477 = vadd.f32 %v475, 1e-20
    %v478 = vrcp.pop %v476
    %v479 = vrcp.pop %v477
    %v480 = vmul.f32 %v137, %v478
    %v481 = vmul.f32 %v139, %v479
    %v482 = vmul.f32 %v183, %v478
    %v483 = vmul.f32 %v185, %v479
    %v484 = vmul.f32 %v231, %v478
    %v485 = vmul.f32 %v233, %v479
    %v486 = vmul.f32 %v279, %v478
    %v487 = vmul.f32 %v281, %v479
    %v488 = vmul.f32 %v327, %v478
    %v489 = vmul.f32 %v329, %v479
    %v490 = vmul.f32 %v375, %v478
    %v491 = vmul.f32 %v377, %v479
    %v492 = vmul.f32 %v423, %v478
    %v493 = vmul.f32 %v425, %v479
    %v494 = vmul.f32 %v471, %v478
    %v495 = vmul.f32 %v473, %v479
    %v496 = vld [vmem:[%s3] sm:$0xff]
    %v497 = vld [vmem:[%s3 + $0x8] sm:$0xff]
    %v498 = vmul.f32 %v480, %v496
    %v499 = vmul.f32 %v481, %v497
    %vm500 = vcmask 64512
    %v502 = vsel %vm500, %v498, 0
    %504 = vmatpush.msra.mxu0 0.0
    %505 = vmatpush.msra.mxu0 0.0
    %506 = vmatpush.msra.mxu0 0.0
    %507 = vmatpush.msra.mxu0 0.0
    %508 = vmatpush.msra.mxu0 0.0
    %509 = vmatpush.msra.mxu0 0.0
    %510 = vmatpush.msra.mxu0 0.0
    %511 = vmatpush.msra.mxu0 0.0
    %512 = vmatpush.msra.mxu0 0.0
    %513 = vmatpush.msra.mxu0 0.0
    %514 = vmatpush.msra.mxu0 0.0
    %515 = vmatpush.msra.mxu0 0.0
    %516 = vmatpush.msra.mxu0 0.0
    %517 = vmatpush.msra.mxu0 0.0
    %518 = vmatpush.msra.mxu0 0.0
    %519 = vmatpush.msra.mxu0 %v89
    %520 = vmatmul.f32.gmra.mxu0 %v502
    %v521 = vpop.f32.mrf.mxu0
    %v522 = vadd.f32 0.0, %v521
    %523 = vdwg.mxu0
    %v525 = vsel %vm500, %v499, 0
    %527 = vmatpush.msra.mxu0 0.0
    %528 = vmatpush.msra.mxu0 0.0
    %529 = vmatpush.msra.mxu0 0.0
    %530 = vmatpush.msra.mxu0 0.0
    %531 = vmatpush.msra.mxu0 0.0
    %532 = vmatpush.msra.mxu0 0.0
    %533 = vmatpush.msra.mxu0 0.0
    %534 = vmatpush.msra.mxu0 0.0
    %535 = vmatpush.msra.mxu0 0.0
    %536 = vmatpush.msra.mxu0 0.0
    %537 = vmatpush.msra.mxu0 0.0
    %538 = vmatpush.msra.mxu0 0.0
    %539 = vmatpush.msra.mxu0 0.0
    %540 = vmatpush.msra.mxu0 0.0
    %541 = vmatpush.msra.mxu0 0.0
    %542 = vmatpush.msra.mxu0 %v91
    %543 = vmatmul.f32.gmra.mxu0 %v525
    %v544 = vpop.f32.mrf.mxu0
    %v545 = vadd.f32 0.0, %v544
    %546 = vdwg.mxu0
    %v547 = vmul.f32 %v482, %v496
    %v548 = vmul.f32 %v483, %v497
    %550 = vrot.lane.b32.xlu0 %v89, 124
    %v551 = vpop.permute.xlu0 %550
    %v554 = vsel %vm500, %v547, 0
    %556 = vmatpush.msra.mxu0 0.0
    %557 = vmatpush.msra.mxu0 0.0
    %558 = vmatpush.msra.mxu0 0.0
    %559 = vmatpush.msra.mxu0 0.0
    %560 = vmatpush.msra.mxu0 0.0
    %561 = vmatpush.msra.mxu0 0.0
    %562 = vmatpush.msra.mxu0 0.0
    %563 = vmatpush.msra.mxu0 0.0
    %564 = vmatpush.msra.mxu0 0.0
    %565 = vmatpush.msra.mxu0 0.0
    %566 = vmatpush.msra.mxu0 0.0
    %567 = vmatpush.msra.mxu0 0.0
    %568 = vmatpush.msra.mxu0 0.0
    %569 = vmatpush.msra.mxu0 0.0
    %570 = vmatpush.msra.mxu0 0.0
    %571 = vmatpush.msra.mxu0 %v551
    %572 = vmatmul.f32.gmra.mxu0 %v554
    %v573 = vpop.f32.mrf.mxu0
    %v574 = vadd.f32 0.0, %v573
    %575 = vdwg.mxu0
    %577 = vrot.lane.b32.xlu0 %v91, 124
    %v578 = vpop.permute.xlu0 %577
    %v581 = vsel %vm500, %v548, 0
    %583 = vmatpush.msra.mxu0 0.0
    %584 = vmatpush.msra.mxu0 0.0
    %585 = vmatpush.msra.mxu0 0.0
    %586 = vmatpush.msra.mxu0 0.0
    %587 = vmatpush.msra.mxu0 0.0
    %588 = vmatpush.msra.mxu0 0.0
    %589 = vmatpush.msra.mxu0 0.0
    %590 = vmatpush.msra.mxu0 0.0
    %591 = vmatpush.msra.mxu0 0.0
    %592 = vmatpush.msra.mxu0 0.0
    %593 = vmatpush.msra.mxu0 0.0
    %594 = vmatpush.msra.mxu0 0.0
    %595 = vmatpush.msra.mxu0 0.0
    %596 = vmatpush.msra.mxu0 0.0
    %597 = vmatpush.msra.mxu0 0.0
    %598 = vmatpush.msra.mxu0 %v578
    %599 = vmatmul.f32.gmra.mxu0 %v581
    %v600 = vpop.f32.mrf.mxu0
    %v601 = vadd.f32 0.0, %v600
    %602 = vdwg.mxu0
    %v603 = vmul.f32 %v484, %v496
    %v604 = vmul.f32 %v485, %v497
    %605 = vrot.lane.b32.xlu0 %v89, 120
    %v606 = vpop.permute.xlu0 %605
    %v609 = vsel %vm500, %v603, 0
    %611 = vmatpush.msra.mxu0 0.0
    %612 = vmatpush.msra.mxu0 0.0
    %613 = vmatpush.msra.mxu0 0.0
    %614 = vmatpush.msra.mxu0 0.0
    %615 = vmatpush.msra.mxu0 0.0
    %616 = vmatpush.msra.mxu0 0.0
    %617 = vmatpush.msra.mxu0 0.0
    %618 = vmatpush.msra.mxu0 0.0
    %619 = vmatpush.msra.mxu0 0.0
    %620 = vmatpush.msra.mxu0 0.0
    %621 = vmatpush.msra.mxu0 0.0
    %622 = vmatpush.msra.mxu0 0.0
    %623 = vmatpush.msra.mxu0 0.0
    %624 = vmatpush.msra.mxu0 0.0
    %625 = vmatpush.msra.mxu0 0.0
    %626 = vmatpush.msra.mxu0 %v606
    %627 = vmatmul.f32.gmra.mxu0 %v609
    %v628 = vpop.f32.mrf.mxu0
    %v629 = vadd.f32 0.0, %v628
    %630 = vdwg.mxu0
    %631 = vrot.lane.b32.xlu0 %v91, 120
    %v632 = vpop.permute.xlu0 %631
    %v635 = vsel %vm500, %v604, 0
    %637 = vmatpush.msra.mxu0 0.0
    %638 = vmatpush.msra.mxu0 0.0
    %639 = vmatpush.msra.mxu0 0.0
    %640 = vmatpush.msra.mxu0 0.0
    %641 = vmatpush.msra.mxu0 0.0
    %642 = vmatpush.msra.mxu0 0.0
    %643 = vmatpush.msra.mxu0 0.0
    %644 = vmatpush.msra.mxu0 0.0
    %645 = vmatpush.msra.mxu0 0.0
    %646 = vmatpush.msra.mxu0 0.0
    %647 = vmatpush.msra.mxu0 0.0
    %648 = vmatpush.msra.mxu0 0.0
    %649 = vmatpush.msra.mxu0 0.0
    %650 = vmatpush.msra.mxu0 0.0
    %651 = vmatpush.msra.mxu0 0.0
    %652 = vmatpush.msra.mxu0 %v632
    %653 = vmatmul.f32.gmra.mxu0 %v635
    %v654 = vpop.f32.mrf.mxu0
    %v655 = vadd.f32 0.0, %v654
    %656 = vdwg.mxu0
    %v657 = vmul.f32 %v486, %v496
    %v658 = vmul.f32 %v487, %v497
    %659 = vrot.lane.b32.xlu0 %v89, 116
    %v660 = vpop.permute.xlu0 %659
    %v663 = vsel %vm500, %v657, 0
    %665 = vmatpush.msra.mxu0 0.0
    %666 = vmatpush.msra.mxu0 0.0
    %667 = vmatpush.msra.mxu0 0.0
    %668 = vmatpush.msra.mxu0 0.0
    %669 = vmatpush.msra.mxu0 0.0
    %670 = vmatpush.msra.mxu0 0.0
    %671 = vmatpush.msra.mxu0 0.0
    %672 = vmatpush.msra.mxu0 0.0
    %673 = vmatpush.msra.mxu0 0.0
    %674 = vmatpush.msra.mxu0 0.0
    %675 = vmatpush.msra.mxu0 0.0
    %676 = vmatpush.msra.mxu0 0.0
    %677 = vmatpush.msra.mxu0 0.0
    %678 = vmatpush.msra.mxu0 0.0
    %679 = vmatpush.msra.mxu0 0.0
    %680 = vmatpush.msra.mxu0 %v660
    %681 = vmatmul.f32.gmra.mxu0 %v663
    %v682 = vpop.f32.mrf.mxu0
    %v683 = vadd.f32 0.0, %v682
    %684 = vdwg.mxu0
    %685 = vrot.lane.b32.xlu0 %v91, 116
    %v686 = vpop.permute.xlu0 %685
    %v689 = vsel %vm500, %v658, 0
    %691 = vmatpush.msra.mxu0 0.0
    %692 = vmatpush.msra.mxu0 0.0
    %693 = vmatpush.msra.mxu0 0.0
    %694 = vmatpush.msra.mxu0 0.0
    %695 = vmatpush.msra.mxu0 0.0
    %696 = vmatpush.msra.mxu0 0.0
    %697 = vmatpush.msra.mxu0 0.0
    %698 = vmatpush.msra.mxu0 0.0
    %699 = vmatpush.msra.mxu0 0.0
    %700 = vmatpush.msra.mxu0 0.0
    %701 = vmatpush.msra.mxu0 0.0
    %702 = vmatpush.msra.mxu0 0.0
    %703 = vmatpush.msra.mxu0 0.0
    %704 = vmatpush.msra.mxu0 0.0
    %705 = vmatpush.msra.mxu0 0.0
    %706 = vmatpush.msra.mxu0 %v686
    %707 = vmatmul.f32.gmra.mxu0 %v689
    %v708 = vpop.f32.mrf.mxu0
    %v709 = vadd.f32 0.0, %v708
    %710 = vdwg.mxu0
    %v711 = vmul.f32 %v488, %v496
    %v712 = vmul.f32 %v489, %v497
    %713 = vrot.lane.b32.xlu0 %v89, 112
    %v714 = vpop.permute.xlu0 %713
    %v717 = vsel %vm500, %v711, 0
    %719 = vmatpush.msra.mxu0 0.0
    %720 = vmatpush.msra.mxu0 0.0
    %721 = vmatpush.msra.mxu0 0.0
    %722 = vmatpush.msra.mxu0 0.0
    %723 = vmatpush.msra.mxu0 0.0
    %724 = vmatpush.msra.mxu0 0.0
    %725 = vmatpush.msra.mxu0 0.0
    %726 = vmatpush.msra.mxu0 0.0
    %727 = vmatpush.msra.mxu0 0.0
    %728 = vmatpush.msra.mxu0 0.0
    %729 = vmatpush.msra.mxu0 0.0
    %730 = vmatpush.msra.mxu0 0.0
    %731 = vmatpush.msra.mxu0 0.0
    %732 = vmatpush.msra.mxu0 0.0
    %733 = vmatpush.msra.mxu0 0.0
    %734 = vmatpush.msra.mxu0 %v714
    %735 = vmatmul.f32.gmra.mxu0 %v717
    %v736 = vpop.f32.mrf.mxu0
    %v737 = vadd.f32 0.0, %v736
    %738 = vdwg.mxu0
    %739 = vrot.lane.b32.xlu0 %v91, 112
    %v740 = vpop.permute.xlu0 %739
    %v743 = vsel %vm500, %v712, 0
    %745 = vmatpush.msra.mxu0 0.0
    %746 = vmatpush.msra.mxu0 0.0
    %747 = vmatpush.msra.mxu0 0.0
    %748 = vmatpush.msra.mxu0 0.0
    %749 = vmatpush.msra.mxu0 0.0
    %750 = vmatpush.msra.mxu0 0.0
    %751 = vmatpush.msra.mxu0 0.0
    %752 = vmatpush.msra.mxu0 0.0
    %753 = vmatpush.msra.mxu0 0.0
    %754 = vmatpush.msra.mxu0 0.0
    %755 = vmatpush.msra.mxu0 0.0
    %756 = vmatpush.msra.mxu0 0.0
    %757 = vmatpush.msra.mxu0 0.0
    %758 = vmatpush.msra.mxu0 0.0
    %759 = vmatpush.msra.mxu0 0.0
    %760 = vmatpush.msra.mxu0 %v740
    %761 = vmatmul.f32.gmra.mxu0 %v743
    %v762 = vpop.f32.mrf.mxu0
    %v763 = vadd.f32 0.0, %v762
    %764 = vdwg.mxu0
    %v765 = vmul.f32 %v490, %v496
    %v766 = vmul.f32 %v491, %v497
    %767 = vrot.lane.b32.xlu0 %v89, 108
    %v768 = vpop.permute.xlu0 %767
    %v771 = vsel %vm500, %v765, 0
    %773 = vmatpush.msra.mxu0 0.0
    %774 = vmatpush.msra.mxu0 0.0
    %775 = vmatpush.msra.mxu0 0.0
    %776 = vmatpush.msra.mxu0 0.0
    %777 = vmatpush.msra.mxu0 0.0
    %778 = vmatpush.msra.mxu0 0.0
    %779 = vmatpush.msra.mxu0 0.0
    %780 = vmatpush.msra.mxu0 0.0
    %781 = vmatpush.msra.mxu0 0.0
    %782 = vmatpush.msra.mxu0 0.0
    %783 = vmatpush.msra.mxu0 0.0
    %784 = vmatpush.msra.mxu0 0.0
    %785 = vmatpush.msra.mxu0 0.0
    %786 = vmatpush.msra.mxu0 0.0
    %787 = vmatpush.msra.mxu0 0.0
    %788 = vmatpush.msra.mxu0 %v768
    %789 = vmatmul.f32.gmra.mxu0 %v771
    %v790 = vpop.f32.mrf.mxu0
    %v791 = vadd.f32 0.0, %v790
    %792 = vdwg.mxu0
    %793 = vrot.lane.b32.xlu0 %v91, 108
    %v794 = vpop.permute.xlu0 %793
    %v797 = vsel %vm500, %v766, 0
    %799 = vmatpush.msra.mxu0 0.0
    %800 = vmatpush.msra.mxu0 0.0
    %801 = vmatpush.msra.mxu0 0.0
    %802 = vmatpush.msra.mxu0 0.0
    %803 = vmatpush.msra.mxu0 0.0
    %804 = vmatpush.msra.mxu0 0.0
    %805 = vmatpush.msra.mxu0 0.0
    %806 = vmatpush.msra.mxu0 0.0
    %807 = vmatpush.msra.mxu0 0.0
    %808 = vmatpush.msra.mxu0 0.0
    %809 = vmatpush.msra.mxu0 0.0
    %810 = vmatpush.msra.mxu0 0.0
    %811 = vmatpush.msra.mxu0 0.0
    %812 = vmatpush.msra.mxu0 0.0
    %813 = vmatpush.msra.mxu0 0.0
    %814 = vmatpush.msra.mxu0 %v794
    %815 = vmatmul.f32.gmra.mxu0 %v797
    %v816 = vpop.f32.mrf.mxu0
    %v817 = vadd.f32 0.0, %v816
    %818 = vdwg.mxu0
    %v819 = vmul.f32 %v492, %v496
    %v820 = vmul.f32 %v493, %v497
    %821 = vrot.lane.b32.xlu0 %v89, 104
    %v822 = vpop.permute.xlu0 %821
    %v825 = vsel %vm500, %v819, 0
    %827 = vmatpush.msra.mxu0 0.0
    %828 = vmatpush.msra.mxu0 0.0
    %829 = vmatpush.msra.mxu0 0.0
    %830 = vmatpush.msra.mxu0 0.0
    %831 = vmatpush.msra.mxu0 0.0
    %832 = vmatpush.msra.mxu0 0.0
    %833 = vmatpush.msra.mxu0 0.0
    %834 = vmatpush.msra.mxu0 0.0
    %835 = vmatpush.msra.mxu0 0.0
    %836 = vmatpush.msra.mxu0 0.0
    %837 = vmatpush.msra.mxu0 0.0
    %838 = vmatpush.msra.mxu0 0.0
    %839 = vmatpush.msra.mxu0 0.0
    %840 = vmatpush.msra.mxu0 0.0
    %841 = vmatpush.msra.mxu0 0.0
    %842 = vmatpush.msra.mxu0 %v822
    %843 = vmatmul.f32.gmra.mxu0 %v825
    %v844 = vpop.f32.mrf.mxu0
    %v845 = vadd.f32 0.0, %v844
    %846 = vdwg.mxu0
    %847 = vrot.lane.b32.xlu0 %v91, 104
    %v848 = vpop.permute.xlu0 %847
    %v851 = vsel %vm500, %v820, 0
    %853 = vmatpush.msra.mxu0 0.0
    %854 = vmatpush.msra.mxu0 0.0
    %855 = vmatpush.msra.mxu0 0.0
    %856 = vmatpush.msra.mxu0 0.0
    %857 = vmatpush.msra.mxu0 0.0
    %858 = vmatpush.msra.mxu0 0.0
    %859 = vmatpush.msra.mxu0 0.0
    %860 = vmatpush.msra.mxu0 0.0
    %861 = vmatpush.msra.mxu0 0.0
    %862 = vmatpush.msra.mxu0 0.0
    %863 = vmatpush.msra.mxu0 0.0
    %864 = vmatpush.msra.mxu0 0.0
    %865 = vmatpush.msra.mxu0 0.0
    %866 = vmatpush.msra.mxu0 0.0
    %867 = vmatpush.msra.mxu0 0.0
    %868 = vmatpush.msra.mxu0 %v848
    %869 = vmatmul.f32.gmra.mxu0 %v851
    %v870 = vpop.f32.mrf.mxu0
    %v871 = vadd.f32 0.0, %v870
    %872 = vdwg.mxu0
    %v873 = vmul.f32 %v494, %v496
    %v874 = vmul.f32 %v495, %v497
    %875 = vrot.lane.b32.xlu0 %v89, 100
    %v876 = vpop.permute.xlu0 %875
    %v879 = vsel %vm500, %v873, 0
    %881 = vmatpush.msra.mxu0 0.0
    %882 = vmatpush.msra.mxu0 0.0
    %883 = vmatpush.msra.mxu0 0.0
    %884 = vmatpush.msra.mxu0 0.0
    %885 = vmatpush.msra.mxu0 0.0
    %886 = vmatpush.msra.mxu0 0.0
    %887 = vmatpush.msra.mxu0 0.0
    %888 = vmatpush.msra.mxu0 0.0
    %889 = vmatpush.msra.mxu0 0.0
    %890 = vmatpush.msra.mxu0 0.0
    %891 = vmatpush.msra.mxu0 0.0
    %892 = vmatpush.msra.mxu0 0.0
    %893 = vmatpush.msra.mxu0 0.0
    %894 = vmatpush.msra.mxu0 0.0
    %895 = vmatpush.msra.mxu0 0.0
    %896 = vmatpush.msra.mxu0 %v876
    %897 = vmatmul.f32.gmra.mxu0 %v879
    %v898 = vpop.f32.mrf.mxu0
    %v899 = vadd.f32 0.0, %v898
    %900 = vdwg.mxu0
    %901 = vrot.lane.b32.xlu0 %v91, 100
    %v902 = vpop.permute.xlu0 %901
    %v905 = vsel %vm500, %v874, 0
    %907 = vmatpush.msra.mxu0 0.0
    %908 = vmatpush.msra.mxu0 0.0
    %909 = vmatpush.msra.mxu0 0.0
    %910 = vmatpush.msra.mxu0 0.0
    %911 = vmatpush.msra.mxu0 0.0
    %912 = vmatpush.msra.mxu0 0.0
    %913 = vmatpush.msra.mxu0 0.0
    %914 = vmatpush.msra.mxu0 0.0
    %915 = vmatpush.msra.mxu0 0.0
    %916 = vmatpush.msra.mxu0 0.0
    %917 = vmatpush.msra.mxu0 0.0
    %918 = vmatpush.msra.mxu0 0.0
    %919 = vmatpush.msra.mxu0 0.0
    %920 = vmatpush.msra.mxu0 0.0
    %921 = vmatpush.msra.mxu0 0.0
    %922 = vmatpush.msra.mxu0 %v902
    %923 = vmatmul.f32.gmra.mxu0 %v905
    %v924 = vpop.f32.mrf.mxu0
    %v925 = vadd.f32 0.0, %v924
    %926 = vdwg.mxu0
    %929 = vrot.lane.b32.xlu0 %v574, 4
    %v930 = vpop.permute.xlu0 %929
    %931 = vrot.lane.b32.xlu0 %v601, 4
    %v932 = vpop.permute.xlu0 %931
    %937 = vrot.lane.b32.xlu0 %v629, 8
    %v938 = vpop.permute.xlu0 %937
    %939 = vrot.lane.b32.xlu0 %v655, 8
    %v940 = vpop.permute.xlu0 %939
    %945 = vrot.lane.b32.xlu0 %v683, 12
    %v946 = vpop.permute.xlu0 %945
    %947 = vrot.lane.b32.xlu0 %v709, 12
    %v948 = vpop.permute.xlu0 %947
    %953 = vrot.lane.b32.xlu0 %v737, 16
    %v954 = vpop.permute.xlu0 %953
    %955 = vrot.lane.b32.xlu0 %v763, 16
    %v956 = vpop.permute.xlu0 %955
    %961 = vrot.lane.b32.xlu0 %v791, 20
    %v962 = vpop.permute.xlu0 %961
    %963 = vrot.lane.b32.xlu0 %v817, 20
    %v964 = vpop.permute.xlu0 %963
    %969 = vrot.lane.b32.xlu0 %v845, 24
    %v970 = vpop.permute.xlu0 %969
    %971 = vrot.lane.b32.xlu0 %v871, 24
    %v972 = vpop.permute.xlu0 %971
    %977 = vrot.lane.b32.xlu0 %v899, 28
    %v978 = vpop.permute.xlu0 %977
    %979 = vrot.lane.b32.xlu0 %v925, 28
    %v980 = vpop.permute.xlu0 %979
    %vm983 = vcmask 31744
    %v984 = vsel %vm983, %v522, %v930
    %v985 = vsel %vm983, %v545, %v932
    %v986 = vsel %vm500, %v984, %v938
    %v987 = vsel %vm500, %v985, %v940
    %vm988 = vcmask 97280
    %v989 = vsel %vm988, %v986, %v946
    %v990 = vsel %vm988, %v987, %v948
    %vm991 = vcmask 130048
    %v992 = vsel %vm991, %v989, %v954
    %v993 = vsel %vm991, %v990, %v956
    %vm994 = vcmask 162816
    %v995 = vsel %vm994, %v992, %v962
    %v996 = vsel %vm994, %v993, %v964
    %vm997 = vcmask 195584
    %v998 = vsel %vm997, %v995, %v970
    %v999 = vsel %vm997, %v996, %v972
    %vm1000 = vcmask 228352
    %v1001 = vsel %vm1000, %v998, %v978
    %v1002 = vsel %vm1000, %v999, %v980
    %v1003 = vmax.f32 %v1001, 0.0
    %v1004 = vmax.f32 %v1002, 0.0
    %vm1005 = vcmask 261120
    %v1006 = vsel %vm1005, %v1003, -inf
    %v1007 = vrot.slane %v1006, 4
    %v1008 = vmax.f32 %v1006, %v1007
    %v1009 = vrot.slane %v1008, 2
    %v1010 = vmax.f32 %v1008, %v1009
    %v1011 = vrot.slane %v1010, 1
    %v1012 = vmax.f32 %v1010, %v1011
    %v1013 = vsel %vm1005, %v1004, -inf
    %v1014 = vrot.slane %v1013, 4
    %v1015 = vmax.f32 %v1013, %v1014
    %v1016 = vrot.slane %v1015, 2
    %v1017 = vmax.f32 %v1015, %v1016
    %v1018 = vrot.slane %v1017, 1
    %v1019 = vmax.f32 %v1017, %v1018
    %v1020 = vld [vmem:[%s6] sm:$0x3]
    %v1021 = vmax.f32 %v1020, 0.0
    %vm1024 = vcmask 1041409
    %v1025 = vsel %vm1024, %v1019, %v1012
    %v1027 = vmul.f32 %v1021, %v1025
    %v1028 = vld [vmem:[%s7] sm:$0xff]
    %v1029 = vld [vmem:[%s7 + $0x8] sm:$0xff]
    %v1030 = vld [vmem:[%s7 + $0x10] sm:$0xff]
    %v1031 = vld [vmem:[%s7 + $0x18] sm:$0xff]
    %v1032 = vld [vmem:[%s8] sm:$0x1]
    %v1034 = vperm.slane %v1032, 0
    %v1037 = vsel %vm1005, %v1027, 0
    %1039 = vmatpush.msra.mxu0 0.0
    %1040 = vmatpush.msra.mxu0 0.0
    %1041 = vmatpush.msra.mxu0 0.0
    %1042 = vmatpush.msra.mxu0 0.0
    %1043 = vmatpush.msra.mxu0 0.0
    %1044 = vmatpush.msra.mxu0 0.0
    %1045 = vmatpush.msra.mxu0 0.0
    %1046 = vmatpush.msra.mxu0 0.0
    %1047 = vmatpush.msra.mxu0 0.0
    %1048 = vmatpush.msra.mxu0 0.0
    %1049 = vmatpush.msra.mxu0 0.0
    %1050 = vmatpush.msra.mxu0 0.0
    %1051 = vmatpush.msra.mxu0 %v1031
    %1052 = vmatpush.msra.mxu0 %v1030
    %1053 = vmatpush.msra.mxu0 %v1029
    %1054 = vmatpush.msra.mxu0 %v1028
    %1055 = vmatmul.f32.gmra.mxu0 %v1037
    %v1056 = vpop.f32.mrf.mxu0
    %v1057 = vadd.f32 %v1034, %v1056
    %1058 = vdwg.mxu0
    %v1059 = vmax.f32 %v1057, 0.0
    %v1060 = vld [vmem:[%s9] sm:$0xff]
    %v1061 = vld [vmem:[%s9 + $0x8] sm:$0xff]
    %v1062 = vld [vmem:[%s10] sm:$0x1]
    %v1064 = vperm.slane %v1062, 0
    %v1067 = vsel %vm991, %v1059, 0
    %1069 = vmatpush.msra.mxu0 0.0
    %1070 = vmatpush.msra.mxu0 0.0
    %1071 = vmatpush.msra.mxu0 0.0
    %1072 = vmatpush.msra.mxu0 0.0
    %1073 = vmatpush.msra.mxu0 0.0
    %1074 = vmatpush.msra.mxu0 0.0
    %1075 = vmatpush.msra.mxu0 0.0
    %1076 = vmatpush.msra.mxu0 0.0
    %1077 = vmatpush.msra.mxu0 0.0
    %1078 = vmatpush.msra.mxu0 0.0
    %1079 = vmatpush.msra.mxu0 0.0
    %1080 = vmatpush.msra.mxu0 0.0
    %1081 = vmatpush.msra.mxu0 0.0
    %1082 = vmatpush.msra.mxu0 0.0
    %1083 = vmatpush.msra.mxu0 %v1061
    %1084 = vmatpush.msra.mxu0 %v1060
    %1085 = vmatmul.f32.gmra.mxu0 %v1067
    %v1086 = vpop.f32.mrf.mxu0
    %v1087 = vadd.f32 %v1064, %v1086
    %1088 = vdwg.mxu0
    %vm1089 = vcmask 123904
    %1090 = vst.msk [vmem:[#allocation2] sm:$0x3] %vm1089, %v1087
    // Predicated region
    $region46: #{forward.5} parent=1 // pred_check
      _
    $region47: #{forward.5} parent=1 // pred_check_branch
      %1092 = sbr.rel (0) target = $region49
    $region48: #{forward.5} parent=1 // pred_region
      %1094 = vsyncadd [#allocation3], 0
      %s1096 = sshll.u32 [#allocation2], 4
      %s1097 = int_to_ptr.vmem [resolvable:$true] %s1096
      %s1098 = sshll.u32 %s11, 4
      %s1099 = int_to_ptr.hbm [resolvable:$true] %s1098
      %1101 = dma.vmem_to_hbm [thread:$0]  %s1097, 32, %s1099, [#allocation3]
    $region49: #{forward.5} parent=1 // pred_fallthru
      _
    // Predicated region
    $region50: #{forward.5} parent=1 // pred_check
      _
    $region51: #{forward.5} parent=1 // pred_check_branch
      %1103 = sbr.rel (0) target = $region53
    $region52: #{forward.5} parent=1 // pred_region
      %1105 = dma.done [#allocation3], 32
    $region53: #{forward.5} parent=1 // pred_fallthru
      _
    %1106 = vsyncpa [#allocation3], 1

</llo_original>
